<compile_context>
chip_gen: v5e
topology: v5e:2x2
jax: 0.10.0
libtpu: 0.0.40
codegen_flags: <defaults>
</compile_context>

<pallas_src>
import functools

import jax
import jax.numpy as jnp
from jax.experimental import pallas as pl
from jax.experimental.pallas import tpu as pltpu

BETA = 0.95
THRESHOLD = 1.0
NUM_INPUTS = 34 * 34   # 1156
NUM_HIDDEN = 1000
NUM_OUTPUTS = 10
NUM_STEPS = 25


def _round_up(x, m):
    return (x + m - 1) // m * m


def _snn_kernel(x_ref, w1_ref, b1_ref, w2_ref, b2_ref,
                out_ref,
                spk1_stack_ref, cur2_acc_ref,
                *, num_steps):
    """One grid step = (batch tile b, hidden-column chunk h).

    Per chunk: fc1 column-block matmul, the full lif1 recurrence for those
    columns, and a partial fc2 matmul accumulated into cur2_acc.  lif2 and the
    output writes run only on the last hidden chunk of each batch tile.
    """
    h = pl.program_id(1)
    nh = pl.num_programs(1)
    Bt = x_ref.shape[0]
    NOp = cur2_acc_ref.shape[-1]

    @pl.when(h == 0)
    def _():
        cur2_acc_ref[...] = jnp.zeros_like(cur2_acc_ref)

    # ---- fc1 for this hidden-column chunk: x is step-invariant in the spec ----
    # TODO(synk): if the real pipeline feeds per-timestep frames (T, B, 1156),
    # fc1 must instead become a (T*Bt, NIp) @ (NIp, TH) matmul.
    cur1 = jnp.dot(x_ref[...], w1_ref[...],
                   preferred_element_type=jnp.float32) + b1_ref[...]

    # ---- lif1 recurrence (pure VPU).  reset_t == spk_{t-1}; carry the previous
    # spike instead of recomputing the threshold compare (THRESHOLD == 1.0). ----
    mem1 = jnp.zeros_like(cur1)
    spk1_prev = jnp.zeros_like(cur1)
    for t in range(num_steps):
        mem1 = BETA * mem1 + cur1 - spk1_prev          # subtract-reset
        spk1_prev = (mem1 > THRESHOLD).astype(jnp.float32)
        # Bt is a multiple of 16 -> stores cover full bf16 (16,128) tiles.
        spk1_stack_ref[t * Bt:(t + 1) * Bt, :] = spk1_prev.astype(
            spk1_stack_ref.dtype)

    # ---- partial fc2 for ALL time steps at once: (T*Bt, TH) @ (TH, NOp),
    # accumulated across hidden chunks ----
    cur2_acc_ref[...] += jnp.dot(spk1_stack_ref[...], w2_ref[...],
                                 preferred_element_type=jnp.float32)

    # ---- lif2 + single output flush once every hidden chunk contributed ----
    @pl.when(h == nh - 1)
    def _():
        b2 = b2_ref[...]
        mem2 = jnp.zeros((Bt, NOp), jnp.float32)
        spk2_prev = jnp.zeros((Bt, NOp), jnp.float32)
        for t in range(num_steps):
            cur2 = cur2_acc_ref[t * Bt:(t + 1) * Bt, :] + b2
            mem2 = BETA * mem2 + cur2 - spk2_prev      # subtract-reset
            spk2_prev = (mem2 > THRESHOLD).astype(jnp.float32)
            out_ref[0, t] = spk2_prev
            out_ref[1, t] = mem2


def prepare_params(w1, b1, w2, b2, param_dtype=jnp.bfloat16):
    """Pad + cast weights ONCE (not per forward call). Zero padding is exact."""
    n_in, n_hid = w1.shape
    n_out = w2.shape[1]
    NIp = _round_up(n_in, 128)
    NHp = _round_up(n_hid, 128)
    NOp = _round_up(n_out, 128)
    w1p = jnp.zeros((NIp, NHp), param_dtype).at[:n_in, :n_hid].set(
        w1.astype(param_dtype))
    b1p = jnp.zeros((1, NHp), jnp.float32).at[0, :n_hid].set(b1)
    w2p = jnp.zeros((NHp, NOp), param_dtype).at[:n_hid, :n_out].set(
        w2.astype(param_dtype))
    b2p = jnp.zeros((1, NOp), jnp.float32).at[0, :n_out].set(b2)
    return w1p, b1p, w2p, b2p


@functools.partial(jax.jit, static_argnames=("num_steps", "n_out"))
def snn_forward(x, w1p, b1p, w2p, b2p, *, num_steps=NUM_STEPS, n_out=NUM_OUTPUTS):
    """x: (B, num_inputs) f32; padded params from prepare_params().

    Throughput note: this is HBM-bound at tiny batches; for best utilization the
    caller should batch >=128 samples per call (the kernel tiles/parallelizes the
    batch axis automatically).
    """
    B, n_in = x.shape
    NIp, NHp = w1p.shape
    NOp = w2p.shape[1]

    # Batch tiling: <=64 rows per tile keeps the unrolled lif1 live set small
    # (no vreg spills) and gives a "parallel" grid axis for v7x megacore.
    Bp = _round_up(B, 16)
    if Bp <= 64:
        Bt = Bp
    else:
        Bt = 64
        Bp = _round_up(B, Bt)
    n_btiles = Bp // Bt

    # Hidden-column chunk: stream W1 (the dominant HBM read) under compute.
    TH = 256 if NHp % 256 == 0 else 128
    n_chunks = NHp // TH

    xp = jnp.zeros((Bp, NIp), w1p.dtype).at[:B, :n_in].set(x.astype(w1p.dtype))

    kernel = functools.partial(_snn_kernel, num_steps=num_steps)

    out = pl.pallas_call(
        kernel,
        out_shape=jax.ShapeDtypeStruct((2, num_steps, Bp, NOp), jnp.float32),
        grid=(n_btiles, n_chunks),
        in_specs=[
            pl.BlockSpec((Bt, NIp), lambda b, h: (b, 0)),    # x   (bf16)
            pl.BlockSpec((NIp, TH), lambda b, h: (0, h)),    # W1 column chunk
            pl.BlockSpec((1, TH), lambda b, h: (0, h)),      # b1 chunk (f32)
            pl.BlockSpec((TH, NOp), lambda b, h: (h, 0)),    # W2 row chunk
            pl.BlockSpec((1, NOp), lambda b, h: (0, 0)),     # b2 (f32)
        ],
        out_specs=pl.BlockSpec((2, num_steps, Bt, NOp),
                               lambda b, h: (0, 0, b, 0)),   # merged spk/mem slab
        scratch_shapes=[
            pltpu.VMEM((num_steps * Bt, TH), jnp.bfloat16),  # stacked spk1 (fc2 LHS)
            pltpu.VMEM((num_steps * Bt, NOp), jnp.float32),  # cur2 accumulator
        ],
        compiler_params=pltpu.CompilerParams(
            # batch tiles are independent; hidden chunks carry the fc2 reduction.
            dimension_semantics=("parallel", "arbitrary"),
        ),
    )(xp, w1p, b1p, w2p, b2p)

    # Strip padding -> exact PyTorch output shapes (num_steps, B, num_outputs).
    spk = out[0, :, :B, :n_out]
    mem = out[1, :, :B, :n_out]
    return spk, mem


def init_params(key):
    """Deterministic nn.Linear-style init: U(-1/sqrt(fan_in), 1/sqrt(fan_in))."""
    k1, k2, k3, k4 = jax.random.split(key, 4)
    bound1 = 1.0 / float(NUM_INPUTS) ** 0.5
    bound2 = 1.0 / float(NUM_HIDDEN) ** 0.5
    w1 = jax.random.uniform(k1, (NUM_INPUTS, NUM_HIDDEN), jnp.float32, -bound1, bound1)
    b1 = jax.random.uniform(k2, (NUM_HIDDEN,), jnp.float32, -bound1, bound1)
    w2 = jax.random.uniform(k3, (NUM_HIDDEN, NUM_OUTPUTS), jnp.float32, -bound2, bound2)
    b2 = jax.random.uniform(k4, (NUM_OUTPUTS,), jnp.float32, -bound2, bound2)
    return w1, b1, w2, b2


if __name__ == "__main__":
    key = jax.random.PRNGKey(0)
    kx, kp = jax.random.split(key)

    batch = 2
    # NMNIST-style flattened binary-spike input, shape (B, 34*34).
    x = (jax.random.uniform(kx, (batch, NUM_INPUTS), jnp.float32) > 0.7).astype(jnp.float32)

    w1, b1, w2, b2 = init_params(kp)
    w1p, b1p, w2p, b2p = prepare_params(w1, b1, w2, b2)   # pad/cast once

    spk2_rec, mem2_rec = snn_forward(x, w1p, b1p, w2p, b2p)
    jax.block_until_ready((spk2_rec, mem2_rec))

    assert spk2_rec.shape == (NUM_STEPS, batch, NUM_OUTPUTS)
    assert mem2_rec.shape == (NUM_STEPS, batch, NUM_OUTPUTS)
    print("KERNEL_OK")
</pallas_src>

<mosaic_0001>
module attributes {stable_mosaic.version = 11 : i64} {
  func.func @_snn_kernel(%arg0: i32, %arg1: i32, %arg2: memref<16x1280xbf16, #tpu.memory_space<vmem>>, %arg3: memref<1280x256xbf16, #tpu.memory_space<vmem>>, %arg4: memref<1x256xf32, #tpu.memory_space<vmem>>, %arg5: memref<256x128xbf16, #tpu.memory_space<vmem>>, %arg6: memref<1x128xf32, #tpu.memory_space<vmem>>, %arg7: memref<2x25x16x128xf32, #tpu.memory_space<vmem>>, %arg8: memref<400x256xbf16, #tpu.memory_space<vmem>>, %arg9: memref<400x128xf32, #tpu.memory_space<vmem>>) attributes {dimension_semantics = [#tpu.dimension_semantics<parallel>, #tpu.dimension_semantics<arbitrary>], iteration_bounds = array<i64: 1, 4>, scalar_prefetch = 0 : i64, scratch_operands = 2 : i64, tpu.core_type = #tpu.core_type<tc>, window_params = [{transform_indices = @transform_0, window_bounds = array<i64: 16, 1280>}, {transform_indices = @transform_1, window_bounds = array<i64: 1280, 256>}, {transform_indices = @transform_2, window_bounds = array<i64: 1, 256>}, {transform_indices = @transform_3, window_bounds = array<i64: 256, 128>}, {pipeline_mode = #tpu.pipeline_mode<synchronous>, transform_indices = @transform_4, window_bounds = array<i64: 1, 128>}, {transform_indices = @transform_5, window_bounds = array<i64: 2, 25, 16, 128>}]} {
    %c0_i32 = arith.constant 0 : i32
    %0 = arith.cmpi eq, %arg1, %c0_i32 : i32
    %1 = arith.extui %0 : i1 to i32
    %c0_i32_0 = arith.constant 0 : i32
    %2 = arith.cmpi ne, %1, %c0_i32_0 : i32
    scf.if %2 {
      %cst_94 = arith.constant 0.000000e+00 : f32
      %270 = vector.broadcast %cst_94 : f32 to vector<400x128xf32>
      %c0_95 = arith.constant 0 : index
      %c0_96 = arith.constant 0 : index
      %271 = vector.load %arg9[%c0_95, %c0_96] : memref<400x128xf32, #tpu.memory_space<vmem>>, vector<400x128xf32>
      tpu.vector_store %arg9[%c0_95, %c0_96], %270 {strides = array<i32>} : memref<400x128xf32, #tpu.memory_space<vmem>>, vector<400x128xf32>,
    } else {
    }
    %c0 = arith.constant 0 : index
    %c0_1 = arith.constant 0 : index
    %3 = vector.load %arg2[%c0, %c0_1] : memref<16x1280xbf16, #tpu.memory_space<vmem>>, vector<16x1280xbf16>
    %c0_2 = arith.constant 0 : index
    %c0_3 = arith.constant 0 : index
    %4 = vector.load %arg3[%c0_2, %c0_3] : memref<1280x256xbf16, #tpu.memory_space<vmem>>, vector<1280x256xbf16>
    %cst = arith.constant dense<0.000000e+00> : vector<16x256xf32>
    %5 = tpu.matmul %3, %4, %cst {dimension_numbers = #tpu.dot_dimension_numbers<[1], [0], [0], [1], [0, 0, 1, 1], [], []>} : vector<16x1280xbf16>, vector<1280x256xbf16>, vector<16x256xf32> -> vector<16x256xf32>
    %c0_4 = arith.constant 0 : index
    %c0_5 = arith.constant 0 : index
    %6 = vector.load %arg4[%c0_4, %c0_5] : memref<1x256xf32, #tpu.memory_space<vmem>>, vector<1x256xf32>
    %7 = vector.broadcast %6 : vector<1x256xf32> to vector<16x256xf32>
    %8 = arith.addf %5, %7 : vector<16x256xf32>
    %cst_6 = arith.constant 0.000000e+00 : f32
    %9 = vector.broadcast %cst_6 : f32 to vector<16x256xf32>
    %cst_7 = arith.constant 0.000000e+00 : f32
    %10 = vector.broadcast %cst_7 : f32 to vector<16x256xf32>
    %cst_8 = arith.constant 0.949999988 : f32
    %11 = vector.broadcast %cst_8 : f32 to vector<16x256xf32>
    %12 = arith.mulf %11, %9 : vector<16x256xf32>
    %13 = arith.addf %12, %8 : vector<16x256xf32>
    %14 = arith.subf %13, %10 : vector<16x256xf32>
    %cst_9 = arith.constant 1.000000e+00 : f32
    %15 = vector.broadcast %cst_9 : f32 to vector<16x256xf32>
    %16 = arith.cmpf ogt, %14, %15 : vector<16x256xf32>
    %17 = arith.extui %16 : vector<16x256xi1> to vector<16x256xi32>
    %18 = arith.sitofp %17 : vector<16x256xi32> to vector<16x256xf32>
    %19 = arith.truncf %18 : vector<16x256xf32> to vector<16x256xbf16>
    %c0_10 = arith.constant 0 : index
    %c0_11 = arith.constant 0 : index
    %20 = vector.load %arg8[%c0_10, %c0_11] : memref<400x256xbf16, #tpu.memory_space<vmem>>, vector<16x256xbf16>
    tpu.vector_store %arg8[%c0_10, %c0_11], %19 {strides = array<i32>} : memref<400x256xbf16, #tpu.memory_space<vmem>>, vector<16x256xbf16>,
    %cst_12 = arith.constant 0.949999988 : f32
    %21 = vector.broadcast %cst_12 : f32 to vector<16x256xf32>
    %22 = arith.mulf %21, %14 : vector<16x256xf32>
    %23 = arith.addf %22, %8 : vector<16x256xf32>
    %24 = arith.subf %23, %18 : vector<16x256xf32>
    %cst_13 = arith.constant 1.000000e+00 : f32
    %25 = vector.broadcast %cst_13 : f32 to vector<16x256xf32>
    %26 = arith.cmpf ogt, %24, %25 : vector<16x256xf32>
    %27 = arith.extui %26 : vector<16x256xi1> to vector<16x256xi32>
    %28 = arith.sitofp %27 : vector<16x256xi32> to vector<16x256xf32>
    %29 = arith.truncf %28 : vector<16x256xf32> to vector<16x256xbf16>
    %c16 = arith.constant 16 : index
    %c0_14 = arith.constant 0 : index
    %30 = vector.load %arg8[%c16, %c0_14] : memref<400x256xbf16, #tpu.memory_space<vmem>>, vector<16x256xbf16>
    tpu.vector_store %arg8[%c16, %c0_14], %29 {strides = array<i32>} : memref<400x256xbf16, #tpu.memory_space<vmem>>, vector<16x256xbf16>,
    %cst_15 = arith.constant 0.949999988 : f32
    %31 = vector.broadcast %cst_15 : f32 to vector<16x256xf32>
    %32 = arith.mulf %31, %24 : vector<16x256xf32>
    %33 = arith.addf %32, %8 : vector<16x256xf32>
    %34 = arith.subf %33, %28 : vector<16x256xf32>
    %cst_16 = arith.constant 1.000000e+00 : f32
    %35 = vector.broadcast %cst_16 : f32 to vector<16x256xf32>
    %36 = arith.cmpf ogt, %34, %35 : vector<16x256xf32>
    %37 = arith.extui %36 : vector<16x256xi1> to vector<16x256xi32>
    %38 = arith.sitofp %37 : vector<16x256xi32> to vector<16x256xf32>
    %39 = arith.truncf %38 : vector<16x256xf32> to vector<16x256xbf16>
    %c32 = arith.constant 32 : index
    %c0_17 = arith.constant 0 : index
    %40 = vector.load %arg8[%c32, %c0_17] : memref<400x256xbf16, #tpu.memory_space<vmem>>, vector<16x256xbf16>
    tpu.vector_store %arg8[%c32, %c0_17], %39 {strides = array<i32>} : memref<400x256xbf16, #tpu.memory_space<vmem>>, vector<16x256xbf16>,
    %cst_18 = arith.constant 0.949999988 : f32
    %41 = vector.broadcast %cst_18 : f32 to vector<16x256xf32>
    %42 = arith.mulf %41, %34 : vector<16x256xf32>
    %43 = arith.addf %42, %8 : vector<16x256xf32>
    %44 = arith.subf %43, %38 : vector<16x256xf32>
    %cst_19 = arith.constant 1.000000e+00 : f32
    %45 = vector.broadcast %cst_19 : f32 to vector<16x256xf32>
    %46 = arith.cmpf ogt, %44, %45 : vector<16x256xf32>
    %47 = arith.extui %46 : vector<16x256xi1> to vector<16x256xi32>
    %48 = arith.sitofp %47 : vector<16x256xi32> to vector<16x256xf32>
    %49 = arith.truncf %48 : vector<16x256xf32> to vector<16x256xbf16>
    %c48 = arith.constant 48 : index
    %c0_20 = arith.constant 0 : index
    %50 = vector.load %arg8[%c48, %c0_20] : memref<400x256xbf16, #tpu.memory_space<vmem>>, vector<16x256xbf16>
    tpu.vector_store %arg8[%c48, %c0_20], %49 {strides = array<i32>} : memref<400x256xbf16, #tpu.memory_space<vmem>>, vector<16x256xbf16>,
    %cst_21 = arith.constant 0.949999988 : f32
    %51 = vector.broadcast %cst_21 : f32 to vector<16x256xf32>
    %52 = arith.mulf %51, %44 : vector<16x256xf32>
    %53 = arith.addf %52, %8 : vector<16x256xf32>
    %54 = arith.subf %53, %48 : vector<16x256xf32>
    %cst_22 = arith.constant 1.000000e+00 : f32
    %55 = vector.broadcast %cst_22 : f32 to vector<16x256xf32>
    %56 = arith.cmpf ogt, %54, %55 : vector<16x256xf32>
    %57 = arith.extui %56 : vector<16x256xi1> to vector<16x256xi32>
    %58 = arith.sitofp %57 : vector<16x256xi32> to vector<16x256xf32>
    %59 = arith.truncf %58 : vector<16x256xf32> to vector<16x256xbf16>
    %c64 = arith.constant 64 : index
    %c0_23 = arith.constant 0 : index
    %60 = vector.load %arg8[%c64, %c0_23] : memref<400x256xbf16, #tpu.memory_space<vmem>>, vector<16x256xbf16>
    tpu.vector_store %arg8[%c64, %c0_23], %59 {strides = array<i32>} : memref<400x256xbf16, #tpu.memory_space<vmem>>, vector<16x256xbf16>,
    %cst_24 = arith.constant 0.949999988 : f32
    %61 = vector.broadcast %cst_24 : f32 to vector<16x256xf32>
    %62 = arith.mulf %61, %54 : vector<16x256xf32>
    %63 = arith.addf %62, %8 : vector<16x256xf32>
    %64 = arith.subf %63, %58 : vector<16x256xf32>
    %cst_25 = arith.constant 1.000000e+00 : f32
    %65 = vector.broadcast %cst_25 : f32 to vector<16x256xf32>
    %66 = arith.cmpf ogt, %64, %65 : vector<16x256xf32>
    %67 = arith.extui %66 : vector<16x256xi1> to vector<16x256xi32>
    %68 = arith.sitofp %67 : vector<16x256xi32> to vector<16x256xf32>
    %69 = arith.truncf %68 : vector<16x256xf32> to vector<16x256xbf16>
    %c80 = arith.constant 80 : index
    %c0_26 = arith.constant 0 : index
    %70 = vector.load %arg8[%c80, %c0_26] : memref<400x256xbf16, #tpu.memory_space<vmem>>, vector<16x256xbf16>
    tpu.vector_store %arg8[%c80, %c0_26], %69 {strides = array<i32>} : memref<400x256xbf16, #tpu.memory_space<vmem>>, vector<16x256xbf16>,
    %cst_27 = arith.constant 0.949999988 : f32
    %71 = vector.broadcast %cst_27 : f32 to vector<16x256xf32>
    %72 = arith.mulf %71, %64 : vector<16x256xf32>
    %73 = arith.addf %72, %8 : vector<16x256xf32>
    %74 = arith.subf %73, %68 : vector<16x256xf32>
    %cst_28 = arith.constant 1.000000e+00 : f32
    %75 = vector.broadcast %cst_28 : f32 to vector<16x256xf32>
    %76 = arith.cmpf ogt, %74, %75 : vector<16x256xf32>
    %77 = arith.extui %76 : vector<16x256xi1> to vector<16x256xi32>
    %78 = arith.sitofp %77 : vector<16x256xi32> to vector<16x256xf32>
    %79 = arith.truncf %78 : vector<16x256xf32> to vector<16x256xbf16>
    %c96 = arith.constant 96 : index
    %c0_29 = arith.constant 0 : index
    %80 = vector.load %arg8[%c96, %c0_29] : memref<400x256xbf16, #tpu.memory_space<vmem>>, vector<16x256xbf16>
    tpu.vector_store %arg8[%c96, %c0_29], %79 {strides = array<i32>} : memref<400x256xbf16, #tpu.memory_space<vmem>>, vector<16x256xbf16>,
    %cst_30 = arith.constant 0.949999988 : f32
    %81 = vector.broadcast %cst_30 : f32 to vector<16x256xf32>
    %82 = arith.mulf %81, %74 : vector<16x256xf32>
    %83 = arith.addf %82, %8 : vector<16x256xf32>
    %84 = arith.subf %83, %78 : vector<16x256xf32>
    %cst_31 = arith.constant 1.000000e+00 : f32
    %85 = vector.broadcast %cst_31 : f32 to vector<16x256xf32>
    %86 = arith.cmpf ogt, %84, %85 : vector<16x256xf32>
    %87 = arith.extui %86 : vector<16x256xi1> to vector<16x256xi32>
    %88 = arith.sitofp %87 : vector<16x256xi32> to vector<16x256xf32>
    %89 = arith.truncf %88 : vector<16x256xf32> to vector<16x256xbf16>
    %c112 = arith.constant 112 : index
    %c0_32 = arith.constant 0 : index
    %90 = vector.load %arg8[%c112, %c0_32] : memref<400x256xbf16, #tpu.memory_space<vmem>>, vector<16x256xbf16>
    tpu.vector_store %arg8[%c112, %c0_32], %89 {strides = array<i32>} : memref<400x256xbf16, #tpu.memory_space<vmem>>, vector<16x256xbf16>,
    %cst_33 = arith.constant 0.949999988 : f32
    %91 = vector.broadcast %cst_33 : f32 to vector<16x256xf32>
    %92 = arith.mulf %91, %84 : vector<16x256xf32>
    %93 = arith.addf %92, %8 : vector<16x256xf32>
    %94 = arith.subf %93, %88 : vector<16x256xf32>
    %cst_34 = arith.constant 1.000000e+00 : f32
    %95 = vector.broadcast %cst_34 : f32 to vector<16x256xf32>
    %96 = arith.cmpf ogt, %94, %95 : vector<16x256xf32>
    %97 = arith.extui %96 : vector<16x256xi1> to vector<16x256xi32>
    %98 = arith.sitofp %97 : vector<16x256xi32> to vector<16x256xf32>
    %99 = arith.truncf %98 : vector<16x256xf32> to vector<16x256xbf16>
    %c128 = arith.constant 128 : index
    %c0_35 = arith.constant 0 : index
    %100 = vector.load %arg8[%c128, %c0_35] : memref<400x256xbf16, #tpu.memory_space<vmem>>, vector<16x256xbf16>
    tpu.vector_store %arg8[%c128, %c0_35], %99 {strides = array<i32>} : memref<400x256xbf16, #tpu.memory_space<vmem>>, vector<16x256xbf16>,
    %cst_36 = arith.constant 0.949999988 : f32
    %101 = vector.broadcast %cst_36 : f32 to vector<16x256xf32>
    %102 = arith.mulf %101, %94 : vector<16x256xf32>
    %103 = arith.addf %102, %8 : vector<16x256xf32>
    %104 = arith.subf %103, %98 : vector<16x256xf32>
    %cst_37 = arith.constant 1.000000e+00 : f32
    %105 = vector.broadcast %cst_37 : f32 to vector<16x256xf32>
    %106 = arith.cmpf ogt, %104, %105 : vector<16x256xf32>
    %107 = arith.extui %106 : vector<16x256xi1> to vector<16x256xi32>
    %108 = arith.sitofp %107 : vector<16x256xi32> to vector<16x256xf32>
    %109 = arith.truncf %108 : vector<16x256xf32> to vector<16x256xbf16>
    %c144 = arith.constant 144 : index
    %c0_38 = arith.constant 0 : index
    %110 = vector.load %arg8[%c144, %c0_38] : memref<400x256xbf16, #tpu.memory_space<vmem>>, vector<16x256xbf16>
    tpu.vector_store %arg8[%c144, %c0_38], %109 {strides = array<i32>} : memref<400x256xbf16, #tpu.memory_space<vmem>>, vector<16x256xbf16>,
    %cst_39 = arith.constant 0.949999988 : f32
    %111 = vector.broadcast %cst_39 : f32 to vector<16x256xf32>
    %112 = arith.mulf %111, %104 : vector<16x256xf32>
    %113 = arith.addf %112, %8 : vector<16x256xf32>
    %114 = arith.subf %113, %108 : vector<16x256xf32>
    %cst_40 = arith.constant 1.000000e+00 : f32
    %115 = vector.broadcast %cst_40 : f32 to vector<16x256xf32>
    %116 = arith.cmpf ogt, %114, %115 : vector<16x256xf32>
    %117 = arith.extui %116 : vector<16x256xi1> to vector<16x256xi32>
    %118 = arith.sitofp %117 : vector<16x256xi32> to vector<16x256xf32>
    %119 = arith.truncf %118 : vector<16x256xf32> to vector<16x256xbf16>
    %c160 = arith.constant 160 : index
    %c0_41 = arith.constant 0 : index
    %120 = vector.load %arg8[%c160, %c0_41] : memref<400x256xbf16, #tpu.memory_space<vmem>>, vector<16x256xbf16>
    tpu.vector_store %arg8[%c160, %c0_41], %119 {strides = array<i32>} : memref<400x256xbf16, #tpu.memory_space<vmem>>, vector<16x256xbf16>,
    %cst_42 = arith.constant 0.949999988 : f32
    %121 = vector.broadcast %cst_42 : f32 to vector<16x256xf32>
    %122 = arith.mulf %121, %114 : vector<16x256xf32>
    %123 = arith.addf %122, %8 : vector<16x256xf32>
    %124 = arith.subf %123, %118 : vector<16x256xf32>
    %cst_43 = arith.constant 1.000000e+00 : f32
    %125 = vector.broadcast %cst_43 : f32 to vector<16x256xf32>
    %126 = arith.cmpf ogt, %124, %125 : vector<16x256xf32>
    %127 = arith.extui %126 : vector<16x256xi1> to vector<16x256xi32>
    %128 = arith.sitofp %127 : vector<16x256xi32> to vector<16x256xf32>
    %129 = arith.truncf %128 : vector<16x256xf32> to vector<16x256xbf16>
    %c176 = arith.constant 176 : index
    %c0_44 = arith.constant 0 : index
    %130 = vector.load %arg8[%c176, %c0_44] : memref<400x256xbf16, #tpu.memory_space<vmem>>, vector<16x256xbf16>
    tpu.vector_store %arg8[%c176, %c0_44], %129 {strides = array<i32>} : memref<400x256xbf16, #tpu.memory_space<vmem>>, vector<16x256xbf16>,
    %cst_45 = arith.constant 0.949999988 : f32
    %131 = vector.broadcast %cst_45 : f32 to vector<16x256xf32>
    %132 = arith.mulf %131, %124 : vector<16x256xf32>
    %133 = arith.addf %132, %8 : vector<16x256xf32>
    %134 = arith.subf %133, %128 : vector<16x256xf32>
    %cst_46 = arith.constant 1.000000e+00 : f32
    %135 = vector.broadcast %cst_46 : f32 to vector<16x256xf32>
    %136 = arith.cmpf ogt, %134, %135 : vector<16x256xf32>
    %137 = arith.extui %136 : vector<16x256xi1> to vector<16x256xi32>
    %138 = arith.sitofp %137 : vector<16x256xi32> to vector<16x256xf32>
    %139 = arith.truncf %138 : vector<16x256xf32> to vector<16x256xbf16>
    %c192 = arith.constant 192 : index
    %c0_47 = arith.constant 0 : index
    %140 = vector.load %arg8[%c192, %c0_47] : memref<400x256xbf16, #tpu.memory_space<vmem>>, vector<16x256xbf16>
    tpu.vector_store %arg8[%c192, %c0_47], %139 {strides = array<i32>} : memref<400x256xbf16, #tpu.memory_space<vmem>>, vector<16x256xbf16>,
    %cst_48 = arith.constant 0.949999988 : f32
    %141 = vector.broadcast %cst_48 : f32 to vector<16x256xf32>
    %142 = arith.mulf %141, %134 : vector<16x256xf32>
    %143 = arith.addf %142, %8 : vector<16x256xf32>
    %144 = arith.subf %143, %138 : vector<16x256xf32>
    %cst_49 = arith.constant 1.000000e+00 : f32
    %145 = vector.broadcast %cst_49 : f32 to vector<16x256xf32>
    %146 = arith.cmpf ogt, %144, %145 : vector<16x256xf32>
    %147 = arith.extui %146 : vector<16x256xi1> to vector<16x256xi32>
    %148 = arith.sitofp %147 : vector<16x256xi32> to vector<16x256xf32>
    %149 = arith.truncf %148 : vector<16x256xf32> to vector<16x256xbf16>
    %c208 = arith.constant 208 : index
    %c0_50 = arith.constant 0 : index
    %150 = vector.load %arg8[%c208, %c0_50] : memref<400x256xbf16, #tpu.memory_space<vmem>>, vector<16x256xbf16>
    tpu.vector_store %arg8[%c208, %c0_50], %149 {strides = array<i32>} : memref<400x256xbf16, #tpu.memory_space<vmem>>, vector<16x256xbf16>,
    %cst_51 = arith.constant 0.949999988 : f32
    %151 = vector.broadcast %cst_51 : f32 to vector<16x256xf32>
    %152 = arith.mulf %151, %144 : vector<16x256xf32>
    %153 = arith.addf %152, %8 : vector<16x256xf32>
    %154 = arith.subf %153, %148 : vector<16x256xf32>
    %cst_52 = arith.constant 1.000000e+00 : f32
    %155 = vector.broadcast %cst_52 : f32 to vector<16x256xf32>
    %156 = arith.cmpf ogt, %154, %155 : vector<16x256xf32>
    %157 = arith.extui %156 : vector<16x256xi1> to vector<16x256xi32>
    %158 = arith.sitofp %157 : vector<16x256xi32> to vector<16x256xf32>
    %159 = arith.truncf %158 : vector<16x256xf32> to vector<16x256xbf16>
    %c224 = arith.constant 224 : index
    %c0_53 = arith.constant 0 : index
    %160 = vector.load %arg8[%c224, %c0_53] : memref<400x256xbf16, #tpu.memory_space<vmem>>, vector<16x256xbf16>
    tpu.vector_store %arg8[%c224, %c0_53], %159 {strides = array<i32>} : memref<400x256xbf16, #tpu.memory_space<vmem>>, vector<16x256xbf16>,
    %cst_54 = arith.constant 0.949999988 : f32
    %161 = vector.broadcast %cst_54 : f32 to vector<16x256xf32>
    %162 = arith.mulf %161, %154 : vector<16x256xf32>
    %163 = arith.addf %162, %8 : vector<16x256xf32>
    %164 = arith.subf %163, %158 : vector<16x256xf32>
    %cst_55 = arith.constant 1.000000e+00 : f32
    %165 = vector.broadcast %cst_55 : f32 to vector<16x256xf32>
    %166 = arith.cmpf ogt, %164, %165 : vector<16x256xf32>
    %167 = arith.extui %166 : vector<16x256xi1> to vector<16x256xi32>
    %168 = arith.sitofp %167 : vector<16x256xi32> to vector<16x256xf32>
    %169 = arith.truncf %168 : vector<16x256xf32> to vector<16x256xbf16>
    %c240 = arith.constant 240 : index
    %c0_56 = arith.constant 0 : index
    %170 = vector.load %arg8[%c240, %c0_56] : memref<400x256xbf16, #tpu.memory_space<vmem>>, vector<16x256xbf16>
    tpu.vector_store %arg8[%c240, %c0_56], %169 {strides = array<i32>} : memref<400x256xbf16, #tpu.memory_space<vmem>>, vector<16x256xbf16>,
    %cst_57 = arith.constant 0.949999988 : f32
    %171 = vector.broadcast %cst_57 : f32 to vector<16x256xf32>
    %172 = arith.mulf %171, %164 : vector<16x256xf32>
    %173 = arith.addf %172, %8 : vector<16x256xf32>
    %174 = arith.subf %173, %168 : vector<16x256xf32>
    %cst_58 = arith.constant 1.000000e+00 : f32
    %175 = vector.broadcast %cst_58 : f32 to vector<16x256xf32>
    %176 = arith.cmpf ogt, %174, %175 : vector<16x256xf32>
    %177 = arith.extui %176 : vector<16x256xi1> to vector<16x256xi32>
    %178 = arith.sitofp %177 : vector<16x256xi32> to vector<16x256xf32>
    %179 = arith.truncf %178 : vector<16x256xf32> to vector<16x256xbf16>
    %c256 = arith.constant 256 : index
    %c0_59 = arith.constant 0 : index
    %180 = vector.load %arg8[%c256, %c0_59] : memref<400x256xbf16, #tpu.memory_space<vmem>>, vector<16x256xbf16>
    tpu.vector_store %arg8[%c256, %c0_59], %179 {strides = array<i32>} : memref<400x256xbf16, #tpu.memory_space<vmem>>, vector<16x256xbf16>,
    %cst_60 = arith.constant 0.949999988 : f32
    %181 = vector.broadcast %cst_60 : f32 to vector<16x256xf32>
    %182 = arith.mulf %181, %174 : vector<16x256xf32>
    %183 = arith.addf %182, %8 : vector<16x256xf32>
    %184 = arith.subf %183, %178 : vector<16x256xf32>
    %cst_61 = arith.constant 1.000000e+00 : f32
    %185 = vector.broadcast %cst_61 : f32 to vector<16x256xf32>
    %186 = arith.cmpf ogt, %184, %185 : vector<16x256xf32>
    %187 = arith.extui %186 : vector<16x256xi1> to vector<16x256xi32>
    %188 = arith.sitofp %187 : vector<16x256xi32> to vector<16x256xf32>
    %189 = arith.truncf %188 : vector<16x256xf32> to vector<16x256xbf16>
    %c272 = arith.constant 272 : index
    %c0_62 = arith.constant 0 : index
    %190 = vector.load %arg8[%c272, %c0_62] : memref<400x256xbf16, #tpu.memory_space<vmem>>, vector<16x256xbf16>
    tpu.vector_store %arg8[%c272, %c0_62], %189 {strides = array<i32>} : memref<400x256xbf16, #tpu.memory_space<vmem>>, vector<16x256xbf16>,
    %cst_63 = arith.constant 0.949999988 : f32
    %191 = vector.broadcast %cst_63 : f32 to vector<16x256xf32>
    %192 = arith.mulf %191, %184 : vector<16x256xf32>
    %193 = arith.addf %192, %8 : vector<16x256xf32>
    %194 = arith.subf %193, %188 : vector<16x256xf32>
    %cst_64 = arith.constant 1.000000e+00 : f32
    %195 = vector.broadcast %cst_64 : f32 to vector<16x256xf32>
    %196 = arith.cmpf ogt, %194, %195 : vector<16x256xf32>
    %197 = arith.extui %196 : vector<16x256xi1> to vector<16x256xi32>
    %198 = arith.sitofp %197 : vector<16x256xi32> to vector<16x256xf32>
    %199 = arith.truncf %198 : vector<16x256xf32> to vector<16x256xbf16>
    %c288 = arith.constant 288 : index
    %c0_65 = arith.constant 0 : index
    %200 = vector.load %arg8[%c288, %c0_65] : memref<400x256xbf16, #tpu.memory_space<vmem>>, vector<16x256xbf16>
    tpu.vector_store %arg8[%c288, %c0_65], %199 {strides = array<i32>} : memref<400x256xbf16, #tpu.memory_space<vmem>>, vector<16x256xbf16>,
    %cst_66 = arith.constant 0.949999988 : f32
    %201 = vector.broadcast %cst_66 : f32 to vector<16x256xf32>
    %202 = arith.mulf %201, %194 : vector<16x256xf32>
    %203 = arith.addf %202, %8 : vector<16x256xf32>
    %204 = arith.subf %203, %198 : vector<16x256xf32>
    %cst_67 = arith.constant 1.000000e+00 : f32
    %205 = vector.broadcast %cst_67 : f32 to vector<16x256xf32>
    %206 = arith.cmpf ogt, %204, %205 : vector<16x256xf32>
    %207 = arith.extui %206 : vector<16x256xi1> to vector<16x256xi32>
    %208 = arith.sitofp %207 : vector<16x256xi32> to vector<16x256xf32>
    %209 = arith.truncf %208 : vector<16x256xf32> to vector<16x256xbf16>
    %c304 = arith.constant 304 : index
    %c0_68 = arith.constant 0 : index
    %210 = vector.load %arg8[%c304, %c0_68] : memref<400x256xbf16, #tpu.memory_space<vmem>>, vector<16x256xbf16>
    tpu.vector_store %arg8[%c304, %c0_68], %209 {strides = array<i32>} : memref<400x256xbf16, #tpu.memory_space<vmem>>, vector<16x256xbf16>,
    %cst_69 = arith.constant 0.949999988 : f32
    %211 = vector.broadcast %cst_69 : f32 to vector<16x256xf32>
    %212 = arith.mulf %211, %204 : vector<16x256xf32>
    %213 = arith.addf %212, %8 : vector<16x256xf32>
    %214 = arith.subf %213, %208 : vector<16x256xf32>
    %cst_70 = arith.constant 1.000000e+00 : f32
    %215 = vector.broadcast %cst_70 : f32 to vector<16x256xf32>
    %216 = arith.cmpf ogt, %214, %215 : vector<16x256xf32>
    %217 = arith.extui %216 : vector<16x256xi1> to vector<16x256xi32>
    %218 = arith.sitofp %217 : vector<16x256xi32> to vector<16x256xf32>
    %219 = arith.truncf %218 : vector<16x256xf32> to vector<16x256xbf16>
    %c320 = arith.constant 320 : index
    %c0_71 = arith.constant 0 : index
    %220 = vector.load %arg8[%c320, %c0_71] : memref<400x256xbf16, #tpu.memory_space<vmem>>, vector<16x256xbf16>
    tpu.vector_store %arg8[%c320, %c0_71], %219 {strides = array<i32>} : memref<400x256xbf16, #tpu.memory_space<vmem>>, vector<16x256xbf16>,
    %cst_72 = arith.constant 0.949999988 : f32
    %221 = vector.broadcast %cst_72 : f32 to vector<16x256xf32>
    %222 = arith.mulf %221, %214 : vector<16x256xf32>
    %223 = arith.addf %222, %8 : vector<16x256xf32>
    %224 = arith.subf %223, %218 : vector<16x256xf32>
    %cst_73 = arith.constant 1.000000e+00 : f32
    %225 = vector.broadcast %cst_73 : f32 to vector<16x256xf32>
    %226 = arith.cmpf ogt, %224, %225 : vector<16x256xf32>
    %227 = arith.extui %226 : vector<16x256xi1> to vector<16x256xi32>
    %228 = arith.sitofp %227 : vector<16x256xi32> to vector<16x256xf32>
    %229 = arith.truncf %228 : vector<16x256xf32> to vector<16x256xbf16>
    %c336 = arith.constant 336 : index
    %c0_74 = arith.constant 0 : index
    %230 = vector.load %arg8[%c336, %c0_74] : memref<400x256xbf16, #tpu.memory_space<vmem>>, vector<16x256xbf16>
    tpu.vector_store %arg8[%c336, %c0_74], %229 {strides = array<i32>} : memref<400x256xbf16, #tpu.memory_space<vmem>>, vector<16x256xbf16>,
    %cst_75 = arith.constant 0.949999988 : f32
    %231 = vector.broadcast %cst_75 : f32 to vector<16x256xf32>
    %232 = arith.mulf %231, %224 : vector<16x256xf32>
    %233 = arith.addf %232, %8 : vector<16x256xf32>
    %234 = arith.subf %233, %228 : vector<16x256xf32>
    %cst_76 = arith.constant 1.000000e+00 : f32
    %235 = vector.broadcast %cst_76 : f32 to vector<16x256xf32>
    %236 = arith.cmpf ogt, %234, %235 : vector<16x256xf32>
    %237 = arith.extui %236 : vector<16x256xi1> to vector<16x256xi32>
    %238 = arith.sitofp %237 : vector<16x256xi32> to vector<16x256xf32>
    %239 = arith.truncf %238 : vector<16x256xf32> to vector<16x256xbf16>
    %c352 = arith.constant 352 : index
    %c0_77 = arith.constant 0 : index
    %240 = vector.load %arg8[%c352, %c0_77] : memref<400x256xbf16, #tpu.memory_space<vmem>>, vector<16x256xbf16>
    tpu.vector_store %arg8[%c352, %c0_77], %239 {strides = array<i32>} : memref<400x256xbf16, #tpu.memory_space<vmem>>, vector<16x256xbf16>,
    %cst_78 = arith.constant 0.949999988 : f32
    %241 = vector.broadcast %cst_78 : f32 to vector<16x256xf32>
    %242 = arith.mulf %241, %234 : vector<16x256xf32>
    %243 = arith.addf %242, %8 : vector<16x256xf32>
    %244 = arith.subf %243, %238 : vector<16x256xf32>
    %cst_79 = arith.constant 1.000000e+00 : f32
    %245 = vector.broadcast %cst_79 : f32 to vector<16x256xf32>
    %246 = arith.cmpf ogt, %244, %245 : vector<16x256xf32>
    %247 = arith.extui %246 : vector<16x256xi1> to vector<16x256xi32>
    %248 = arith.sitofp %247 : vector<16x256xi32> to vector<16x256xf32>
    %249 = arith.truncf %248 : vector<16x256xf32> to vector<16x256xbf16>
    %c368 = arith.constant 368 : index
    %c0_80 = arith.constant 0 : index
    %250 = vector.load %arg8[%c368, %c0_80] : memref<400x256xbf16, #tpu.memory_space<vmem>>, vector<16x256xbf16>
    tpu.vector_store %arg8[%c368, %c0_80], %249 {strides = array<i32>} : memref<400x256xbf16, #tpu.memory_space<vmem>>, vector<16x256xbf16>,
    %cst_81 = arith.constant 0.949999988 : f32
    %251 = vector.broadcast %cst_81 : f32 to vector<16x256xf32>
    %252 = arith.mulf %251, %244 : vector<16x256xf32>
    %253 = arith.addf %252, %8 : vector<16x256xf32>
    %254 = arith.subf %253, %248 : vector<16x256xf32>
    %cst_82 = arith.constant 1.000000e+00 : f32
    %255 = vector.broadcast %cst_82 : f32 to vector<16x256xf32>
    %256 = arith.cmpf ogt, %254, %255 : vector<16x256xf32>
    %257 = arith.extui %256 : vector<16x256xi1> to vector<16x256xi32>
    %258 = arith.sitofp %257 : vector<16x256xi32> to vector<16x256xf32>
    %259 = arith.truncf %258 : vector<16x256xf32> to vector<16x256xbf16>
    %c384 = arith.constant 384 : index
    %c0_83 = arith.constant 0 : index
    %260 = vector.load %arg8[%c384, %c0_83] : memref<400x256xbf16, #tpu.memory_space<vmem>>, vector<16x256xbf16>
    tpu.vector_store %arg8[%c384, %c0_83], %259 {strides = array<i32>} : memref<400x256xbf16, #tpu.memory_space<vmem>>, vector<16x256xbf16>,
    %c0_84 = arith.constant 0 : index
    %c0_85 = arith.constant 0 : index
    %261 = vector.load %arg9[%c0_84, %c0_85] : memref<400x128xf32, #tpu.memory_space<vmem>>, vector<400x128xf32>
    %c0_86 = arith.constant 0 : index
    %c0_87 = arith.constant 0 : index
    %262 = vector.load %arg8[%c0_86, %c0_87] : memref<400x256xbf16, #tpu.memory_space<vmem>>, vector<400x256xbf16>
    %c0_88 = arith.constant 0 : index
    %c0_89 = arith.constant 0 : index
    %263 = vector.load %arg5[%c0_88, %c0_89] : memref<256x128xbf16, #tpu.memory_space<vmem>>, vector<256x128xbf16>
    %cst_90 = arith.constant dense<0.000000e+00> : vector<400x128xf32>
    %264 = tpu.matmul %262, %263, %cst_90 {dimension_numbers = #tpu.dot_dimension_numbers<[1], [0], [0], [1], [0, 0, 1, 1], [], []>} : vector<400x256xbf16>, vector<256x128xbf16>, vector<400x128xf32> -> vector<400x128xf32>
    %265 = arith.addf %261, %264 : vector<400x128xf32>
    %c0_91 = arith.constant 0 : index
    %c0_92 = arith.constant 0 : index
    %266 = vector.load %arg9[%c0_91, %c0_92] : memref<400x128xf32, #tpu.memory_space<vmem>>, vector<400x128xf32>
    tpu.vector_store %arg9[%c0_91, %c0_92], %265 {strides = array<i32>} : memref<400x128xf32, #tpu.memory_space<vmem>>, vector<400x128xf32>,
    %c3_i32 = arith.constant 3 : i32
    %267 = arith.cmpi eq, %arg1, %c3_i32 : i32
    %268 = arith.extui %267 : i1 to i32
    %c0_i32_93 = arith.constant 0 : i32
    %269 = arith.cmpi ne, %268, %c0_i32_93 : i32
    scf.if %269 {
      %c0_94 = arith.constant 0 : index
      %c0_95 = arith.constant 0 : index
      %270 = vector.load %arg6[%c0_94, %c0_95] : memref<1x128xf32, #tpu.memory_space<vmem>>, vector<1x128xf32>
      %cst_96 = arith.constant 0.000000e+00 : f32
      %271 = vector.broadcast %cst_96 : f32 to vector<16x128xf32>
      %cst_97 = arith.constant 0.000000e+00 : f32
      %272 = vector.broadcast %cst_97 : f32 to vector<16x128xf32>
      %c0_98 = arith.constant 0 : index
      %c0_99 = arith.constant 0 : index
      %273 = vector.load %arg9[%c0_98, %c0_99] : memref<400x128xf32, #tpu.memory_space<vmem>>, vector<16x128xf32>
      %274 = vector.broadcast %270 : vector<1x128xf32> to vector<16x128xf32>
      %275 = arith.addf %273, %274 : vector<16x128xf32>
      %cst_100 = arith.constant 0.949999988 : f32
      %276 = vector.broadcast %cst_100 : f32 to vector<16x128xf32>
      %277 = arith.mulf %276, %271 : vector<16x128xf32>
      %278 = arith.addf %277, %275 : vector<16x128xf32>
      %279 = arith.subf %278, %272 : vector<16x128xf32>
      %cst_101 = arith.constant 1.000000e+00 : f32
      %280 = vector.broadcast %cst_101 : f32 to vector<16x128xf32>
      %281 = arith.cmpf ogt, %279, %280 : vector<16x128xf32>
      %282 = arith.extui %281 : vector<16x128xi1> to vector<16x128xi32>
      %283 = arith.sitofp %282 : vector<16x128xi32> to vector<16x128xf32>
      %c0_102 = arith.constant 0 : index
      %c0_103 = arith.constant 0 : index
      %c0_104 = arith.constant 0 : index
      %c0_105 = arith.constant 0 : index
      %284 = vector.load %arg7[%c0_102, %c0_103, %c0_104, %c0_105] : memref<2x25x16x128xf32, #tpu.memory_space<vmem>>, vector<1x1x16x128xf32>
      %285 = vector.shape_cast %284 : vector<1x1x16x128xf32> to vector<16x128xf32>
      %286 = vector.shape_cast %283 : vector<16x128xf32> to vector<1x1x16x128xf32>
      tpu.vector_store %arg7[%c0_102, %c0_103, %c0_104, %c0_105], %286 {strides = array<i32>} : memref<2x25x16x128xf32, #tpu.memory_space<vmem>>, vector<1x1x16x128xf32>,
      %c1 = arith.constant 1 : index
      %c0_106 = arith.constant 0 : index
      %c0_107 = arith.constant 0 : index
      %c0_108 = arith.constant 0 : index
      %287 = vector.load %arg7[%c1, %c0_106, %c0_107, %c0_108] : memref<2x25x16x128xf32, #tpu.memory_space<vmem>>, vector<1x1x16x128xf32>
      %288 = vector.shape_cast %287 : vector<1x1x16x128xf32> to vector<16x128xf32>
      %289 = vector.shape_cast %279 : vector<16x128xf32> to vector<1x1x16x128xf32>
      tpu.vector_store %arg7[%c1, %c0_106, %c0_107, %c0_108], %289 {strides = array<i32>} : memref<2x25x16x128xf32, #tpu.memory_space<vmem>>, vector<1x1x16x128xf32>,
      %c16_109 = arith.constant 16 : index
      %c0_110 = arith.constant 0 : index
      %290 = vector.load %arg9[%c16_109, %c0_110] : memref<400x128xf32, #tpu.memory_space<vmem>>, vector<16x128xf32>
      %291 = vector.broadcast %270 : vector<1x128xf32> to vector<16x128xf32>
      %292 = arith.addf %290, %291 : vector<16x128xf32>
      %cst_111 = arith.constant 0.949999988 : f32
      %293 = vector.broadcast %cst_111 : f32 to vector<16x128xf32>
      %294 = arith.mulf %293, %279 : vector<16x128xf32>
      %295 = arith.addf %294, %292 : vector<16x128xf32>
      %296 = arith.subf %295, %283 : vector<16x128xf32>
      %cst_112 = arith.constant 1.000000e+00 : f32
      %297 = vector.broadcast %cst_112 : f32 to vector<16x128xf32>
      %298 = arith.cmpf ogt, %296, %297 : vector<16x128xf32>
      %299 = arith.extui %298 : vector<16x128xi1> to vector<16x128xi32>
      %300 = arith.sitofp %299 : vector<16x128xi32> to vector<16x128xf32>
      %c0_113 = arith.constant 0 : index
      %c1_114 = arith.constant 1 : index
      %c0_115 = arith.constant 0 : index
      %c0_116 = arith.constant 0 : index
      %301 = vector.load %arg7[%c0_113, %c1_114, %c0_115, %c0_116] : memref<2x25x16x128xf32, #tpu.memory_space<vmem>>, vector<1x1x16x128xf32>
      %302 = vector.shape_cast %301 : vector<1x1x16x128xf32> to vector<16x128xf32>
      %303 = vector.shape_cast %300 : vector<16x128xf32> to vector<1x1x16x128xf32>
      tpu.vector_store %arg7[%c0_113, %c1_114, %c0_115, %c0_116], %303 {strides = array<i32>} : memref<2x25x16x128xf32, #tpu.memory_space<vmem>>, vector<1x1x16x128xf32>,
      %c1_117 = arith.constant 1 : index
      %c1_118 = arith.constant 1 : index
      %c0_119 = arith.constant 0 : index
      %c0_120 = arith.constant 0 : index
      %304 = vector.load %arg7[%c1_117, %c1_118, %c0_119, %c0_120] : memref<2x25x16x128xf32, #tpu.memory_space<vmem>>, vector<1x1x16x128xf32>
      %305 = vector.shape_cast %304 : vector<1x1x16x128xf32> to vector<16x128xf32>
      %306 = vector.shape_cast %296 : vector<16x128xf32> to vector<1x1x16x128xf32>
      tpu.vector_store %arg7[%c1_117, %c1_118, %c0_119, %c0_120], %306 {strides = array<i32>} : memref<2x25x16x128xf32, #tpu.memory_space<vmem>>, vector<1x1x16x128xf32>,
      %c32_121 = arith.constant 32 : index
      %c0_122 = arith.constant 0 : index
      %307 = vector.load %arg9[%c32_121, %c0_122] : memref<400x128xf32, #tpu.memory_space<vmem>>, vector<16x128xf32>
      %308 = vector.broadcast %270 : vector<1x128xf32> to vector<16x128xf32>
      %309 = arith.addf %307, %308 : vector<16x128xf32>
      %cst_123 = arith.constant 0.949999988 : f32
      %310 = vector.broadcast %cst_123 : f32 to vector<16x128xf32>
      %311 = arith.mulf %310, %296 : vector<16x128xf32>
      %312 = arith.addf %311, %309 : vector<16x128xf32>
      %313 = arith.subf %312, %300 : vector<16x128xf32>
      %cst_124 = arith.constant 1.000000e+00 : f32
      %314 = vector.broadcast %cst_124 : f32 to vector<16x128xf32>
      %315 = arith.cmpf ogt, %313, %314 : vector<16x128xf32>
      %316 = arith.extui %315 : vector<16x128xi1> to vector<16x128xi32>
      %317 = arith.sitofp %316 : vector<16x128xi32> to vector<16x128xf32>
      %c0_125 = arith.constant 0 : index
      %c2 = arith.constant 2 : index
      %c0_126 = arith.constant 0 : index
      %c0_127 = arith.constant 0 : index
      %318 = vector.load %arg7[%c0_125, %c2, %c0_126, %c0_127] : memref<2x25x16x128xf32, #tpu.memory_space<vmem>>, vector<1x1x16x128xf32>
      %319 = vector.shape_cast %318 : vector<1x1x16x128xf32> to vector<16x128xf32>
      %320 = vector.shape_cast %317 : vector<16x128xf32> to vector<1x1x16x128xf32>
      tpu.vector_store %arg7[%c0_125, %c2, %c0_126, %c0_127], %320 {strides = array<i32>} : memref<2x25x16x128xf32, #tpu.memory_space<vmem>>, vector<1x1x16x128xf32>,
      %c1_128 = arith.constant 1 : index
      %c2_129 = arith.constant 2 : index
      %c0_130 = arith.constant 0 : index
      %c0_131 = arith.constant 0 : index
      %321 = vector.load %arg7[%c1_128, %c2_129, %c0_130, %c0_131] : memref<2x25x16x128xf32, #tpu.memory_space<vmem>>, vector<1x1x16x128xf32>
      %322 = vector.shape_cast %321 : vector<1x1x16x128xf32> to vector<16x128xf32>
      %323 = vector.shape_cast %313 : vector<16x128xf32> to vector<1x1x16x128xf32>
      tpu.vector_store %arg7[%c1_128, %c2_129, %c0_130, %c0_131], %323 {strides = array<i32>} : memref<2x25x16x128xf32, #tpu.memory_space<vmem>>, vector<1x1x16x128xf32>,
      %c48_132 = arith.constant 48 : index
      %c0_133 = arith.constant 0 : index
      %324 = vector.load %arg9[%c48_132, %c0_133] : memref<400x128xf32, #tpu.memory_space<vmem>>, vector<16x128xf32>
      %325 = vector.broadcast %270 : vector<1x128xf32> to vector<16x128xf32>
      %326 = arith.addf %324, %325 : vector<16x128xf32>
      %cst_134 = arith.constant 0.949999988 : f32
      %327 = vector.broadcast %cst_134 : f32 to vector<16x128xf32>
      %328 = arith.mulf %327, %313 : vector<16x128xf32>
      %329 = arith.addf %328, %326 : vector<16x128xf32>
      %330 = arith.subf %329, %317 : vector<16x128xf32>
      %cst_135 = arith.constant 1.000000e+00 : f32
      %331 = vector.broadcast %cst_135 : f32 to vector<16x128xf32>
      %332 = arith.cmpf ogt, %330, %331 : vector<16x128xf32>
      %333 = arith.extui %332 : vector<16x128xi1> to vector<16x128xi32>
      %334 = arith.sitofp %333 : vector<16x128xi32> to vector<16x128xf32>
      %c0_136 = arith.constant 0 : index
      %c3 = arith.constant 3 : index
      %c0_137 = arith.constant 0 : index
      %c0_138 = arith.constant 0 : index
      %335 = vector.load %arg7[%c0_136, %c3, %c0_137, %c0_138] : memref<2x25x16x128xf32, #tpu.memory_space<vmem>>, vector<1x1x16x128xf32>
      %336 = vector.shape_cast %335 : vector<1x1x16x128xf32> to vector<16x128xf32>
      %337 = vector.shape_cast %334 : vector<16x128xf32> to vector<1x1x16x128xf32>
      tpu.vector_store %arg7[%c0_136, %c3, %c0_137, %c0_138], %337 {strides = array<i32>} : memref<2x25x16x128xf32, #tpu.memory_space<vmem>>, vector<1x1x16x128xf32>,
      %c1_139 = arith.constant 1 : index
      %c3_140 = arith.constant 3 : index
      %c0_141 = arith.constant 0 : index
      %c0_142 = arith.constant 0 : index
      %338 = vector.load %arg7[%c1_139, %c3_140, %c0_141, %c0_142] : memref<2x25x16x128xf32, #tpu.memory_space<vmem>>, vector<1x1x16x128xf32>
      %339 = vector.shape_cast %338 : vector<1x1x16x128xf32> to vector<16x128xf32>
      %340 = vector.shape_cast %330 : vector<16x128xf32> to vector<1x1x16x128xf32>
      tpu.vector_store %arg7[%c1_139, %c3_140, %c0_141, %c0_142], %340 {strides = array<i32>} : memref<2x25x16x128xf32, #tpu.memory_space<vmem>>, vector<1x1x16x128xf32>,
      %c64_143 = arith.constant 64 : index
      %c0_144 = arith.constant 0 : index
      %341 = vector.load %arg9[%c64_143, %c0_144] : memref<400x128xf32, #tpu.memory_space<vmem>>, vector<16x128xf32>
      %342 = vector.broadcast %270 : vector<1x128xf32> to vector<16x128xf32>
      %343 = arith.addf %341, %342 : vector<16x128xf32>
      %cst_145 = arith.constant 0.949999988 : f32
      %344 = vector.broadcast %cst_145 : f32 to vector<16x128xf32>
      %345 = arith.mulf %344, %330 : vector<16x128xf32>
      %346 = arith.addf %345, %343 : vector<16x128xf32>
      %347 = arith.subf %346, %334 : vector<16x128xf32>
      %cst_146 = arith.constant 1.000000e+00 : f32
      %348 = vector.broadcast %cst_146 : f32 to vector<16x128xf32>
      %349 = arith.cmpf ogt, %347, %348 : vector<16x128xf32>
      %350 = arith.extui %349 : vector<16x128xi1> to vector<16x128xi32>
      %351 = arith.sitofp %350 : vector<16x128xi32> to vector<16x128xf32>
      %c0_147 = arith.constant 0 : index
      %c4 = arith.constant 4 : index
      %c0_148 = arith.constant 0 : index
      %c0_149 = arith.constant 0 : index
      %352 = vector.load %arg7[%c0_147, %c4, %c0_148, %c0_149] : memref<2x25x16x128xf32, #tpu.memory_space<vmem>>, vector<1x1x16x128xf32>
      %353 = vector.shape_cast %352 : vector<1x1x16x128xf32> to vector<16x128xf32>
      %354 = vector.shape_cast %351 : vector<16x128xf32> to vector<1x1x16x128xf32>
      tpu.vector_store %arg7[%c0_147, %c4, %c0_148, %c0_149], %354 {strides = array<i32>} : memref<2x25x16x128xf32, #tpu.memory_space<vmem>>, vector<1x1x16x128xf32>,
      %c1_150 = arith.constant 1 : index
      %c4_151 = arith.constant 4 : index
      %c0_152 = arith.constant 0 : index
      %c0_153 = arith.constant 0 : index
      %355 = vector.load %arg7[%c1_150, %c4_151, %c0_152, %c0_153] : memref<2x25x16x128xf32, #tpu.memory_space<vmem>>, vector<1x1x16x128xf32>
      %356 = vector.shape_cast %355 : vector<1x1x16x128xf32> to vector<16x128xf32>
      %357 = vector.shape_cast %347 : vector<16x128xf32> to vector<1x1x16x128xf32>
      tpu.vector_store %arg7[%c1_150, %c4_151, %c0_152, %c0_153], %357 {strides = array<i32>} : memref<2x25x16x128xf32, #tpu.memory_space<vmem>>, vector<1x1x16x128xf32>,
      %c80_154 = arith.constant 80 : index
      %c0_155 = arith.constant 0 : index
      %358 = vector.load %arg9[%c80_154, %c0_155] : memref<400x128xf32, #tpu.memory_space<vmem>>, vector<16x128xf32>
      %359 = vector.broadcast %270 : vector<1x128xf32> to vector<16x128xf32>
      %360 = arith.addf %358, %359 : vector<16x128xf32>
      %cst_156 = arith.constant 0.949999988 : f32
      %361 = vector.broadcast %cst_156 : f32 to vector<16x128xf32>
      %362 = arith.mulf %361, %347 : vector<16x128xf32>
      %363 = arith.addf %362, %360 : vector<16x128xf32>
      %364 = arith.subf %363, %351 : vector<16x128xf32>
      %cst_157 = arith.constant 1.000000e+00 : f32
      %365 = vector.broadcast %cst_157 : f32 to vector<16x128xf32>
      %366 = arith.cmpf ogt, %364, %365 : vector<16x128xf32>
      %367 = arith.extui %366 : vector<16x128xi1> to vector<16x128xi32>
      %368 = arith.sitofp %367 : vector<16x128xi32> to vector<16x128xf32>
      %c0_158 = arith.constant 0 : index
      %c5 = arith.constant 5 : index
      %c0_159 = arith.constant 0 : index
      %c0_160 = arith.constant 0 : index
      %369 = vector.load %arg7[%c0_158, %c5, %c0_159, %c0_160] : memref<2x25x16x128xf32, #tpu.memory_space<vmem>>, vector<1x1x16x128xf32>
      %370 = vector.shape_cast %369 : vector<1x1x16x128xf32> to vector<16x128xf32>
      %371 = vector.shape_cast %368 : vector<16x128xf32> to vector<1x1x16x128xf32>
      tpu.vector_store %arg7[%c0_158, %c5, %c0_159, %c0_160], %371 {strides = array<i32>} : memref<2x25x16x128xf32, #tpu.memory_space<vmem>>, vector<1x1x16x128xf32>,
      %c1_161 = arith.constant 1 : index
      %c5_162 = arith.constant 5 : index
      %c0_163 = arith.constant 0 : index
      %c0_164 = arith.constant 0 : index
      %372 = vector.load %arg7[%c1_161, %c5_162, %c0_163, %c0_164] : memref<2x25x16x128xf32, #tpu.memory_space<vmem>>, vector<1x1x16x128xf32>
      %373 = vector.shape_cast %372 : vector<1x1x16x128xf32> to vector<16x128xf32>
      %374 = vector.shape_cast %364 : vector<16x128xf32> to vector<1x1x16x128xf32>
      tpu.vector_store %arg7[%c1_161, %c5_162, %c0_163, %c0_164], %374 {strides = array<i32>} : memref<2x25x16x128xf32, #tpu.memory_space<vmem>>, vector<1x1x16x128xf32>,
      %c96_165 = arith.constant 96 : index
      %c0_166 = arith.constant 0 : index
      %375 = vector.load %arg9[%c96_165, %c0_166] : memref<400x128xf32, #tpu.memory_space<vmem>>, vector<16x128xf32>
      %376 = vector.broadcast %270 : vector<1x128xf32> to vector<16x128xf32>
      %377 = arith.addf %375, %376 : vector<16x128xf32>
      %cst_167 = arith.constant 0.949999988 : f32
      %378 = vector.broadcast %cst_167 : f32 to vector<16x128xf32>
      %379 = arith.mulf %378, %364 : vector<16x128xf32>
      %380 = arith.addf %379, %377 : vector<16x128xf32>
      %381 = arith.subf %380, %368 : vector<16x128xf32>
      %cst_168 = arith.constant 1.000000e+00 : f32
      %382 = vector.broadcast %cst_168 : f32 to vector<16x128xf32>
      %383 = arith.cmpf ogt, %381, %382 : vector<16x128xf32>
      %384 = arith.extui %383 : vector<16x128xi1> to vector<16x128xi32>
      %385 = arith.sitofp %384 : vector<16x128xi32> to vector<16x128xf32>
      %c0_169 = arith.constant 0 : index
      %c6 = arith.constant 6 : index
      %c0_170 = arith.constant 0 : index
      %c0_171 = arith.constant 0 : index
      %386 = vector.load %arg7[%c0_169, %c6, %c0_170, %c0_171] : memref<2x25x16x128xf32, #tpu.memory_space<vmem>>, vector<1x1x16x128xf32>
      %387 = vector.shape_cast %386 : vector<1x1x16x128xf32> to vector<16x128xf32>
      %388 = vector.shape_cast %385 : vector<16x128xf32> to vector<1x1x16x128xf32>
      tpu.vector_store %arg7[%c0_169, %c6, %c0_170, %c0_171], %388 {strides = array<i32>} : memref<2x25x16x128xf32, #tpu.memory_space<vmem>>, vector<1x1x16x128xf32>,
      %c1_172 = arith.constant 1 : index
      %c6_173 = arith.constant 6 : index
      %c0_174 = arith.constant 0 : index
      %c0_175 = arith.constant 0 : index
      %389 = vector.load %arg7[%c1_172, %c6_173, %c0_174, %c0_175] : memref<2x25x16x128xf32, #tpu.memory_space<vmem>>, vector<1x1x16x128xf32>
      %390 = vector.shape_cast %389 : vector<1x1x16x128xf32> to vector<16x128xf32>
      %391 = vector.shape_cast %381 : vector<16x128xf32> to vector<1x1x16x128xf32>
      tpu.vector_store %arg7[%c1_172, %c6_173, %c0_174, %c0_175], %391 {strides = array<i32>} : memref<2x25x16x128xf32, #tpu.memory_space<vmem>>, vector<1x1x16x128xf32>,
      %c112_176 = arith.constant 112 : index
      %c0_177 = arith.constant 0 : index
      %392 = vector.load %arg9[%c112_176, %c0_177] : memref<400x128xf32, #tpu.memory_space<vmem>>, vector<16x128xf32>
      %393 = vector.broadcast %270 : vector<1x128xf32> to vector<16x128xf32>
      %394 = arith.addf %392, %393 : vector<16x128xf32>
      %cst_178 = arith.constant 0.949999988 : f32
      %395 = vector.broadcast %cst_178 : f32 to vector<16x128xf32>
      %396 = arith.mulf %395, %381 : vector<16x128xf32>
      %397 = arith.addf %396, %394 : vector<16x128xf32>
      %398 = arith.subf %397, %385 : vector<16x128xf32>
      %cst_179 = arith.constant 1.000000e+00 : f32
      %399 = vector.broadcast %cst_179 : f32 to vector<16x128xf32>
      %400 = arith.cmpf ogt, %398, %399 : vector<16x128xf32>
      %401 = arith.extui %400 : vector<16x128xi1> to vector<16x128xi32>
      %402 = arith.sitofp %401 : vector<16x128xi32> to vector<16x128xf32>
      %c0_180 = arith.constant 0 : index
      %c7 = arith.constant 7 : index
      %c0_181 = arith.constant 0 : index
      %c0_182 = arith.constant 0 : index
      %403 = vector.load %arg7[%c0_180, %c7, %c0_181, %c0_182] : memref<2x25x16x128xf32, #tpu.memory_space<vmem>>, vector<1x1x16x128xf32>
      %404 = vector.shape_cast %403 : vector<1x1x16x128xf32> to vector<16x128xf32>
      %405 = vector.shape_cast %402 : vector<16x128xf32> to vector<1x1x16x128xf32>
      tpu.vector_store %arg7[%c0_180, %c7, %c0_181, %c0_182], %405 {strides = array<i32>} : memref<2x25x16x128xf32, #tpu.memory_space<vmem>>, vector<1x1x16x128xf32>,
      %c1_183 = arith.constant 1 : index
      %c7_184 = arith.constant 7 : index
      %c0_185 = arith.constant 0 : index
      %c0_186 = arith.constant 0 : index
      %406 = vector.load %arg7[%c1_183, %c7_184, %c0_185, %c0_186] : memref<2x25x16x128xf32, #tpu.memory_space<vmem>>, vector<1x1x16x128xf32>
      %407 = vector.shape_cast %406 : vector<1x1x16x128xf32> to vector<16x128xf32>
      %408 = vector.shape_cast %398 : vector<16x128xf32> to vector<1x1x16x128xf32>
      tpu.vector_store %arg7[%c1_183, %c7_184, %c0_185, %c0_186], %408 {strides = array<i32>} : memref<2x25x16x128xf32, #tpu.memory_space<vmem>>, vector<1x1x16x128xf32>,
      %c128_187 = arith.constant 128 : index
      %c0_188 = arith.constant 0 : index
      %409 = vector.load %arg9[%c128_187, %c0_188] : memref<400x128xf32, #tpu.memory_space<vmem>>, vector<16x128xf32>
      %410 = vector.broadcast %270 : vector<1x128xf32> to vector<16x128xf32>
      %411 = arith.addf %409, %410 : vector<16x128xf32>
      %cst_189 = arith.constant 0.949999988 : f32
      %412 = vector.broadcast %cst_189 : f32 to vector<16x128xf32>
      %413 = arith.mulf %412, %398 : vector<16x128xf32>
      %414 = arith.addf %413, %411 : vector<16x128xf32>
      %415 = arith.subf %414, %402 : vector<16x128xf32>
      %cst_190 = arith.constant 1.000000e+00 : f32
      %416 = vector.broadcast %cst_190 : f32 to vector<16x128xf32>
      %417 = arith.cmpf ogt, %415, %416 : vector<16x128xf32>
      %418 = arith.extui %417 : vector<16x128xi1> to vector<16x128xi32>
      %419 = arith.sitofp %418 : vector<16x128xi32> to vector<16x128xf32>
      %c0_191 = arith.constant 0 : index
      %c8 = arith.constant 8 : index
      %c0_192 = arith.constant 0 : index
      %c0_193 = arith.constant 0 : index
      %420 = vector.load %arg7[%c0_191, %c8, %c0_192, %c0_193] : memref<2x25x16x128xf32, #tpu.memory_space<vmem>>, vector<1x1x16x128xf32>
      %421 = vector.shape_cast %420 : vector<1x1x16x128xf32> to vector<16x128xf32>
      %422 = vector.shape_cast %419 : vector<16x128xf32> to vector<1x1x16x128xf32>
      tpu.vector_store %arg7[%c0_191, %c8, %c0_192, %c0_193], %422 {strides = array<i32>} : memref<2x25x16x128xf32, #tpu.memory_space<vmem>>, vector<1x1x16x128xf32>,
      %c1_194 = arith.constant 1 : index
      %c8_195 = arith.constant 8 : index
      %c0_196 = arith.constant 0 : index
      %c0_197 = arith.constant 0 : index
      %423 = vector.load %arg7[%c1_194, %c8_195, %c0_196, %c0_197] : memref<2x25x16x128xf32, #tpu.memory_space<vmem>>, vector<1x1x16x128xf32>
      %424 = vector.shape_cast %423 : vector<1x1x16x128xf32> to vector<16x128xf32>
      %425 = vector.shape_cast %415 : vector<16x128xf32> to vector<1x1x16x128xf32>
      tpu.vector_store %arg7[%c1_194, %c8_195, %c0_196, %c0_197], %425 {strides = array<i32>} : memref<2x25x16x128xf32, #tpu.memory_space<vmem>>, vector<1x1x16x128xf32>,
      %c144_198 = arith.constant 144 : index
      %c0_199 = arith.constant 0 : index
      %426 = vector.load %arg9[%c144_198, %c0_199] : memref<400x128xf32, #tpu.memory_space<vmem>>, vector<16x128xf32>
      %427 = vector.broadcast %270 : vector<1x128xf32> to vector<16x128xf32>
      %428 = arith.addf %426, %427 : vector<16x128xf32>
      %cst_200 = arith.constant 0.949999988 : f32
      %429 = vector.broadcast %cst_200 : f32 to vector<16x128xf32>
      %430 = arith.mulf %429, %415 : vector<16x128xf32>
      %431 = arith.addf %430, %428 : vector<16x128xf32>
      %432 = arith.subf %431, %419 : vector<16x128xf32>
      %cst_201 = arith.constant 1.000000e+00 : f32
      %433 = vector.broadcast %cst_201 : f32 to vector<16x128xf32>
      %434 = arith.cmpf ogt, %432, %433 : vector<16x128xf32>
      %435 = arith.extui %434 : vector<16x128xi1> to vector<16x128xi32>
      %436 = arith.sitofp %435 : vector<16x128xi32> to vector<16x128xf32>
      %c0_202 = arith.constant 0 : index
      %c9 = arith.constant 9 : index
      %c0_203 = arith.constant 0 : index
      %c0_204 = arith.constant 0 : index
      %437 = vector.load %arg7[%c0_202, %c9, %c0_203, %c0_204] : memref<2x25x16x128xf32, #tpu.memory_space<vmem>>, vector<1x1x16x128xf32>
      %438 = vector.shape_cast %437 : vector<1x1x16x128xf32> to vector<16x128xf32>
      %439 = vector.shape_cast %436 : vector<16x128xf32> to vector<1x1x16x128xf32>
      tpu.vector_store %arg7[%c0_202, %c9, %c0_203, %c0_204], %439 {strides = array<i32>} : memref<2x25x16x128xf32, #tpu.memory_space<vmem>>, vector<1x1x16x128xf32>,
      %c1_205 = arith.constant 1 : index
      %c9_206 = arith.constant 9 : index
      %c0_207 = arith.constant 0 : index
      %c0_208 = arith.constant 0 : index
      %440 = vector.load %arg7[%c1_205, %c9_206, %c0_207, %c0_208] : memref<2x25x16x128xf32, #tpu.memory_space<vmem>>, vector<1x1x16x128xf32>
      %441 = vector.shape_cast %440 : vector<1x1x16x128xf32> to vector<16x128xf32>
      %442 = vector.shape_cast %432 : vector<16x128xf32> to vector<1x1x16x128xf32>
      tpu.vector_store %arg7[%c1_205, %c9_206, %c0_207, %c0_208], %442 {strides = array<i32>} : memref<2x25x16x128xf32, #tpu.memory_space<vmem>>, vector<1x1x16x128xf32>,
      %c160_209 = arith.constant 160 : index
      %c0_210 = arith.constant 0 : index
      %443 = vector.load %arg9[%c160_209, %c0_210] : memref<400x128xf32, #tpu.memory_space<vmem>>, vector<16x128xf32>
      %444 = vector.broadcast %270 : vector<1x128xf32> to vector<16x128xf32>
      %445 = arith.addf %443, %444 : vector<16x128xf32>
      %cst_211 = arith.constant 0.949999988 : f32
      %446 = vector.broadcast %cst_211 : f32 to vector<16x128xf32>
      %447 = arith.mulf %446, %432 : vector<16x128xf32>
      %448 = arith.addf %447, %445 : vector<16x128xf32>
      %449 = arith.subf %448, %436 : vector<16x128xf32>
      %cst_212 = arith.constant 1.000000e+00 : f32
      %450 = vector.broadcast %cst_212 : f32 to vector<16x128xf32>
      %451 = arith.cmpf ogt, %449, %450 : vector<16x128xf32>
      %452 = arith.extui %451 : vector<16x128xi1> to vector<16x128xi32>
      %453 = arith.sitofp %452 : vector<16x128xi32> to vector<16x128xf32>
      %c0_213 = arith.constant 0 : index
      %c10 = arith.constant 10 : index
      %c0_214 = arith.constant 0 : index
      %c0_215 = arith.constant 0 : index
      %454 = vector.load %arg7[%c0_213, %c10, %c0_214, %c0_215] : memref<2x25x16x128xf32, #tpu.memory_space<vmem>>, vector<1x1x16x128xf32>
      %455 = vector.shape_cast %454 : vector<1x1x16x128xf32> to vector<16x128xf32>
      %456 = vector.shape_cast %453 : vector<16x128xf32> to vector<1x1x16x128xf32>
      tpu.vector_store %arg7[%c0_213, %c10, %c0_214, %c0_215], %456 {strides = array<i32>} : memref<2x25x16x128xf32, #tpu.memory_space<vmem>>, vector<1x1x16x128xf32>,
      %c1_216 = arith.constant 1 : index
      %c10_217 = arith.constant 10 : index
      %c0_218 = arith.constant 0 : index
      %c0_219 = arith.constant 0 : index
      %457 = vector.load %arg7[%c1_216, %c10_217, %c0_218, %c0_219] : memref<2x25x16x128xf32, #tpu.memory_space<vmem>>, vector<1x1x16x128xf32>
      %458 = vector.shape_cast %457 : vector<1x1x16x128xf32> to vector<16x128xf32>
      %459 = vector.shape_cast %449 : vector<16x128xf32> to vector<1x1x16x128xf32>
      tpu.vector_store %arg7[%c1_216, %c10_217, %c0_218, %c0_219], %459 {strides = array<i32>} : memref<2x25x16x128xf32, #tpu.memory_space<vmem>>, vector<1x1x16x128xf32>,
      %c176_220 = arith.constant 176 : index
      %c0_221 = arith.constant 0 : index
      %460 = vector.load %arg9[%c176_220, %c0_221] : memref<400x128xf32, #tpu.memory_space<vmem>>, vector<16x128xf32>
      %461 = vector.broadcast %270 : vector<1x128xf32> to vector<16x128xf32>
      %462 = arith.addf %460, %461 : vector<16x128xf32>
      %cst_222 = arith.constant 0.949999988 : f32
      %463 = vector.broadcast %cst_222 : f32 to vector<16x128xf32>
      %464 = arith.mulf %463, %449 : vector<16x128xf32>
      %465 = arith.addf %464, %462 : vector<16x128xf32>
      %466 = arith.subf %465, %453 : vector<16x128xf32>
      %cst_223 = arith.constant 1.000000e+00 : f32
      %467 = vector.broadcast %cst_223 : f32 to vector<16x128xf32>
      %468 = arith.cmpf ogt, %466, %467 : vector<16x128xf32>
      %469 = arith.extui %468 : vector<16x128xi1> to vector<16x128xi32>
      %470 = arith.sitofp %469 : vector<16x128xi32> to vector<16x128xf32>
      %c0_224 = arith.constant 0 : index
      %c11 = arith.constant 11 : index
      %c0_225 = arith.constant 0 : index
      %c0_226 = arith.constant 0 : index
      %471 = vector.load %arg7[%c0_224, %c11, %c0_225, %c0_226] : memref<2x25x16x128xf32, #tpu.memory_space<vmem>>, vector<1x1x16x128xf32>
      %472 = vector.shape_cast %471 : vector<1x1x16x128xf32> to vector<16x128xf32>
      %473 = vector.shape_cast %470 : vector<16x128xf32> to vector<1x1x16x128xf32>
      tpu.vector_store %arg7[%c0_224, %c11, %c0_225, %c0_226], %473 {strides = array<i32>} : memref<2x25x16x128xf32, #tpu.memory_space<vmem>>, vector<1x1x16x128xf32>,
      %c1_227 = arith.constant 1 : index
      %c11_228 = arith.constant 11 : index
      %c0_229 = arith.constant 0 : index
      %c0_230 = arith.constant 0 : index
      %474 = vector.load %arg7[%c1_227, %c11_228, %c0_229, %c0_230] : memref<2x25x16x128xf32, #tpu.memory_space<vmem>>, vector<1x1x16x128xf32>
      %475 = vector.shape_cast %474 : vector<1x1x16x128xf32> to vector<16x128xf32>
      %476 = vector.shape_cast %466 : vector<16x128xf32> to vector<1x1x16x128xf32>
      tpu.vector_store %arg7[%c1_227, %c11_228, %c0_229, %c0_230], %476 {strides = array<i32>} : memref<2x25x16x128xf32, #tpu.memory_space<vmem>>, vector<1x1x16x128xf32>,
      %c192_231 = arith.constant 192 : index
      %c0_232 = arith.constant 0 : index
      %477 = vector.load %arg9[%c192_231, %c0_232] : memref<400x128xf32, #tpu.memory_space<vmem>>, vector<16x128xf32>
      %478 = vector.broadcast %270 : vector<1x128xf32> to vector<16x128xf32>
      %479 = arith.addf %477, %478 : vector<16x128xf32>
      %cst_233 = arith.constant 0.949999988 : f32
      %480 = vector.broadcast %cst_233 : f32 to vector<16x128xf32>
      %481 = arith.mulf %480, %466 : vector<16x128xf32>
      %482 = arith.addf %481, %479 : vector<16x128xf32>
      %483 = arith.subf %482, %470 : vector<16x128xf32>
      %cst_234 = arith.constant 1.000000e+00 : f32
      %484 = vector.broadcast %cst_234 : f32 to vector<16x128xf32>
      %485 = arith.cmpf ogt, %483, %484 : vector<16x128xf32>
      %486 = arith.extui %485 : vector<16x128xi1> to vector<16x128xi32>
      %487 = arith.sitofp %486 : vector<16x128xi32> to vector<16x128xf32>
      %c0_235 = arith.constant 0 : index
      %c12 = arith.constant 12 : index
      %c0_236 = arith.constant 0 : index
      %c0_237 = arith.constant 0 : index
      %488 = vector.load %arg7[%c0_235, %c12, %c0_236, %c0_237] : memref<2x25x16x128xf32, #tpu.memory_space<vmem>>, vector<1x1x16x128xf32>
      %489 = vector.shape_cast %488 : vector<1x1x16x128xf32> to vector<16x128xf32>
      %490 = vector.shape_cast %487 : vector<16x128xf32> to vector<1x1x16x128xf32>
      tpu.vector_store %arg7[%c0_235, %c12, %c0_236, %c0_237], %490 {strides = array<i32>} : memref<2x25x16x128xf32, #tpu.memory_space<vmem>>, vector<1x1x16x128xf32>,
      %c1_238 = arith.constant 1 : index
      %c12_239 = arith.constant 12 : index
      %c0_240 = arith.constant 0 : index
      %c0_241 = arith.constant 0 : index
      %491 = vector.load %arg7[%c1_238, %c12_239, %c0_240, %c0_241] : memref<2x25x16x128xf32, #tpu.memory_space<vmem>>, vector<1x1x16x128xf32>
      %492 = vector.shape_cast %491 : vector<1x1x16x128xf32> to vector<16x128xf32>
      %493 = vector.shape_cast %483 : vector<16x128xf32> to vector<1x1x16x128xf32>
      tpu.vector_store %arg7[%c1_238, %c12_239, %c0_240, %c0_241], %493 {strides = array<i32>} : memref<2x25x16x128xf32, #tpu.memory_space<vmem>>, vector<1x1x16x128xf32>,
      %c208_242 = arith.constant 208 : index
      %c0_243 = arith.constant 0 : index
      %494 = vector.load %arg9[%c208_242, %c0_243] : memref<400x128xf32, #tpu.memory_space<vmem>>, vector<16x128xf32>
      %495 = vector.broadcast %270 : vector<1x128xf32> to vector<16x128xf32>
      %496 = arith.addf %494, %495 : vector<16x128xf32>
      %cst_244 = arith.constant 0.949999988 : f32
      %497 = vector.broadcast %cst_244 : f32 to vector<16x128xf32>
      %498 = arith.mulf %497, %483 : vector<16x128xf32>
      %499 = arith.addf %498, %496 : vector<16x128xf32>
      %500 = arith.subf %499, %487 : vector<16x128xf32>
      %cst_245 = arith.constant 1.000000e+00 : f32
      %501 = vector.broadcast %cst_245 : f32 to vector<16x128xf32>
      %502 = arith.cmpf ogt, %500, %501 : vector<16x128xf32>
      %503 = arith.extui %502 : vector<16x128xi1> to vector<16x128xi32>
      %504 = arith.sitofp %503 : vector<16x128xi32> to vector<16x128xf32>
      %c0_246 = arith.constant 0 : index
      %c13 = arith.constant 13 : index
      %c0_247 = arith.constant 0 : index
      %c0_248 = arith.constant 0 : index
      %505 = vector.load %arg7[%c0_246, %c13, %c0_247, %c0_248] : memref<2x25x16x128xf32, #tpu.memory_space<vmem>>, vector<1x1x16x128xf32>
      %506 = vector.shape_cast %505 : vector<1x1x16x128xf32> to vector<16x128xf32>
      %507 = vector.shape_cast %504 : vector<16x128xf32> to vector<1x1x16x128xf32>
      tpu.vector_store %arg7[%c0_246, %c13, %c0_247, %c0_248], %507 {strides = array<i32>} : memref<2x25x16x128xf32, #tpu.memory_space<vmem>>, vector<1x1x16x128xf32>,
      %c1_249 = arith.constant 1 : index
      %c13_250 = arith.constant 13 : index
      %c0_251 = arith.constant 0 : index
      %c0_252 = arith.constant 0 : index
      %508 = vector.load %arg7[%c1_249, %c13_250, %c0_251, %c0_252] : memref<2x25x16x128xf32, #tpu.memory_space<vmem>>, vector<1x1x16x128xf32>
      %509 = vector.shape_cast %508 : vector<1x1x16x128xf32> to vector<16x128xf32>
      %510 = vector.shape_cast %500 : vector<16x128xf32> to vector<1x1x16x128xf32>
      tpu.vector_store %arg7[%c1_249, %c13_250, %c0_251, %c0_252], %510 {strides = array<i32>} : memref<2x25x16x128xf32, #tpu.memory_space<vmem>>, vector<1x1x16x128xf32>,
      %c224_253 = arith.constant 224 : index
      %c0_254 = arith.constant 0 : index
      %511 = vector.load %arg9[%c224_253, %c0_254] : memref<400x128xf32, #tpu.memory_space<vmem>>, vector<16x128xf32>
      %512 = vector.broadcast %270 : vector<1x128xf32> to vector<16x128xf32>
      %513 = arith.addf %511, %512 : vector<16x128xf32>
      %cst_255 = arith.constant 0.949999988 : f32
      %514 = vector.broadcast %cst_255 : f32 to vector<16x128xf32>
      %515 = arith.mulf %514, %500 : vector<16x128xf32>
      %516 = arith.addf %515, %513 : vector<16x128xf32>
      %517 = arith.subf %516, %504 : vector<16x128xf32>
      %cst_256 = arith.constant 1.000000e+00 : f32
      %518 = vector.broadcast %cst_256 : f32 to vector<16x128xf32>
      %519 = arith.cmpf ogt, %517, %518 : vector<16x128xf32>
      %520 = arith.extui %519 : vector<16x128xi1> to vector<16x128xi32>
      %521 = arith.sitofp %520 : vector<16x128xi32> to vector<16x128xf32>
      %c0_257 = arith.constant 0 : index
      %c14 = arith.constant 14 : index
      %c0_258 = arith.constant 0 : index
      %c0_259 = arith.constant 0 : index
      %522 = vector.load %arg7[%c0_257, %c14, %c0_258, %c0_259] : memref<2x25x16x128xf32, #tpu.memory_space<vmem>>, vector<1x1x16x128xf32>
      %523 = vector.shape_cast %522 : vector<1x1x16x128xf32> to vector<16x128xf32>
      %524 = vector.shape_cast %521 : vector<16x128xf32> to vector<1x1x16x128xf32>
      tpu.vector_store %arg7[%c0_257, %c14, %c0_258, %c0_259], %524 {strides = array<i32>} : memref<2x25x16x128xf32, #tpu.memory_space<vmem>>, vector<1x1x16x128xf32>,
      %c1_260 = arith.constant 1 : index
      %c14_261 = arith.constant 14 : index
      %c0_262 = arith.constant 0 : index
      %c0_263 = arith.constant 0 : index
      %525 = vector.load %arg7[%c1_260, %c14_261, %c0_262, %c0_263] : memref<2x25x16x128xf32, #tpu.memory_space<vmem>>, vector<1x1x16x128xf32>
      %526 = vector.shape_cast %525 : vector<1x1x16x128xf32> to vector<16x128xf32>
      %527 = vector.shape_cast %517 : vector<16x128xf32> to vector<1x1x16x128xf32>
      tpu.vector_store %arg7[%c1_260, %c14_261, %c0_262, %c0_263], %527 {strides = array<i32>} : memref<2x25x16x128xf32, #tpu.memory_space<vmem>>, vector<1x1x16x128xf32>,
      %c240_264 = arith.constant 240 : index
      %c0_265 = arith.constant 0 : index
      %528 = vector.load %arg9[%c240_264, %c0_265] : memref<400x128xf32, #tpu.memory_space<vmem>>, vector<16x128xf32>
      %529 = vector.broadcast %270 : vector<1x128xf32> to vector<16x128xf32>
      %530 = arith.addf %528, %529 : vector<16x128xf32>
      %cst_266 = arith.constant 0.949999988 : f32
      %531 = vector.broadcast %cst_266 : f32 to vector<16x128xf32>
      %532 = arith.mulf %531, %517 : vector<16x128xf32>
      %533 = arith.addf %532, %530 : vector<16x128xf32>
      %534 = arith.subf %533, %521 : vector<16x128xf32>
      %cst_267 = arith.constant 1.000000e+00 : f32
      %535 = vector.broadcast %cst_267 : f32 to vector<16x128xf32>
      %536 = arith.cmpf ogt, %534, %535 : vector<16x128xf32>
      %537 = arith.extui %536 : vector<16x128xi1> to vector<16x128xi32>
      %538 = arith.sitofp %537 : vector<16x128xi32> to vector<16x128xf32>
      %c0_268 = arith.constant 0 : index
      %c15 = arith.constant 15 : index
      %c0_269 = arith.constant 0 : index
      %c0_270 = arith.constant 0 : index
      %539 = vector.load %arg7[%c0_268, %c15, %c0_269, %c0_270] : memref<2x25x16x128xf32, #tpu.memory_space<vmem>>, vector<1x1x16x128xf32>
      %540 = vector.shape_cast %539 : vector<1x1x16x128xf32> to vector<16x128xf32>
      %541 = vector.shape_cast %538 : vector<16x128xf32> to vector<1x1x16x128xf32>
      tpu.vector_store %arg7[%c0_268, %c15, %c0_269, %c0_270], %541 {strides = array<i32>} : memref<2x25x16x128xf32, #tpu.memory_space<vmem>>, vector<1x1x16x128xf32>,
      %c1_271 = arith.constant 1 : index
      %c15_272 = arith.constant 15 : index
      %c0_273 = arith.constant 0 : index
      %c0_274 = arith.constant 0 : index
      %542 = vector.load %arg7[%c1_271, %c15_272, %c0_273, %c0_274] : memref<2x25x16x128xf32, #tpu.memory_space<vmem>>, vector<1x1x16x128xf32>
      %543 = vector.shape_cast %542 : vector<1x1x16x128xf32> to vector<16x128xf32>
      %544 = vector.shape_cast %534 : vector<16x128xf32> to vector<1x1x16x128xf32>
      tpu.vector_store %arg7[%c1_271, %c15_272, %c0_273, %c0_274], %544 {strides = array<i32>} : memref<2x25x16x128xf32, #tpu.memory_space<vmem>>, vector<1x1x16x128xf32>,
      %c256_275 = arith.constant 256 : index
      %c0_276 = arith.constant 0 : index
      %545 = vector.load %arg9[%c256_275, %c0_276] : memref<400x128xf32, #tpu.memory_space<vmem>>, vector<16x128xf32>
      %546 = vector.broadcast %270 : vector<1x128xf32> to vector<16x128xf32>
      %547 = arith.addf %545, %546 : vector<16x128xf32>
      %cst_277 = arith.constant 0.949999988 : f32
      %548 = vector.broadcast %cst_277 : f32 to vector<16x128xf32>
      %549 = arith.mulf %548, %534 : vector<16x128xf32>
      %550 = arith.addf %549, %547 : vector<16x128xf32>
      %551 = arith.subf %550, %538 : vector<16x128xf32>
      %cst_278 = arith.constant 1.000000e+00 : f32
      %552 = vector.broadcast %cst_278 : f32 to vector<16x128xf32>
      %553 = arith.cmpf ogt, %551, %552 : vector<16x128xf32>
      %554 = arith.extui %553 : vector<16x128xi1> to vector<16x128xi32>
      %555 = arith.sitofp %554 : vector<16x128xi32> to vector<16x128xf32>
      %c0_279 = arith.constant 0 : index
      %c16_280 = arith.constant 16 : index
      %c0_281 = arith.constant 0 : index
      %c0_282 = arith.constant 0 : index
      %556 = vector.load %arg7[%c0_279, %c16_280, %c0_281, %c0_282] : memref<2x25x16x128xf32, #tpu.memory_space<vmem>>, vector<1x1x16x128xf32>
      %557 = vector.shape_cast %556 : vector<1x1x16x128xf32> to vector<16x128xf32>
      %558 = vector.shape_cast %555 : vector<16x128xf32> to vector<1x1x16x128xf32>
      tpu.vector_store %arg7[%c0_279, %c16_280, %c0_281, %c0_282], %558 {strides = array<i32>} : memref<2x25x16x128xf32, #tpu.memory_space<vmem>>, vector<1x1x16x128xf32>,
      %c1_283 = arith.constant 1 : index
      %c16_284 = arith.constant 16 : index
      %c0_285 = arith.constant 0 : index
      %c0_286 = arith.constant 0 : index
      %559 = vector.load %arg7[%c1_283, %c16_284, %c0_285, %c0_286] : memref<2x25x16x128xf32, #tpu.memory_space<vmem>>, vector<1x1x16x128xf32>
      %560 = vector.shape_cast %559 : vector<1x1x16x128xf32> to vector<16x128xf32>
      %561 = vector.shape_cast %551 : vector<16x128xf32> to vector<1x1x16x128xf32>
      tpu.vector_store %arg7[%c1_283, %c16_284, %c0_285, %c0_286], %561 {strides = array<i32>} : memref<2x25x16x128xf32, #tpu.memory_space<vmem>>, vector<1x1x16x128xf32>,
      %c272_287 = arith.constant 272 : index
      %c0_288 = arith.constant 0 : index
      %562 = vector.load %arg9[%c272_287, %c0_288] : memref<400x128xf32, #tpu.memory_space<vmem>>, vector<16x128xf32>
      %563 = vector.broadcast %270 : vector<1x128xf32> to vector<16x128xf32>
      %564 = arith.addf %562, %563 : vector<16x128xf32>
      %cst_289 = arith.constant 0.949999988 : f32
      %565 = vector.broadcast %cst_289 : f32 to vector<16x128xf32>
      %566 = arith.mulf %565, %551 : vector<16x128xf32>
      %567 = arith.addf %566, %564 : vector<16x128xf32>
      %568 = arith.subf %567, %555 : vector<16x128xf32>
      %cst_290 = arith.constant 1.000000e+00 : f32
      %569 = vector.broadcast %cst_290 : f32 to vector<16x128xf32>
      %570 = arith.cmpf ogt, %568, %569 : vector<16x128xf32>
      %571 = arith.extui %570 : vector<16x128xi1> to vector<16x128xi32>
      %572 = arith.sitofp %571 : vector<16x128xi32> to vector<16x128xf32>
      %c0_291 = arith.constant 0 : index
      %c17 = arith.constant 17 : index
      %c0_292 = arith.constant 0 : index
      %c0_293 = arith.constant 0 : index
      %573 = vector.load %arg7[%c0_291, %c17, %c0_292, %c0_293] : memref<2x25x16x128xf32, #tpu.memory_space<vmem>>, vector<1x1x16x128xf32>
      %574 = vector.shape_cast %573 : vector<1x1x16x128xf32> to vector<16x128xf32>
      %575 = vector.shape_cast %572 : vector<16x128xf32> to vector<1x1x16x128xf32>
      tpu.vector_store %arg7[%c0_291, %c17, %c0_292, %c0_293], %575 {strides = array<i32>} : memref<2x25x16x128xf32, #tpu.memory_space<vmem>>, vector<1x1x16x128xf32>,
      %c1_294 = arith.constant 1 : index
      %c17_295 = arith.constant 17 : index
      %c0_296 = arith.constant 0 : index
      %c0_297 = arith.constant 0 : index
      %576 = vector.load %arg7[%c1_294, %c17_295, %c0_296, %c0_297] : memref<2x25x16x128xf32, #tpu.memory_space<vmem>>, vector<1x1x16x128xf32>
      %577 = vector.shape_cast %576 : vector<1x1x16x128xf32> to vector<16x128xf32>
      %578 = vector.shape_cast %568 : vector<16x128xf32> to vector<1x1x16x128xf32>
      tpu.vector_store %arg7[%c1_294, %c17_295, %c0_296, %c0_297], %578 {strides = array<i32>} : memref<2x25x16x128xf32, #tpu.memory_space<vmem>>, vector<1x1x16x128xf32>,
      %c288_298 = arith.constant 288 : index
      %c0_299 = arith.constant 0 : index
      %579 = vector.load %arg9[%c288_298, %c0_299] : memref<400x128xf32, #tpu.memory_space<vmem>>, vector<16x128xf32>
      %580 = vector.broadcast %270 : vector<1x128xf32> to vector<16x128xf32>
      %581 = arith.addf %579, %580 : vector<16x128xf32>
      %cst_300 = arith.constant 0.949999988 : f32
      %582 = vector.broadcast %cst_300 : f32 to vector<16x128xf32>
      %583 = arith.mulf %582, %568 : vector<16x128xf32>
      %584 = arith.addf %583, %581 : vector<16x128xf32>
      %585 = arith.subf %584, %572 : vector<16x128xf32>
      %cst_301 = arith.constant 1.000000e+00 : f32
      %586 = vector.broadcast %cst_301 : f32 to vector<16x128xf32>
      %587 = arith.cmpf ogt, %585, %586 : vector<16x128xf32>
      %588 = arith.extui %587 : vector<16x128xi1> to vector<16x128xi32>
      %589 = arith.sitofp %588 : vector<16x128xi32> to vector<16x128xf32>
      %c0_302 = arith.constant 0 : index
      %c18 = arith.constant 18 : index
      %c0_303 = arith.constant 0 : index
      %c0_304 = arith.constant 0 : index
      %590 = vector.load %arg7[%c0_302, %c18, %c0_303, %c0_304] : memref<2x25x16x128xf32, #tpu.memory_space<vmem>>, vector<1x1x16x128xf32>
      %591 = vector.shape_cast %590 : vector<1x1x16x128xf32> to vector<16x128xf32>
      %592 = vector.shape_cast %589 : vector<16x128xf32> to vector<1x1x16x128xf32>
      tpu.vector_store %arg7[%c0_302, %c18, %c0_303, %c0_304], %592 {strides = array<i32>} : memref<2x25x16x128xf32, #tpu.memory_space<vmem>>, vector<1x1x16x128xf32>,
      %c1_305 = arith.constant 1 : index
      %c18_306 = arith.constant 18 : index
      %c0_307 = arith.constant 0 : index
      %c0_308 = arith.constant 0 : index
      %593 = vector.load %arg7[%c1_305, %c18_306, %c0_307, %c0_308] : memref<2x25x16x128xf32, #tpu.memory_space<vmem>>, vector<1x1x16x128xf32>
      %594 = vector.shape_cast %593 : vector<1x1x16x128xf32> to vector<16x128xf32>
      %595 = vector.shape_cast %585 : vector<16x128xf32> to vector<1x1x16x128xf32>
      tpu.vector_store %arg7[%c1_305, %c18_306, %c0_307, %c0_308], %595 {strides = array<i32>} : memref<2x25x16x128xf32, #tpu.memory_space<vmem>>, vector<1x1x16x128xf32>,
      %c304_309 = arith.constant 304 : index
      %c0_310 = arith.constant 0 : index
      %596 = vector.load %arg9[%c304_309, %c0_310] : memref<400x128xf32, #tpu.memory_space<vmem>>, vector<16x128xf32>
      %597 = vector.broadcast %270 : vector<1x128xf32> to vector<16x128xf32>
      %598 = arith.addf %596, %597 : vector<16x128xf32>
      %cst_311 = arith.constant 0.949999988 : f32
      %599 = vector.broadcast %cst_311 : f32 to vector<16x128xf32>
      %600 = arith.mulf %599, %585 : vector<16x128xf32>
      %601 = arith.addf %600, %598 : vector<16x128xf32>
      %602 = arith.subf %601, %589 : vector<16x128xf32>
      %cst_312 = arith.constant 1.000000e+00 : f32
      %603 = vector.broadcast %cst_312 : f32 to vector<16x128xf32>
      %604 = arith.cmpf ogt, %602, %603 : vector<16x128xf32>
      %605 = arith.extui %604 : vector<16x128xi1> to vector<16x128xi32>
      %606 = arith.sitofp %605 : vector<16x128xi32> to vector<16x128xf32>
      %c0_313 = arith.constant 0 : index
      %c19 = arith.constant 19 : index
      %c0_314 = arith.constant 0 : index
      %c0_315 = arith.constant 0 : index
      %607 = vector.load %arg7[%c0_313, %c19, %c0_314, %c0_315] : memref<2x25x16x128xf32, #tpu.memory_space<vmem>>, vector<1x1x16x128xf32>
      %608 = vector.shape_cast %607 : vector<1x1x16x128xf32> to vector<16x128xf32>
      %609 = vector.shape_cast %606 : vector<16x128xf32> to vector<1x1x16x128xf32>
      tpu.vector_store %arg7[%c0_313, %c19, %c0_314, %c0_315], %609 {strides = array<i32>} : memref<2x25x16x128xf32, #tpu.memory_space<vmem>>, vector<1x1x16x128xf32>,
      %c1_316 = arith.constant 1 : index
      %c19_317 = arith.constant 19 : index
      %c0_318 = arith.constant 0 : index
      %c0_319 = arith.constant 0 : index
      %610 = vector.load %arg7[%c1_316, %c19_317, %c0_318, %c0_319] : memref<2x25x16x128xf32, #tpu.memory_space<vmem>>, vector<1x1x16x128xf32>
      %611 = vector.shape_cast %610 : vector<1x1x16x128xf32> to vector<16x128xf32>
      %612 = vector.shape_cast %602 : vector<16x128xf32> to vector<1x1x16x128xf32>
      tpu.vector_store %arg7[%c1_316, %c19_317, %c0_318, %c0_319], %612 {strides = array<i32>} : memref<2x25x16x128xf32, #tpu.memory_space<vmem>>, vector<1x1x16x128xf32>,
      %c320_320 = arith.constant 320 : index
      %c0_321 = arith.constant 0 : index
      %613 = vector.load %arg9[%c320_320, %c0_321] : memref<400x128xf32, #tpu.memory_space<vmem>>, vector<16x128xf32>
      %614 = vector.broadcast %270 : vector<1x128xf32> to vector<16x128xf32>
      %615 = arith.addf %613, %614 : vector<16x128xf32>
      %cst_322 = arith.constant 0.949999988 : f32
      %616 = vector.broadcast %cst_322 : f32 to vector<16x128xf32>
      %617 = arith.mulf %616, %602 : vector<16x128xf32>
      %618 = arith.addf %617, %615 : vector<16x128xf32>
      %619 = arith.subf %618, %606 : vector<16x128xf32>
      %cst_323 = arith.constant 1.000000e+00 : f32
      %620 = vector.broadcast %cst_323 : f32 to vector<16x128xf32>
      %621 = arith.cmpf ogt, %619, %620 : vector<16x128xf32>
      %622 = arith.extui %621 : vector<16x128xi1> to vector<16x128xi32>
      %623 = arith.sitofp %622 : vector<16x128xi32> to vector<16x128xf32>
      %c0_324 = arith.constant 0 : index
      %c20 = arith.constant 20 : index
      %c0_325 = arith.constant 0 : index
      %c0_326 = arith.constant 0 : index
      %624 = vector.load %arg7[%c0_324, %c20, %c0_325, %c0_326] : memref<2x25x16x128xf32, #tpu.memory_space<vmem>>, vector<1x1x16x128xf32>
      %625 = vector.shape_cast %624 : vector<1x1x16x128xf32> to vector<16x128xf32>
      %626 = vector.shape_cast %623 : vector<16x128xf32> to vector<1x1x16x128xf32>
      tpu.vector_store %arg7[%c0_324, %c20, %c0_325, %c0_326], %626 {strides = array<i32>} : memref<2x25x16x128xf32, #tpu.memory_space<vmem>>, vector<1x1x16x128xf32>,
      %c1_327 = arith.constant 1 : index
      %c20_328 = arith.constant 20 : index
      %c0_329 = arith.constant 0 : index
      %c0_330 = arith.constant 0 : index
      %627 = vector.load %arg7[%c1_327, %c20_328, %c0_329, %c0_330] : memref<2x25x16x128xf32, #tpu.memory_space<vmem>>, vector<1x1x16x128xf32>
      %628 = vector.shape_cast %627 : vector<1x1x16x128xf32> to vector<16x128xf32>
      %629 = vector.shape_cast %619 : vector<16x128xf32> to vector<1x1x16x128xf32>
      tpu.vector_store %arg7[%c1_327, %c20_328, %c0_329, %c0_330], %629 {strides = array<i32>} : memref<2x25x16x128xf32, #tpu.memory_space<vmem>>, vector<1x1x16x128xf32>,
      %c336_331 = arith.constant 336 : index
      %c0_332 = arith.constant 0 : index
      %630 = vector.load %arg9[%c336_331, %c0_332] : memref<400x128xf32, #tpu.memory_space<vmem>>, vector<16x128xf32>
      %631 = vector.broadcast %270 : vector<1x128xf32> to vector<16x128xf32>
      %632 = arith.addf %630, %631 : vector<16x128xf32>
      %cst_333 = arith.constant 0.949999988 : f32
      %633 = vector.broadcast %cst_333 : f32 to vector<16x128xf32>
      %634 = arith.mulf %633, %619 : vector<16x128xf32>
      %635 = arith.addf %634, %632 : vector<16x128xf32>
      %636 = arith.subf %635, %623 : vector<16x128xf32>
      %cst_334 = arith.constant 1.000000e+00 : f32
      %637 = vector.broadcast %cst_334 : f32 to vector<16x128xf32>
      %638 = arith.cmpf ogt, %636, %637 : vector<16x128xf32>
      %639 = arith.extui %638 : vector<16x128xi1> to vector<16x128xi32>
      %640 = arith.sitofp %639 : vector<16x128xi32> to vector<16x128xf32>
      %c0_335 = arith.constant 0 : index
      %c21 = arith.constant 21 : index
      %c0_336 = arith.constant 0 : index
      %c0_337 = arith.constant 0 : index
      %641 = vector.load %arg7[%c0_335, %c21, %c0_336, %c0_337] : memref<2x25x16x128xf32, #tpu.memory_space<vmem>>, vector<1x1x16x128xf32>
      %642 = vector.shape_cast %641 : vector<1x1x16x128xf32> to vector<16x128xf32>
      %643 = vector.shape_cast %640 : vector<16x128xf32> to vector<1x1x16x128xf32>
      tpu.vector_store %arg7[%c0_335, %c21, %c0_336, %c0_337], %643 {strides = array<i32>} : memref<2x25x16x128xf32, #tpu.memory_space<vmem>>, vector<1x1x16x128xf32>,
      %c1_338 = arith.constant 1 : index
      %c21_339 = arith.constant 21 : index
      %c0_340 = arith.constant 0 : index
      %c0_341 = arith.constant 0 : index
      %644 = vector.load %arg7[%c1_338, %c21_339, %c0_340, %c0_341] : memref<2x25x16x128xf32, #tpu.memory_space<vmem>>, vector<1x1x16x128xf32>
      %645 = vector.shape_cast %644 : vector<1x1x16x128xf32> to vector<16x128xf32>
      %646 = vector.shape_cast %636 : vector<16x128xf32> to vector<1x1x16x128xf32>
      tpu.vector_store %arg7[%c1_338, %c21_339, %c0_340, %c0_341], %646 {strides = array<i32>} : memref<2x25x16x128xf32, #tpu.memory_space<vmem>>, vector<1x1x16x128xf32>,
      %c352_342 = arith.constant 352 : index
      %c0_343 = arith.constant 0 : index
      %647 = vector.load %arg9[%c352_342, %c0_343] : memref<400x128xf32, #tpu.memory_space<vmem>>, vector<16x128xf32>
      %648 = vector.broadcast %270 : vector<1x128xf32> to vector<16x128xf32>
      %649 = arith.addf %647, %648 : vector<16x128xf32>
      %cst_344 = arith.constant 0.949999988 : f32
      %650 = vector.broadcast %cst_344 : f32 to vector<16x128xf32>
      %651 = arith.mulf %650, %636 : vector<16x128xf32>
      %652 = arith.addf %651, %649 : vector<16x128xf32>
      %653 = arith.subf %652, %640 : vector<16x128xf32>
      %cst_345 = arith.constant 1.000000e+00 : f32
      %654 = vector.broadcast %cst_345 : f32 to vector<16x128xf32>
      %655 = arith.cmpf ogt, %653, %654 : vector<16x128xf32>
      %656 = arith.extui %655 : vector<16x128xi1> to vector<16x128xi32>
      %657 = arith.sitofp %656 : vector<16x128xi32> to vector<16x128xf32>
      %c0_346 = arith.constant 0 : index
      %c22 = arith.constant 22 : index
      %c0_347 = arith.constant 0 : index
      %c0_348 = arith.constant 0 : index
      %658 = vector.load %arg7[%c0_346, %c22, %c0_347, %c0_348] : memref<2x25x16x128xf32, #tpu.memory_space<vmem>>, vector<1x1x16x128xf32>
      %659 = vector.shape_cast %658 : vector<1x1x16x128xf32> to vector<16x128xf32>
      %660 = vector.shape_cast %657 : vector<16x128xf32> to vector<1x1x16x128xf32>
      tpu.vector_store %arg7[%c0_346, %c22, %c0_347, %c0_348], %660 {strides = array<i32>} : memref<2x25x16x128xf32, #tpu.memory_space<vmem>>, vector<1x1x16x128xf32>,
      %c1_349 = arith.constant 1 : index
      %c22_350 = arith.constant 22 : index
      %c0_351 = arith.constant 0 : index
      %c0_352 = arith.constant 0 : index
      %661 = vector.load %arg7[%c1_349, %c22_350, %c0_351, %c0_352] : memref<2x25x16x128xf32, #tpu.memory_space<vmem>>, vector<1x1x16x128xf32>
      %662 = vector.shape_cast %661 : vector<1x1x16x128xf32> to vector<16x128xf32>
      %663 = vector.shape_cast %653 : vector<16x128xf32> to vector<1x1x16x128xf32>
      tpu.vector_store %arg7[%c1_349, %c22_350, %c0_351, %c0_352], %663 {strides = array<i32>} : memref<2x25x16x128xf32, #tpu.memory_space<vmem>>, vector<1x1x16x128xf32>,
      %c368_353 = arith.constant 368 : index
      %c0_354 = arith.constant 0 : index
      %664 = vector.load %arg9[%c368_353, %c0_354] : memref<400x128xf32, #tpu.memory_space<vmem>>, vector<16x128xf32>
      %665 = vector.broadcast %270 : vector<1x128xf32> to vector<16x128xf32>
      %666 = arith.addf %664, %665 : vector<16x128xf32>
      %cst_355 = arith.constant 0.949999988 : f32
      %667 = vector.broadcast %cst_355 : f32 to vector<16x128xf32>
      %668 = arith.mulf %667, %653 : vector<16x128xf32>
      %669 = arith.addf %668, %666 : vector<16x128xf32>
      %670 = arith.subf %669, %657 : vector<16x128xf32>
      %cst_356 = arith.constant 1.000000e+00 : f32
      %671 = vector.broadcast %cst_356 : f32 to vector<16x128xf32>
      %672 = arith.cmpf ogt, %670, %671 : vector<16x128xf32>
      %673 = arith.extui %672 : vector<16x128xi1> to vector<16x128xi32>
      %674 = arith.sitofp %673 : vector<16x128xi32> to vector<16x128xf32>
      %c0_357 = arith.constant 0 : index
      %c23 = arith.constant 23 : index
      %c0_358 = arith.constant 0 : index
      %c0_359 = arith.constant 0 : index
      %675 = vector.load %arg7[%c0_357, %c23, %c0_358, %c0_359] : memref<2x25x16x128xf32, #tpu.memory_space<vmem>>, vector<1x1x16x128xf32>
      %676 = vector.shape_cast %675 : vector<1x1x16x128xf32> to vector<16x128xf32>
      %677 = vector.shape_cast %674 : vector<16x128xf32> to vector<1x1x16x128xf32>
      tpu.vector_store %arg7[%c0_357, %c23, %c0_358, %c0_359], %677 {strides = array<i32>} : memref<2x25x16x128xf32, #tpu.memory_space<vmem>>, vector<1x1x16x128xf32>,
      %c1_360 = arith.constant 1 : index
      %c23_361 = arith.constant 23 : index
      %c0_362 = arith.constant 0 : index
      %c0_363 = arith.constant 0 : index
      %678 = vector.load %arg7[%c1_360, %c23_361, %c0_362, %c0_363] : memref<2x25x16x128xf32, #tpu.memory_space<vmem>>, vector<1x1x16x128xf32>
      %679 = vector.shape_cast %678 : vector<1x1x16x128xf32> to vector<16x128xf32>
      %680 = vector.shape_cast %670 : vector<16x128xf32> to vector<1x1x16x128xf32>
      tpu.vector_store %arg7[%c1_360, %c23_361, %c0_362, %c0_363], %680 {strides = array<i32>} : memref<2x25x16x128xf32, #tpu.memory_space<vmem>>, vector<1x1x16x128xf32>,
      %c384_364 = arith.constant 384 : index
      %c0_365 = arith.constant 0 : index
      %681 = vector.load %arg9[%c384_364, %c0_365] : memref<400x128xf32, #tpu.memory_space<vmem>>, vector<16x128xf32>
      %682 = vector.broadcast %270 : vector<1x128xf32> to vector<16x128xf32>
      %683 = arith.addf %681, %682 : vector<16x128xf32>
      %cst_366 = arith.constant 0.949999988 : f32
      %684 = vector.broadcast %cst_366 : f32 to vector<16x128xf32>
      %685 = arith.mulf %684, %670 : vector<16x128xf32>
      %686 = arith.addf %685, %683 : vector<16x128xf32>
      %687 = arith.subf %686, %674 : vector<16x128xf32>
      %cst_367 = arith.constant 1.000000e+00 : f32
      %688 = vector.broadcast %cst_367 : f32 to vector<16x128xf32>
      %689 = arith.cmpf ogt, %687, %688 : vector<16x128xf32>
      %690 = arith.extui %689 : vector<16x128xi1> to vector<16x128xi32>
      %691 = arith.sitofp %690 : vector<16x128xi32> to vector<16x128xf32>
      %c0_368 = arith.constant 0 : index
      %c24 = arith.constant 24 : index
      %c0_369 = arith.constant 0 : index
      %c0_370 = arith.constant 0 : index
      %692 = vector.load %arg7[%c0_368, %c24, %c0_369, %c0_370] : memref<2x25x16x128xf32, #tpu.memory_space<vmem>>, vector<1x1x16x128xf32>
      %693 = vector.shape_cast %692 : vector<1x1x16x128xf32> to vector<16x128xf32>
      %694 = vector.shape_cast %691 : vector<16x128xf32> to vector<1x1x16x128xf32>
      tpu.vector_store %arg7[%c0_368, %c24, %c0_369, %c0_370], %694 {strides = array<i32>} : memref<2x25x16x128xf32, #tpu.memory_space<vmem>>, vector<1x1x16x128xf32>,
      %c1_371 = arith.constant 1 : index
      %c24_372 = arith.constant 24 : index
      %c0_373 = arith.constant 0 : index
      %c0_374 = arith.constant 0 : index
      %695 = vector.load %arg7[%c1_371, %c24_372, %c0_373, %c0_374] : memref<2x25x16x128xf32, #tpu.memory_space<vmem>>, vector<1x1x16x128xf32>
      %696 = vector.shape_cast %695 : vector<1x1x16x128xf32> to vector<16x128xf32>
      %697 = vector.shape_cast %687 : vector<16x128xf32> to vector<1x1x16x128xf32>
      tpu.vector_store %arg7[%c1_371, %c24_372, %c0_373, %c0_374], %697 {strides = array<i32>} : memref<2x25x16x128xf32, #tpu.memory_space<vmem>>, vector<1x1x16x128xf32>,
    } else {
    }
    return
  }
  func.func @transform_0(%arg0: i32, %arg1: i32) -> (i32, i32) {
    %c0_i32 = arith.constant 0 : i32
    %c0_i32_0 = arith.constant 0 : i32
    return %arg0, %c0_i32 : i32, i32
  }
  func.func @transform_1(%arg0: i32, %arg1: i32) -> (i32, i32) {
    %c0_i32 = arith.constant 0 : i32
    %c0_i32_0 = arith.constant 0 : i32
    return %c0_i32, %arg1 : i32, i32
  }
  func.func @transform_2(%arg0: i32, %arg1: i32) -> (i32, i32) {
    %c0_i32 = arith.constant 0 : i32
    %c0_i32_0 = arith.constant 0 : i32
    return %c0_i32, %arg1 : i32, i32
  }
  func.func @transform_3(%arg0: i32, %arg1: i32) -> (i32, i32) {
    %c0_i32 = arith.constant 0 : i32
    %c0_i32_0 = arith.constant 0 : i32
    return %arg1, %c0_i32 : i32, i32
  }
  func.func @transform_4(%arg0: i32, %arg1: i32) -> (i32, i32) {
    %c0_i32 = arith.constant 0 : i32
    %c0_i32_0 = arith.constant 0 : i32
    %c0_i32_1 = arith.constant 0 : i32
    return %c0_i32, %c0_i32_0 : i32, i32
  }
  func.func @transform_5(%arg0: i32, %arg1: i32) -> (i32, i32, i32, i32) {
    %c0_i32 = arith.constant 0 : i32
    %c0_i32_0 = arith.constant 0 : i32
    %c0_i32_1 = arith.constant 0 : i32
    %c0_i32_2 = arith.constant 0 : i32
    return %c0_i32, %c0_i32_0, %arg0, %c0_i32_1 : i32, i32, i32, i32
  }
}

</mosaic_0001>

<llo_original>
// kernel: snn_forward.1
$region0: #{snn_forward.1}
  #allocation0 [shape = 'u32[]', space=smem, size = 0x4, offset = 0x4, fixed_abs, tag = 'smem constant byte address 0x4 - core index']
  #allocation1 [shape = 'u32[72,128]{1,0:T(1,128)}', space=vmem, size = 0x9000, scoped, tag = 'internal scratch']
  #allocation2 [shape = 'bf16[400,256]{1,0:T(8,128)(2,1)}', space=vmem, size = 0x32000, scoped, tag = 'scratch operand']
  #allocation3 [shape = 'f32[400,128]{1,0:T(8,128)}', space=vmem, size = 0x32000, scoped, tag = 'scratch operand']
  %s0 = inlined_call_operand.vmem [shape: bf16[16,1280], index: 0, kind: input, shape index: {}]
  %s1 = inlined_call_operand.hbm [shape: bf16[1280,1024], index: 1, kind: input, shape index: {}]
  %s2 = inlined_call_operand.hbm [shape: f32[1,1024], index: 2, kind: input, shape index: {}]
  %s3 = inlined_call_operand.hbm [shape: bf16[1024,128], index: 3, kind: input, shape index: {}]
  %s4 = inlined_call_operand.hbm [shape: f32[1,128], index: 4, kind: input, shape index: {}]
  %s5 = inlined_call_operand.vmem [shape: f32[2,25,16,128], index: 5, kind: output, shape index: {}]
  %s6 = sld [smem:[#allocation0]]
  $region77: #{snn_forward.1} parent=0
    _
  %s8 = ssub.s32 1, %s6
  %s9 = scalar_select 0, %s8, %s6
  $region1: #{snn_forward.1} parent=0
    #allocation4 [shape = 'u8[1310720]{0}', space=vmem, size = 0x140000, scoped, tag = 'input window, operand 1']
    #allocation5 [shape = 's32[2]{0}', space=sflag, size = 0x8, scoped, tag = 'scoped memory for snn_forward.1']
    #allocation6 [shape = 'u8[2048]{0}', space=vmem, size = 0x800, scoped, tag = 'input window, operand 2']
    #allocation7 [shape = 's32[2]{0}', space=sflag, size = 0x8, scoped, tag = 'scoped memory for snn_forward.1']
    #allocation8 [shape = 'u8[131072]{0}', space=vmem, size = 0x20000, scoped, tag = 'input window, operand 3']
    #allocation9 [shape = 'u8[512]{0}', space=vmem, size = 0x400, scoped, tag = 'input window, operand 4, single buffered']
    #allocation10 [shape = 's32[1]{0}', space=sflag, size = 0x4, scoped, tag = 'scoped memory for snn_forward.1']
    %10 = vsyncpa [#allocation5], 0
    %s11 = scalar_lea.sflag [#allocation5], 1
    %12 = vsyncpa %s11, 0
    %13 = vsyncpa [#allocation7], 0
    %s14 = scalar_lea.sflag [#allocation7], 1
    %15 = vsyncpa %s14, 0
    %16 = vsyncpa [#allocation10], 0
    loop: start=0, step=1, limit=6
    $region2: #{snn_forward.1} parent=1 // loop_pre_header
      _
    $region3: #{snn_forward.1} parent=1 // loop_header
      %s18 = sphi 0, %s22
      %p19 = scmp.ge.s32.totalorder %s18, 6
      %s25 = sphi 0, %s37
      %s26 = sphi 0, %s33
      %s27 = sphi 0, %s25
      %s28 = sphi 0, %s26
      %s29 = sphi 0, %s27
      %s30 = sphi 0, %s28
      %s40 = sphi 0, %s42
      %s43 = sphi 0, %s40
      %s44 = sphi 0, %s43
      %s60 = sphi 0, %s44
      %s66 = sphi 0, %s68
      %s69 = sphi 0, %s66
      %s70 = sphi 0, %s69
      %s86 = sphi 0, %s70
      %s92 = sphi 0, %s94
      %s95 = sphi 0, %s92
      %s96 = sphi 0, %s95
      %s112 = sphi 0, %s96
      %s118 = sphi 0, %s120
      %s121 = sphi 0, %s118
      %s122 = sphi 0, %s121
      %s138 = sphi 0, %s122
      %s142 = sphi 0, %s142
      %s144 = sphi 0, %s142
      %s145 = sphi 0, %s144
      %s159 = sphi 0, %s145
      %s165 = sphi 0, %s167
      %s168 = sphi 0, %s165
      %s169 = sphi 0, %s168
      %s185 = sphi 0, %s169
    $region4: #{snn_forward.1} parent=1 // loop_header_branch
      %21 = sbr.rel (%p19) target = $region8
    $region5: #{snn_forward.1} parent=1 // loop_body
      %s23 = ssub.s32 %s18, 1
      %s24 = ssub.s32 %s18, 2
      %s31 = sadd.s32 1, %s26
      %p32 = scmp.ge.s32.totalorder %s31, 4
      %s33 = scalar_select %p32, 0, %s31
      %s34 = sadd.s32 1, %s25
      %s35 = scalar_select %p32, %s34, %s25
      %p36 = scmp.ge.s32.totalorder %s35, 1
      %s37 = scalar_select %p36, 0, %s35
      %s38 = ssub.s32 %s25, %s37
      %p39 = scmp.eq.s32.totalorder %s38, 0
      %s41 = sadd.s32 %s40, 1
      %s42 = scalar_select %p39, %s40, %s41
      %p45 = pneg %p39
      %p46 = scmp.eq.s32.totalorder %s18, 3
      %p47 = por %p45, %p46
      %p48 = scmp.ne.s32.totalorder %s40, %s43
      %p49 = scmp.eq.s32.totalorder %s18, 0
      %p50 = por %p48, %p49
      %p51 = scmp.ne.s32.totalorder %s40, %s43
      %p52 = scmp.eq.s32.totalorder %s23, 3
      %p53 = por %p51, %p52
      %p54 = scmp.ne.s32.totalorder %s43, %s44
      %p55 = scmp.eq.s32.totalorder %s23, 0
      %p56 = por %p54, %p55
      %p57 = scmp.ne.s32.totalorder %s43, %s44
      %p58 = scmp.eq.s32.totalorder %s24, 3
      %p59 = por %p57, %p58
      %p61 = scmp.ne.s32.totalorder %s44, %s60
      %p62 = scmp.eq.s32.totalorder %s24, 0
      %p63 = por %p61, %p62
      %s64 = ssub.s32 %s26, %s33
      %p65 = scmp.eq.s32.totalorder %s64, 0
      %s67 = sadd.s32 %s66, 1
      %s68 = scalar_select %p65, %s66, %s67
      %p71 = pneg %p65
      %p72 = scmp.eq.s32.totalorder %s18, 3
      %p73 = por %p71, %p72
      %p74 = scmp.ne.s32.totalorder %s66, %s69
      %p75 = scmp.eq.s32.totalorder %s18, 0
      %p76 = por %p74, %p75
      %p77 = scmp.ne.s32.totalorder %s66, %s69
      %p78 = scmp.eq.s32.totalorder %s23, 3
      %p79 = por %p77, %p78
      %p80 = scmp.ne.s32.totalorder %s69, %s70
      %p81 = scmp.eq.s32.totalorder %s23, 0
      %p82 = por %p80, %p81
      %p83 = scmp.ne.s32.totalorder %s69, %s70
      %p84 = scmp.eq.s32.totalorder %s24, 3
      %p85 = por %p83, %p84
      %p87 = scmp.ne.s32.totalorder %s70, %s86
      %p88 = scmp.eq.s32.totalorder %s24, 0
      %p89 = por %p87, %p88
      %s90 = ssub.s32 %s26, %s33
      %p91 = scmp.eq.s32.totalorder %s90, 0
      %s93 = sadd.s32 %s92, 1
      %s94 = scalar_select %p91, %s92, %s93
      %p97 = pneg %p91
      %p98 = scmp.eq.s32.totalorder %s18, 3
      %p99 = por %p97, %p98
      %p100 = scmp.ne.s32.totalorder %s92, %s95
      %p101 = scmp.eq.s32.totalorder %s18, 0
      %p102 = por %p100, %p101
      %p103 = scmp.ne.s32.totalorder %s92, %s95
      %p104 = scmp.eq.s32.totalorder %s23, 3
      %p105 = por %p103, %p104
      %p106 = scmp.ne.s32.totalorder %s95, %s96
      %p107 = scmp.eq.s32.totalorder %s23, 0
      %p108 = por %p106, %p107
      %p109 = scmp.ne.s32.totalorder %s95, %s96
      %p110 = scmp.eq.s32.totalorder %s24, 3
      %p111 = por %p109, %p110
      %p113 = scmp.ne.s32.totalorder %s96, %s112
      %p114 = scmp.eq.s32.totalorder %s24, 0
      %p115 = por %p113, %p114
      %s116 = ssub.s32 %s26, %s33
      %p117 = scmp.eq.s32.totalorder %s116, 0
      %s119 = sadd.s32 %s118, 1
      %s120 = scalar_select %p117, %s118, %s119
      %p123 = pneg %p117
      %p124 = scmp.eq.s32.totalorder %s18, 3
      %p125 = por %p123, %p124
      %p126 = scmp.ne.s32.totalorder %s118, %s121
      %p127 = scmp.eq.s32.totalorder %s18, 0
      %p128 = por %p126, %p127
      %p129 = scmp.ne.s32.totalorder %s118, %s121
      %p130 = scmp.eq.s32.totalorder %s23, 3
      %p131 = por %p129, %p130
      %p132 = scmp.ne.s32.totalorder %s121, %s122
      %p133 = scmp.eq.s32.totalorder %s23, 0
      %p134 = por %p132, %p133
      %p135 = scmp.ne.s32.totalorder %s121, %s122
      %p136 = scmp.eq.s32.totalorder %s24, 3
      %p137 = por %p135, %p136
      %p139 = scmp.ne.s32.totalorder %s122, %s138
      %p140 = scmp.eq.s32.totalorder %s24, 0
      %p141 = por %p139, %p140
      %s143 = sadd.s32 %s142, 1
      %p146 = scmp.eq.s32.totalorder %s18, 3
      %p147 = scmp.ne.s32.totalorder %s142, %s144
      %p148 = scmp.eq.s32.totalorder %s18, 0
      %p149 = por %p147, %p148
      %p150 = scmp.ne.s32.totalorder %s142, %s144
      %p151 = scmp.eq.s32.totalorder %s23, 3
      %p152 = por %p150, %p151
      %p153 = scmp.ne.s32.totalorder %s144, %s145
      %p154 = scmp.eq.s32.totalorder %s23, 0
      %p155 = por %p153, %p154
      %p156 = scmp.ne.s32.totalorder %s144, %s145
      %p157 = scmp.eq.s32.totalorder %s24, 3
      %p158 = por %p156, %p157
      %p160 = scmp.ne.s32.totalorder %s145, %s159
      %p161 = scmp.eq.s32.totalorder %s24, 0
      %p162 = por %p160, %p161
      %s163 = ssub.s32 %s25, %s37
      %p164 = scmp.eq.s32.totalorder %s163, 0
      %s166 = sadd.s32 %s165, 1
      %s167 = scalar_select %p164, %s165, %s166
      %p170 = pneg %p164
      %p171 = scmp.eq.s32.totalorder %s18, 3
      %p172 = por %p170, %p171
      %p173 = scmp.ne.s32.totalorder %s165, %s168
      %p174 = scmp.eq.s32.totalorder %s18, 0
      %p175 = por %p173, %p174
      %p176 = scmp.ne.s32.totalorder %s165, %s168
      %p177 = scmp.eq.s32.totalorder %s23, 3
      %p178 = por %p176, %p177
      %p179 = scmp.ne.s32.totalorder %s168, %s169
      %p180 = scmp.eq.s32.totalorder %s23, 0
      %p181 = por %p179, %p180
      %p182 = scmp.ne.s32.totalorder %s168, %s169
      %p183 = scmp.eq.s32.totalorder %s24, 3
      %p184 = por %p182, %p183
      %p186 = scmp.ne.s32.totalorder %s169, %s185
      %p187 = scmp.eq.s32.totalorder %s24, 0
      %p188 = por %p186, %p187
      %p189 = scmp.le.s32.totalorder 1, %s18
      %p190 = scmp.lt.s32.totalorder %s18, 5
      %p191 = pnand %p189, %p190
      %p192 = pneg %p191
      // Predicated region
      $region9: #{snn_forward.1} parent=5 // pred_check
        _
      $region10: #{snn_forward.1} parent=5 // pred_check_branch
        %194 = sbr.rel (%p191) target = $region12
      $region11: #{snn_forward.1} parent=5 // pred_region
        %s195 = ssub.s32 %s18, 1
        // Predicated region
        $region13: #{snn_forward.1} parent=11 // pred_check
          %p196 = pneg %p56
        $region14: #{snn_forward.1} parent=11 // pred_check_branch
          %198 = sbr.rel (%p196) target = $region16
        $region15: #{snn_forward.1} parent=11 // pred_region
          %s199 = smul.u32 2, %s27
          %p200 = scmp.lt.s32.totalorder %s199, 1
          %s201 = scalar_select %p200, %s199, 1
          %s202 = smul.addr %s201, 10
          %s203 = smul.addr %s202, 4
          %s204 = scalar_lea.vmem %s0, %s203
          %s205 = smul.u32 2, %s27
        $region16: #{snn_forward.1} parent=11 // pred_fallthru
          _
        // Predicated region
        $region17: #{snn_forward.1} parent=11 // pred_check
          %p206 = pneg %p155
        $region18: #{snn_forward.1} parent=11 // pred_check_branch
          %208 = sbr.rel (%p206) target = $region20
        $region19: #{snn_forward.1} parent=11 // pred_region
          %210 = vsyncadd [#allocation10], 0
          %s212 = sshll.u32 %s4, 4
          %s213 = int_to_ptr.hbm [resolvable:$true] %s212
          %s214 = sshll.u32 [#allocation9], 4
          %s215 = int_to_ptr.vmem [resolvable:$true] %s214
          %217 = dma.hbm_to_vmem [thread:$0]  %s213, 16, %s215, [#allocation10]
        $region20: #{snn_forward.1} parent=11 // pred_fallthru
          _
      $region12: #{snn_forward.1} parent=5 // pred_fallthru
        _
      %p218 = scmp.lt.s32.totalorder %s18, 4
      // Predicated region
      $region21: #{snn_forward.1} parent=5 // pred_check
        %p219 = pneg %p218
      $region22: #{snn_forward.1} parent=5 // pred_check_branch
        %221 = sbr.rel (%p219) target = $region24
      $region23: #{snn_forward.1} parent=5 // pred_region
        // Predicated region
        $region25: #{snn_forward.1} parent=23 // pred_check
          %p222 = pneg %p76
        $region26: #{snn_forward.1} parent=23 // pred_check_branch
          %224 = sbr.rel (%p222) target = $region28
        $region27: #{snn_forward.1} parent=23 // pred_region
          %s225 = sand.u32 %s66, 1
          %s226 = scalar_lea.sflag [#allocation5], %s225
          %s227 = sand.u32 %s66, 1
          %s228 = smul.addr %s227, 1280
          %s229 = scalar_lea.vmem [#allocation4], %s228
          %s230 = smul.u32 2, %s26
          %232 = vsyncadd %s226, 0
          %s233 = smul.addr %s230, 4
          %s234 = scalar_lea.hbm %s1, %s233
          %s235 = sshll.u32 %s234, 4
          %s236 = int_to_ptr.hbm [resolvable:$true] %s235
          %s237 = sshll.u32 %s229, 4
          %s238 = int_to_ptr.vmem [resolvable:$true] %s237
          %243 = dma.hbm_to_vmem [thread:$0]  %s236, 20480, %s238, %s226, 512, 128, 8
        $region28: #{snn_forward.1} parent=23 // pred_fallthru
          _
        // Predicated region
        $region29: #{snn_forward.1} parent=23 // pred_check
          %p244 = pneg %p102
        $region30: #{snn_forward.1} parent=23 // pred_check_branch
          %246 = sbr.rel (%p244) target = $region32
        $region31: #{snn_forward.1} parent=23 // pred_region
          %s247 = sand.u32 %s18, 1
          %s248 = scalar_lea.sflag [#allocation7], %s247
          %s249 = sand.u32 %s92, 1
          %s250 = smul.addr %s249, 2
          %s251 = scalar_lea.vmem [#allocation6], %s250
          %s252 = smul.u32 2, %s26
          %254 = vsyncadd %s248, 0
          %s255 = scalar_lea.hbm %s2, %s252
          %s257 = sshll.u32 %s255, 4
          %s258 = int_to_ptr.hbm [resolvable:$true] %s257
          %s259 = sshll.u32 %s251, 4
          %s260 = int_to_ptr.vmem [resolvable:$true] %s259
          %262 = dma.hbm_to_vmem [thread:$0]  %s258, 32, %s260, %s248
        $region32: #{snn_forward.1} parent=23 // pred_fallthru
          _
        // Predicated region
        $region33: #{snn_forward.1} parent=23 // pred_check
          %p263 = pneg %p128
        $region34: #{snn_forward.1} parent=23 // pred_check_branch
          %265 = sbr.rel (%p263) target = $region36
        $region35: #{snn_forward.1} parent=23 // pred_region
          %s266 = sand.u32 %s18, 1
          %s267 = scalar_lea.sflag [#allocation7], %s266
          %s268 = sand.u32 %s118, 1
          %s269 = smul.addr %s268, 128
          %s270 = scalar_lea.vmem [#allocation8], %s269
          %s271 = smul.u32 32, %s26
          %273 = vsyncadd %s267, 0
          %s274 = smul.addr %s271, 4
          %s275 = scalar_lea.hbm %s3, %s274
          %s276 = sshll.u32 %s275, 4
          %s277 = int_to_ptr.hbm [resolvable:$true] %s276
          %s278 = sshll.u32 %s270, 4
          %s279 = int_to_ptr.vmem [resolvable:$true] %s278
          %284 = dma.hbm_to_vmem [thread:$0]  %s277, 2048, %s279, %s267, 64, 64, 4
        $region36: #{snn_forward.1} parent=23 // pred_fallthru
          _
      $region24: #{snn_forward.1} parent=5 // pred_fallthru
        _
      %p285 = scmp.le.s32.totalorder 1, %s18
      %p286 = scmp.lt.s32.totalorder %s18, 5
      %p287 = pnand %p285, %p286
      %p288 = pneg %p287
      // Predicated region
      $region37: #{snn_forward.1} parent=5 // pred_check
        _
      $region38: #{snn_forward.1} parent=5 // pred_check_branch
        %290 = sbr.rel (%p287) target = $region40
      $region39: #{snn_forward.1} parent=5 // pred_region
        %s291 = ssub.s32 %s18, 1
        %s292 = sand.u32 %s69, 1
        %s293 = scalar_lea.sflag [#allocation5], %s292
        %s294 = sand.u32 %s69, 1
        %s295 = smul.addr %s294, 1280
        %s296 = scalar_lea.vmem [#allocation4], %s295
        // Predicated region
        $region41: #{snn_forward.1} parent=39 // pred_check
          %p297 = pneg %p82
        $region42: #{snn_forward.1} parent=39 // pred_check_branch
          %299 = sbr.rel (%p297) target = $region44
        $region43: #{snn_forward.1} parent=39 // pred_region
          %301 = dma.done %s293, 20480
        $region44: #{snn_forward.1} parent=39 // pred_fallthru
          _
        %s302 = sand.u32 %s23, 1
        %s303 = scalar_lea.sflag [#allocation7], %s302
        %s304 = sand.u32 %s95, 1
        %s305 = smul.addr %s304, 2
        %s306 = scalar_lea.vmem [#allocation6], %s305
        // Predicated region
        $region45: #{snn_forward.1} parent=39 // pred_check
          %p307 = pneg %p108
        $region46: #{snn_forward.1} parent=39 // pred_check_branch
          %309 = sbr.rel (%p307) target = $region48
        $region47: #{snn_forward.1} parent=39 // pred_region
          %311 = dma.done %s303, 32
        $region48: #{snn_forward.1} parent=39 // pred_fallthru
          _
        %s312 = sand.u32 %s23, 1
        %s313 = scalar_lea.sflag [#allocation7], %s312
        %s314 = sand.u32 %s121, 1
        %s315 = smul.addr %s314, 128
        %s316 = scalar_lea.vmem [#allocation8], %s315
        // Predicated region
        $region49: #{snn_forward.1} parent=39 // pred_check
          %p317 = pneg %p134
        $region50: #{snn_forward.1} parent=39 // pred_check_branch
          %319 = sbr.rel (%p317) target = $region52
        $region51: #{snn_forward.1} parent=39 // pred_region
          %321 = dma.done %s313, 2048
        $region52: #{snn_forward.1} parent=39 // pred_fallthru
          _
        // Predicated region
        $region53: #{snn_forward.1} parent=39 // pred_check
          %p322 = pneg %p155
        $region54: #{snn_forward.1} parent=39 // pred_check_branch
          %324 = sbr.rel (%p322) target = $region56
        $region55: #{snn_forward.1} parent=39 // pred_region
          %326 = dma.done [#allocation10], 16
        $region56: #{snn_forward.1} parent=39 // pred_fallthru
          _
        %s327 = smul.u32 2, %s27
        %p328 = scmp.lt.s32.totalorder %s327, 1
        %s329 = scalar_select %p328, %s327, 1
        %s330 = smul.addr %s329, 10
        %s331 = smul.addr %s330, 4
        %s332 = scalar_lea.vmem %s0, %s331
        %p333 = pneg %p56
        %p334 = pneg %p53
        %s335 = sand.u32 %s69, 1
        %s336 = scalar_lea.sflag [#allocation5], %s335
        %s337 = sand.u32 %s69, 1
        %s338 = smul.addr %s337, 1280
        %s339 = scalar_lea.vmem [#allocation4], %s338
        %p340 = pneg %p82
        %p341 = pneg %p79
        %s342 = sand.u32 %s23, 1
        %s343 = scalar_lea.sflag [#allocation7], %s342
        %s344 = sand.u32 %s95, 1
        %s345 = smul.addr %s344, 2
        %s346 = scalar_lea.vmem [#allocation6], %s345
        %p347 = pneg %p108
        %p348 = pneg %p105
        %s349 = sand.u32 %s23, 1
        %s350 = scalar_lea.sflag [#allocation7], %s349
        %s351 = sand.u32 %s121, 1
        %s352 = smul.addr %s351, 128
        %s353 = scalar_lea.vmem [#allocation8], %s352
        %p354 = pneg %p134
        %p355 = pneg %p131
        %p356 = pneg %p155
        %p357 = pneg %p152
        %p358 = pneg %p181
        %p359 = pneg %p178
        %s360 = smul.u32 2, %s27
        %p361 = scmp.lt.s32.totalorder %s360, 1
        %s362 = scalar_select %p361, %s360, 1
        %s363 = smul.addr %s362, 8
        %s364 = scalar_lea.vmem %s5, %s363
        %s365 = smul.u32 2, %s27
        %p366 = scmp.lt.s32.totalorder %s365, 1
        %s367 = scalar_select %p366, %s365, 1
        %s368 = smul.addr %s367, 10
        %s369 = smul.addr %s368, 4
        %s370 = scalar_lea.vmem %s0, %s369
        %s371 = smul.u32 2, %s27
        %s372 = smul.u32 2, %s28
        %s373 = smul.u32 2, %s28
        %s374 = smul.u32 32, %s28
        %s375 = smul.u32 2, %s27
        %p376 = scmp.lt.s32.totalorder %s375, 1
        %s377 = scalar_select %p376, %s375, 1
        %s378 = smul.addr %s377, 8
        %s379 = scalar_lea.vmem %s5, %s378
        %s380 = smul.u32 2, %s27
        %p381 = scmp.eq.s32.totalorder %s28, 0
        // Predicated region
        $region57: #{snn_forward.1} parent=39 // pred_check
          %p382 = pneg %p381
        $region58: #{snn_forward.1} parent=39 // pred_check_branch
          %384 = sbr.rel (%p382) target = $region60
        $region59: #{snn_forward.1} parent=39 // pred_region
          %385 = vst [vmem:[#allocation3] sm:$0xff] 0.0
          %386 = vst [vmem:[#allocation3 + $0x8] sm:$0xff] 0.0
          %387 = vst [vmem:[#allocation3 + $0x10] sm:$0xff] 0.0
          %388 = vst [vmem:[#allocation3 + $0x18] sm:$0xff] 0.0
          %389 = vst [vmem:[#allocation3 + $0x20] sm:$0xff] 0.0
          %390 = vst [vmem:[#allocation3 + $0x28] sm:$0xff] 0.0
          %391 = vst [vmem:[#allocation3 + $0x30] sm:$0xff] 0.0
          %392 = vst [vmem:[#allocation3 + $0x38] sm:$0xff] 0.0
          %393 = vst [vmem:[#allocation3 + $0x40] sm:$0xff] 0.0
          %394 = vst [vmem:[#allocation3 + $0x48] sm:$0xff] 0.0
          %395 = vst [vmem:[#allocation3 + $0x50] sm:$0xff] 0.0
          %396 = vst [vmem:[#allocation3 + $0x58] sm:$0xff] 0.0
          %397 = vst [vmem:[#allocation3 + $0x60] sm:$0xff] 0.0
          %398 = vst [vmem:[#allocation3 + $0x68] sm:$0xff] 0.0
          %399 = vst [vmem:[#allocation3 + $0x70] sm:$0xff] 0.0
          %400 = vst [vmem:[#allocation3 + $0x78] sm:$0xff] 0.0
          %401 = vst [vmem:[#allocation3 + $0x80] sm:$0xff] 0.0
          %402 = vst [vmem:[#allocation3 + $0x88] sm:$0xff] 0.0
          %403 = vst [vmem:[#allocation3 + $0x90] sm:$0xff] 0.0
          %404 = vst [vmem:[#allocation3 + $0x98] sm:$0xff] 0.0
          %405 = vst [vmem:[#allocation3 + $0xa0] sm:$0xff] 0.0
          %406 = vst [vmem:[#allocation3 + $0xa8] sm:$0xff] 0.0
          %407 = vst [vmem:[#allocation3 + $0xb0] sm:$0xff] 0.0
          %408 = vst [vmem:[#allocation3 + $0xb8] sm:$0xff] 0.0
          %409 = vst [vmem:[#allocation3 + $0xc0] sm:$0xff] 0.0
          %410 = vst [vmem:[#allocation3 + $0xc8] sm:$0xff] 0.0
          %411 = vst [vmem:[#allocation3 + $0xd0] sm:$0xff] 0.0
          %412 = vst [vmem:[#allocation3 + $0xd8] sm:$0xff] 0.0
          %413 = vst [vmem:[#allocation3 + $0xe0] sm:$0xff] 0.0
          %414 = vst [vmem:[#allocation3 + $0xe8] sm:$0xff] 0.0
          %415 = vst [vmem:[#allocation3 + $0xf0] sm:$0xff] 0.0
          %416 = vst [vmem:[#allocation3 + $0xf8] sm:$0xff] 0.0
          %417 = vst [vmem:[#allocation3 + $0x100] sm:$0xff] 0.0
          %418 = vst [vmem:[#allocation3 + $0x108] sm:$0xff] 0.0
          %419 = vst [vmem:[#allocation3 + $0x110] sm:$0xff] 0.0
          %420 = vst [vmem:[#allocation3 + $0x118] sm:$0xff] 0.0
          %421 = vst [vmem:[#allocation3 + $0x120] sm:$0xff] 0.0
          %422 = vst [vmem:[#allocation3 + $0x128] sm:$0xff] 0.0
          %423 = vst [vmem:[#allocation3 + $0x130] sm:$0xff] 0.0
          %424 = vst [vmem:[#allocation3 + $0x138] sm:$0xff] 0.0
          %425 = vst [vmem:[#allocation3 + $0x140] sm:$0xff] 0.0
          %426 = vst [vmem:[#allocation3 + $0x148] sm:$0xff] 0.0
          %427 = vst [vmem:[#allocation3 + $0x150] sm:$0xff] 0.0
          %428 = vst [vmem:[#allocation3 + $0x158] sm:$0xff] 0.0
          %429 = vst [vmem:[#allocation3 + $0x160] sm:$0xff] 0.0
          %430 = vst [vmem:[#allocation3 + $0x168] sm:$0xff] 0.0
          %431 = vst [vmem:[#allocation3 + $0x170] sm:$0xff] 0.0
          %432 = vst [vmem:[#allocation3 + $0x178] sm:$0xff] 0.0
          %433 = vst [vmem:[#allocation3 + $0x180] sm:$0xff] 0.0
          %434 = vst [vmem:[#allocation3 + $0x188] sm:$0xff] 0.0
        $region60: #{snn_forward.1} parent=39 // pred_fallthru
          _
        %v435 = vld [vmem:[%s370] sm:$0xff]
        %v436 = vld [vmem:[%s370 + $0x8] sm:$0xff]
        %v437 = vld [vmem:[%s370 + $0x10] sm:$0xff]
        %v438 = vld [vmem:[%s370 + $0x18] sm:$0xff]
        %v439 = vld [vmem:[%s370 + $0x20] sm:$0xff]
        %v440 = vld [vmem:[%s370 + $0x28] sm:$0xff]
        %v441 = vld [vmem:[%s370 + $0x30] sm:$0xff]
        %v442 = vld [vmem:[%s370 + $0x38] sm:$0xff]
        %v443 = vld [vmem:[%s370 + $0x40] sm:$0xff]
        %v444 = vld [vmem:[%s370 + $0x48] sm:$0xff]
        %v445 = vld [vmem:[%s296] sm:$0xff]
        %v446 = vld [vmem:[%s296 + $0x8] sm:$0xff]
        %v447 = vld [vmem:[%s296 + $0x10] sm:$0xff]
        %v448 = vld [vmem:[%s296 + $0x18] sm:$0xff]
        %v449 = vld [vmem:[%s296 + $0x20] sm:$0xff]
        %v450 = vld [vmem:[%s296 + $0x28] sm:$0xff]
        %v451 = vld [vmem:[%s296 + $0x30] sm:$0xff]
        %v452 = vld [vmem:[%s296 + $0x38] sm:$0xff]
        %v453 = vld [vmem:[%s296 + $0x40] sm:$0xff]
        %v454 = vld [vmem:[%s296 + $0x48] sm:$0xff]
        %v455 = vld [vmem:[%s296 + $0x50] sm:$0xff]
        %v456 = vld [vmem:[%s296 + $0x58] sm:$0xff]
        %v457 = vld [vmem:[%s296 + $0x60] sm:$0xff]
        %v458 = vld [vmem:[%s296 + $0x68] sm:$0xff]
        %v459 = vld [vmem:[%s296 + $0x70] sm:$0xff]
        %v460 = vld [vmem:[%s296 + $0x78] sm:$0xff]
        %v461 = vld [vmem:[%s296 + $0x80] sm:$0xff]
        %v462 = vld [vmem:[%s296 + $0x88] sm:$0xff]
        %v463 = vld [vmem:[%s296 + $0x90] sm:$0xff]
        %v464 = vld [vmem:[%s296 + $0x98] sm:$0xff]
        %v465 = vld [vmem:[%s296 + $0xa0] sm:$0xff]
        %v466 = vld [vmem:[%s296 + $0xa8] sm:$0xff]
        %v467 = vld [vmem:[%s296 + $0xb0] sm:$0xff]
        %v468 = vld [vmem:[%s296 + $0xb8] sm:$0xff]
        %v469 = vld [vmem:[%s296 + $0xc0] sm:$0xff]
        %v470 = vld [vmem:[%s296 + $0xc8] sm:$0xff]
        %v471 = vld [vmem:[%s296 + $0xd0] sm:$0xff]
        %v472 = vld [vmem:[%s296 + $0xd8] sm:$0xff]
        %v473 = vld [vmem:[%s296 + $0xe0] sm:$0xff]
        %v474 = vld [vmem:[%s296 + $0xe8] sm:$0xff]
        %v475 = vld [vmem:[%s296 + $0xf0] sm:$0xff]
        %v476 = vld [vmem:[%s296 + $0xf8] sm:$0xff]
        %v477 = vld [vmem:[%s296 + $0x100] sm:$0xff]
        %v478 = vld [vmem:[%s296 + $0x108] sm:$0xff]
        %v479 = vld [vmem:[%s296 + $0x110] sm:$0xff]
        %v480 = vld [vmem:[%s296 + $0x118] sm:$0xff]
        %v481 = vld [vmem:[%s296 + $0x120] sm:$0xff]
        %v482 = vld [vmem:[%s296 + $0x128] sm:$0xff]
        %v483 = vld [vmem:[%s296 + $0x130] sm:$0xff]
        %v484 = vld [vmem:[%s296 + $0x138] sm:$0xff]
        %v485 = vld [vmem:[%s296 + $0x140] sm:$0xff]
        %v486 = vld [vmem:[%s296 + $0x148] sm:$0xff]
        %v487 = vld [vmem:[%s296 + $0x150] sm:$0xff]
        %v488 = vld [vmem:[%s296 + $0x158] sm:$0xff]
        %v489 = vld [vmem:[%s296 + $0x160] sm:$0xff]
        %v490 = vld [vmem:[%s296 + $0x168] sm:$0xff]
        %v491 = vld [vmem:[%s296 + $0x170] sm:$0xff]
        %v492 = vld [vmem:[%s296 + $0x178] sm:$0xff]
        %v493 = vld [vmem:[%s296 + $0x180] sm:$0xff]
        %v494 = vld [vmem:[%s296 + $0x188] sm:$0xff]
        %v495 = vld [vmem:[%s296 + $0x190] sm:$0xff]
        %v496 = vld [vmem:[%s296 + $0x198] sm:$0xff]
        %v497 = vld [vmem:[%s296 + $0x1a0] sm:$0xff]
        %v498 = vld [vmem:[%s296 + $0x1a8] sm:$0xff]
        %v499 = vld [vmem:[%s296 + $0x1b0] sm:$0xff]
        %v500 = vld [vmem:[%s296 + $0x1b8] sm:$0xff]
        %v501 = vld [vmem:[%s296 + $0x1c0] sm:$0xff]
        %v502 = vld [vmem:[%s296 + $0x1c8] sm:$0xff]
        %v503 = vld [vmem:[%s296 + $0x1d0] sm:$0xff]
        %v504 = vld [vmem:[%s296 + $0x1d8] sm:$0xff]
        %v505 = vld [vmem:[%s296 + $0x1e0] sm:$0xff]
        %v506 = vld [vmem:[%s296 + $0x1e8] sm:$0xff]
        %v507 = vld [vmem:[%s296 + $0x1f0] sm:$0xff]
        %v508 = vld [vmem:[%s296 + $0x1f8] sm:$0xff]
        %v509 = vld [vmem:[%s296 + $0x200] sm:$0xff]
        %v510 = vld [vmem:[%s296 + $0x208] sm:$0xff]
        %v511 = vld [vmem:[%s296 + $0x210] sm:$0xff]
        %v512 = vld [vmem:[%s296 + $0x218] sm:$0xff]
        %v513 = vld [vmem:[%s296 + $0x220] sm:$0xff]
        %v514 = vld [vmem:[%s296 + $0x228] sm:$0xff]
        %v515 = vld [vmem:[%s296 + $0x230] sm:$0xff]
        %v516 = vld [vmem:[%s296 + $0x238] sm:$0xff]
        %v517 = vld [vmem:[%s296 + $0x240] sm:$0xff]
        %v518 = vld [vmem:[%s296 + $0x248] sm:$0xff]
        %v519 = vld [vmem:[%s296 + $0x250] sm:$0xff]
        %v520 = vld [vmem:[%s296 + $0x258] sm:$0xff]
        %v521 = vld [vmem:[%s296 + $0x260] sm:$0xff]
        %v522 = vld [vmem:[%s296 + $0x268] sm:$0xff]
        %v523 = vld [vmem:[%s296 + $0x270] sm:$0xff]
        %v524 = vld [vmem:[%s296 + $0x278] sm:$0xff]
        %v525 = vld [vmem:[%s296 + $0x280] sm:$0xff]
        %v526 = vld [vmem:[%s296 + $0x288] sm:$0xff]
        %v527 = vld [vmem:[%s296 + $0x290] sm:$0xff]
        %v528 = vld [vmem:[%s296 + $0x298] sm:$0xff]
        %v529 = vld [vmem:[%s296 + $0x2a0] sm:$0xff]
        %v530 = vld [vmem:[%s296 + $0x2a8] sm:$0xff]
        %v531 = vld [vmem:[%s296 + $0x2b0] sm:$0xff]
        %v532 = vld [vmem:[%s296 + $0x2b8] sm:$0xff]
        %v533 = vld [vmem:[%s296 + $0x2c0] sm:$0xff]
        %v534 = vld [vmem:[%s296 + $0x2c8] sm:$0xff]
        %v535 = vld [vmem:[%s296 + $0x2d0] sm:$0xff]
        %v536 = vld [vmem:[%s296 + $0x2d8] sm:$0xff]
        %v537 = vld [vmem:[%s296 + $0x2e0] sm:$0xff]
        %v538 = vld [vmem:[%s296 + $0x2e8] sm:$0xff]
        %v539 = vld [vmem:[%s296 + $0x2f0] sm:$0xff]
        %v540 = vld [vmem:[%s296 + $0x2f8] sm:$0xff]
        %v541 = vld [vmem:[%s296 + $0x300] sm:$0xff]
        %v542 = vld [vmem:[%s296 + $0x308] sm:$0xff]
        %v543 = vld [vmem:[%s296 + $0x310] sm:$0xff]
        %v544 = vld [vmem:[%s296 + $0x318] sm:$0xff]
        %v545 = vld [vmem:[%s296 + $0x320] sm:$0xff]
        %v546 = vld [vmem:[%s296 + $0x328] sm:$0xff]
        %v547 = vld [vmem:[%s296 + $0x330] sm:$0xff]
        %v548 = vld [vmem:[%s296 + $0x338] sm:$0xff]
        %v549 = vld [vmem:[%s296 + $0x340] sm:$0xff]
        %v550 = vld [vmem:[%s296 + $0x348] sm:$0xff]
        %v551 = vld [vmem:[%s296 + $0x350] sm:$0xff]
        %v552 = vld [vmem:[%s296 + $0x358] sm:$0xff]
        %v553 = vld [vmem:[%s296 + $0x360] sm:$0xff]
        %v554 = vld [vmem:[%s296 + $0x368] sm:$0xff]
        %v555 = vld [vmem:[%s296 + $0x370] sm:$0xff]
        %v556 = vld [vmem:[%s296 + $0x378] sm:$0xff]
        %v557 = vld [vmem:[%s296 + $0x380] sm:$0xff]
        %v558 = vld [vmem:[%s296 + $0x388] sm:$0xff]
        %v559 = vld [vmem:[%s296 + $0x390] sm:$0xff]
        %v560 = vld [vmem:[%s296 + $0x398] sm:$0xff]
        %v561 = vld [vmem:[%s296 + $0x3a0] sm:$0xff]
        %v562 = vld [vmem:[%s296 + $0x3a8] sm:$0xff]
        %v563 = vld [vmem:[%s296 + $0x3b0] sm:$0xff]
        %v564 = vld [vmem:[%s296 + $0x3b8] sm:$0xff]
        %v565 = vld [vmem:[%s296 + $0x3c0] sm:$0xff]
        %v566 = vld [vmem:[%s296 + $0x3c8] sm:$0xff]
        %v567 = vld [vmem:[%s296 + $0x3d0] sm:$0xff]
        %v568 = vld [vmem:[%s296 + $0x3d8] sm:$0xff]
        %v569 = vld [vmem:[%s296 + $0x3e0] sm:$0xff]
        %v570 = vld [vmem:[%s296 + $0x3e8] sm:$0xff]
        %v571 = vld [vmem:[%s296 + $0x3f0] sm:$0xff]
        %v572 = vld [vmem:[%s296 + $0x3f8] sm:$0xff]
        %v573 = vld [vmem:[%s296 + $0x400] sm:$0xff]
        %v574 = vld [vmem:[%s296 + $0x408] sm:$0xff]
        %v575 = vld [vmem:[%s296 + $0x410] sm:$0xff]
        %v576 = vld [vmem:[%s296 + $0x418] sm:$0xff]
        %v577 = vld [vmem:[%s296 + $0x420] sm:$0xff]
        %v578 = vld [vmem:[%s296 + $0x428] sm:$0xff]
        %v579 = vld [vmem:[%s296 + $0x430] sm:$0xff]
        %v580 = vld [vmem:[%s296 + $0x438] sm:$0xff]
        %v581 = vld [vmem:[%s296 + $0x440] sm:$0xff]
        %v582 = vld [vmem:[%s296 + $0x448] sm:$0xff]
        %v583 = vld [vmem:[%s296 + $0x450] sm:$0xff]
        %v584 = vld [vmem:[%s296 + $0x458] sm:$0xff]
        %v585 = vld [vmem:[%s296 + $0x460] sm:$0xff]
        %v586 = vld [vmem:[%s296 + $0x468] sm:$0xff]
        %v587 = vld [vmem:[%s296 + $0x470] sm:$0xff]
        %v588 = vld [vmem:[%s296 + $0x478] sm:$0xff]
        %v589 = vld [vmem:[%s296 + $0x480] sm:$0xff]
        %v590 = vld [vmem:[%s296 + $0x488] sm:$0xff]
        %v591 = vld [vmem:[%s296 + $0x490] sm:$0xff]
        %v592 = vld [vmem:[%s296 + $0x498] sm:$0xff]
        %v593 = vld [vmem:[%s296 + $0x4a0] sm:$0xff]
        %v594 = vld [vmem:[%s296 + $0x4a8] sm:$0xff]
        %v595 = vld [vmem:[%s296 + $0x4b0] sm:$0xff]
        %v596 = vld [vmem:[%s296 + $0x4b8] sm:$0xff]
        %v597 = vld [vmem:[%s296 + $0x4c0] sm:$0xff]
        %v598 = vld [vmem:[%s296 + $0x4c8] sm:$0xff]
        %v599 = vld [vmem:[%s296 + $0x4d0] sm:$0xff]
        %v600 = vld [vmem:[%s296 + $0x4d8] sm:$0xff]
        %v601 = vld [vmem:[%s296 + $0x4e0] sm:$0xff]
        %v602 = vld [vmem:[%s296 + $0x4e8] sm:$0xff]
        %v603 = vld [vmem:[%s296 + $0x4f0] sm:$0xff]
        %v604 = vld [vmem:[%s296 + $0x4f8] sm:$0xff]
        %v605 = vld [vmem:[%s306] sm:$0x3]
        %v607 = vperm.slane %v605, 0
        %v608 = vperm.slane %v605, 1
        %v621 = vunpack.c.l.b16 %v435
        %v622 = vunpack.c.h.b16 %v435
        %v623 = vunpack.c.l.b16 %v436
        %v624 = vunpack.c.h.b16 %v436
        %v625 = vunpack.c.l.b16 %v437
        %v626 = vunpack.c.h.b16 %v437
        %v627 = vunpack.c.l.b16 %v438
        %v628 = vunpack.c.h.b16 %v438
        %v629 = vunpack.c.l.b16 %v439
        %v630 = vunpack.c.h.b16 %v439
        %v631 = vunpack.c.l.b16 %v440
        %v632 = vunpack.c.h.b16 %v440
        %v633 = vunpack.c.l.b16 %v441
        %v634 = vunpack.c.h.b16 %v441
        %v635 = vunpack.c.l.b16 %v442
        %v636 = vunpack.c.h.b16 %v442
        %v637 = vunpack.c.l.b16 %v443
        %v638 = vunpack.c.h.b16 %v443
        %v639 = vunpack.c.l.b16 %v444
        %v640 = vunpack.c.h.b16 %v444
        %v641 = vpack.c.b16 %v631, %v621
        %v642 = vpack.c.b16 %v632, %v622
        %v643 = vpack.c.b16 %v633, %v623
        %v644 = vpack.c.b16 %v634, %v624
        %v645 = vpack.c.b16 %v635, %v625
        %v646 = vpack.c.b16 %v636, %v626
        %v647 = vpack.c.b16 %v637, %v627
        %v648 = vpack.c.b16 %v638, %v628
        %v649 = vpack.c.b16 %v639, %v629
        %v650 = vpack.c.b16 %v640, %v630
        %v821 = vunpack.c.l.b16 %v445
        %v822 = vunpack.c.h.b16 %v445
        %v823 = vunpack.c.l.b16 %v446
        %v824 = vunpack.c.h.b16 %v446
        %v825 = vunpack.c.l.b16 %v447
        %v826 = vunpack.c.h.b16 %v447
        %v827 = vunpack.c.l.b16 %v448
        %v828 = vunpack.c.h.b16 %v448
        %v829 = vunpack.c.l.b16 %v449
        %v830 = vunpack.c.h.b16 %v449
        %v831 = vunpack.c.l.b16 %v450
        %v832 = vunpack.c.h.b16 %v450
        %v833 = vunpack.c.l.b16 %v451
        %v834 = vunpack.c.h.b16 %v451
        %v835 = vunpack.c.l.b16 %v452
        %v836 = vunpack.c.h.b16 %v452
        %v837 = vunpack.c.l.b16 %v453
        %v838 = vunpack.c.h.b16 %v453
        %v839 = vunpack.c.l.b16 %v454
        %v840 = vunpack.c.h.b16 %v454
        %v841 = vunpack.c.l.b16 %v455
        %v842 = vunpack.c.h.b16 %v455
        %v843 = vunpack.c.l.b16 %v456
        %v844 = vunpack.c.h.b16 %v456
        %v845 = vunpack.c.l.b16 %v457
        %v846 = vunpack.c.h.b16 %v457
        %v847 = vunpack.c.l.b16 %v458
        %v848 = vunpack.c.h.b16 %v458
        %v849 = vunpack.c.l.b16 %v459
        %v850 = vunpack.c.h.b16 %v459
        %v851 = vunpack.c.l.b16 %v460
        %v852 = vunpack.c.h.b16 %v460
        %v853 = vunpack.c.l.b16 %v461
        %v854 = vunpack.c.h.b16 %v461
        %v855 = vunpack.c.l.b16 %v462
        %v856 = vunpack.c.h.b16 %v462
        %v857 = vunpack.c.l.b16 %v463
        %v858 = vunpack.c.h.b16 %v463
        %v859 = vunpack.c.l.b16 %v464
        %v860 = vunpack.c.h.b16 %v464
        %v861 = vunpack.c.l.b16 %v465
        %v862 = vunpack.c.h.b16 %v465
        %v863 = vunpack.c.l.b16 %v466
        %v864 = vunpack.c.h.b16 %v466
        %v865 = vunpack.c.l.b16 %v467
        %v866 = vunpack.c.h.b16 %v467
        %v867 = vunpack.c.l.b16 %v468
        %v868 = vunpack.c.h.b16 %v468
        %v869 = vunpack.c.l.b16 %v469
        %v870 = vunpack.c.h.b16 %v469
        %v871 = vunpack.c.l.b16 %v470
        %v872 = vunpack.c.h.b16 %v470
        %v873 = vunpack.c.l.b16 %v471
        %v874 = vunpack.c.h.b16 %v471
        %v875 = vunpack.c.l.b16 %v472
        %v876 = vunpack.c.h.b16 %v472
        %v877 = vunpack.c.l.b16 %v473
        %v878 = vunpack.c.h.b16 %v473
        %v879 = vunpack.c.l.b16 %v474
        %v880 = vunpack.c.h.b16 %v474
        %v881 = vunpack.c.l.b16 %v475
        %v882 = vunpack.c.h.b16 %v475
        %v883 = vunpack.c.l.b16 %v476
        %v884 = vunpack.c.h.b16 %v476
        %v885 = vunpack.c.l.b16 %v477
        %v886 = vunpack.c.h.b16 %v477
        %v887 = vunpack.c.l.b16 %v478
        %v888 = vunpack.c.h.b16 %v478
        %v889 = vunpack.c.l.b16 %v479
        %v890 = vunpack.c.h.b16 %v479
        %v891 = vunpack.c.l.b16 %v480
        %v892 = vunpack.c.h.b16 %v480
        %v893 = vunpack.c.l.b16 %v481
        %v894 = vunpack.c.h.b16 %v481
        %v895 = vunpack.c.l.b16 %v482
        %v896 = vunpack.c.h.b16 %v482
        %v897 = vunpack.c.l.b16 %v483
        %v898 = vunpack.c.h.b16 %v483
        %v899 = vunpack.c.l.b16 %v484
        %v900 = vunpack.c.h.b16 %v484
        %v901 = vunpack.c.l.b16 %v485
        %v902 = vunpack.c.h.b16 %v485
        %v903 = vunpack.c.l.b16 %v486
        %v904 = vunpack.c.h.b16 %v486
        %v905 = vunpack.c.l.b16 %v487
        %v906 = vunpack.c.h.b16 %v487
        %v907 = vunpack.c.l.b16 %v488
        %v908 = vunpack.c.h.b16 %v488
        %v909 = vunpack.c.l.b16 %v489
        %v910 = vunpack.c.h.b16 %v489
        %v911 = vunpack.c.l.b16 %v490
        %v912 = vunpack.c.h.b16 %v490
        %v913 = vunpack.c.l.b16 %v491
        %v914 = vunpack.c.h.b16 %v491
        %v915 = vunpack.c.l.b16 %v492
        %v916 = vunpack.c.h.b16 %v492
        %v917 = vunpack.c.l.b16 %v493
        %v918 = vunpack.c.h.b16 %v493
        %v919 = vunpack.c.l.b16 %v494
        %v920 = vunpack.c.h.b16 %v494
        %v921 = vunpack.c.l.b16 %v495
        %v922 = vunpack.c.h.b16 %v495
        %v923 = vunpack.c.l.b16 %v496
        %v924 = vunpack.c.h.b16 %v496
        %v925 = vunpack.c.l.b16 %v497
        %v926 = vunpack.c.h.b16 %v497
        %v927 = vunpack.c.l.b16 %v498
        %v928 = vunpack.c.h.b16 %v498
        %v929 = vunpack.c.l.b16 %v499
        %v930 = vunpack.c.h.b16 %v499
        %v931 = vunpack.c.l.b16 %v500
        %v932 = vunpack.c.h.b16 %v500
        %v933 = vunpack.c.l.b16 %v501
        %v934 = vunpack.c.h.b16 %v501
        %v935 = vunpack.c.l.b16 %v502
        %v936 = vunpack.c.h.b16 %v502
        %v937 = vunpack.c.l.b16 %v503
        %v938 = vunpack.c.h.b16 %v503
        %v939 = vunpack.c.l.b16 %v504
        %v940 = vunpack.c.h.b16 %v504
        %v941 = vunpack.c.l.b16 %v505
        %v942 = vunpack.c.h.b16 %v505
        %v943 = vunpack.c.l.b16 %v506
        %v944 = vunpack.c.h.b16 %v506
        %v945 = vunpack.c.l.b16 %v507
        %v946 = vunpack.c.h.b16 %v507
        %v947 = vunpack.c.l.b16 %v508
        %v948 = vunpack.c.h.b16 %v508
        %v949 = vunpack.c.l.b16 %v509
        %v950 = vunpack.c.h.b16 %v509
        %v951 = vunpack.c.l.b16 %v510
        %v952 = vunpack.c.h.b16 %v510
        %v953 = vunpack.c.l.b16 %v511
        %v954 = vunpack.c.h.b16 %v511
        %v955 = vunpack.c.l.b16 %v512
        %v956 = vunpack.c.h.b16 %v512
        %v957 = vunpack.c.l.b16 %v513
        %v958 = vunpack.c.h.b16 %v513
        %v959 = vunpack.c.l.b16 %v514
        %v960 = vunpack.c.h.b16 %v514
        %v961 = vunpack.c.l.b16 %v515
        %v962 = vunpack.c.h.b16 %v515
        %v963 = vunpack.c.l.b16 %v516
        %v964 = vunpack.c.h.b16 %v516
        %v965 = vunpack.c.l.b16 %v517
        %v966 = vunpack.c.h.b16 %v517
        %v967 = vunpack.c.l.b16 %v518
        %v968 = vunpack.c.h.b16 %v518
        %v969 = vunpack.c.l.b16 %v519
        %v970 = vunpack.c.h.b16 %v519
        %v971 = vunpack.c.l.b16 %v520
        %v972 = vunpack.c.h.b16 %v520
        %v973 = vunpack.c.l.b16 %v521
        %v974 = vunpack.c.h.b16 %v521
        %v975 = vunpack.c.l.b16 %v522
        %v976 = vunpack.c.h.b16 %v522
        %v977 = vunpack.c.l.b16 %v523
        %v978 = vunpack.c.h.b16 %v523
        %v979 = vunpack.c.l.b16 %v524
        %v980 = vunpack.c.h.b16 %v524
        %v981 = vunpack.c.l.b16 %v525
        %v982 = vunpack.c.h.b16 %v525
        %v983 = vunpack.c.l.b16 %v526
        %v984 = vunpack.c.h.b16 %v526
        %v985 = vunpack.c.l.b16 %v527
        %v986 = vunpack.c.h.b16 %v527
        %v987 = vunpack.c.l.b16 %v528
        %v988 = vunpack.c.h.b16 %v528
        %v989 = vunpack.c.l.b16 %v529
        %v990 = vunpack.c.h.b16 %v529
        %v991 = vunpack.c.l.b16 %v530
        %v992 = vunpack.c.h.b16 %v530
        %v993 = vunpack.c.l.b16 %v531
        %v994 = vunpack.c.h.b16 %v531
        %v995 = vunpack.c.l.b16 %v532
        %v996 = vunpack.c.h.b16 %v532
        %v997 = vunpack.c.l.b16 %v533
        %v998 = vunpack.c.h.b16 %v533
        %v999 = vunpack.c.l.b16 %v534
        %v1000 = vunpack.c.h.b16 %v534
        %v1001 = vunpack.c.l.b16 %v535
        %v1002 = vunpack.c.h.b16 %v535
        %v1003 = vunpack.c.l.b16 %v536
        %v1004 = vunpack.c.h.b16 %v536
        %v1005 = vunpack.c.l.b16 %v537
        %v1006 = vunpack.c.h.b16 %v537
        %v1007 = vunpack.c.l.b16 %v538
        %v1008 = vunpack.c.h.b16 %v538
        %v1009 = vunpack.c.l.b16 %v539
        %v1010 = vunpack.c.h.b16 %v539
        %v1011 = vunpack.c.l.b16 %v540
        %v1012 = vunpack.c.h.b16 %v540
        %v1013 = vunpack.c.l.b16 %v541
        %v1014 = vunpack.c.h.b16 %v541
        %v1015 = vunpack.c.l.b16 %v542
        %v1016 = vunpack.c.h.b16 %v542
        %v1017 = vunpack.c.l.b16 %v543
        %v1018 = vunpack.c.h.b16 %v543
        %v1019 = vunpack.c.l.b16 %v544
        %v1020 = vunpack.c.h.b16 %v544
        %v1021 = vunpack.c.l.b16 %v545
        %v1022 = vunpack.c.h.b16 %v545
        %v1023 = vunpack.c.l.b16 %v546
        %v1024 = vunpack.c.h.b16 %v546
        %v1025 = vunpack.c.l.b16 %v547
        %v1026 = vunpack.c.h.b16 %v547
        %v1027 = vunpack.c.l.b16 %v548
        %v1028 = vunpack.c.h.b16 %v548
        %v1029 = vunpack.c.l.b16 %v549
        %v1030 = vunpack.c.h.b16 %v549
        %v1031 = vunpack.c.l.b16 %v550
        %v1032 = vunpack.c.h.b16 %v550
        %v1033 = vunpack.c.l.b16 %v551
        %v1034 = vunpack.c.h.b16 %v551
        %v1035 = vunpack.c.l.b16 %v552
        %v1036 = vunpack.c.h.b16 %v552
        %v1037 = vunpack.c.l.b16 %v553
        %v1038 = vunpack.c.h.b16 %v553
        %v1039 = vunpack.c.l.b16 %v554
        %v1040 = vunpack.c.h.b16 %v554
        %v1041 = vunpack.c.l.b16 %v555
        %v1042 = vunpack.c.h.b16 %v555
        %v1043 = vunpack.c.l.b16 %v556
        %v1044 = vunpack.c.h.b16 %v556
        %v1045 = vunpack.c.l.b16 %v557
        %v1046 = vunpack.c.h.b16 %v557
        %v1047 = vunpack.c.l.b16 %v558
        %v1048 = vunpack.c.h.b16 %v558
        %v1049 = vunpack.c.l.b16 %v559
        %v1050 = vunpack.c.h.b16 %v559
        %v1051 = vunpack.c.l.b16 %v560
        %v1052 = vunpack.c.h.b16 %v560
        %v1053 = vunpack.c.l.b16 %v561
        %v1054 = vunpack.c.h.b16 %v561
        %v1055 = vunpack.c.l.b16 %v562
        %v1056 = vunpack.c.h.b16 %v562
        %v1057 = vunpack.c.l.b16 %v563
        %v1058 = vunpack.c.h.b16 %v563
        %v1059 = vunpack.c.l.b16 %v564
        %v1060 = vunpack.c.h.b16 %v564
        %v1061 = vunpack.c.l.b16 %v565
        %v1062 = vunpack.c.h.b16 %v565
        %v1063 = vunpack.c.l.b16 %v566
        %v1064 = vunpack.c.h.b16 %v566
        %v1065 = vunpack.c.l.b16 %v567
        %v1066 = vunpack.c.h.b16 %v567
        %v1067 = vunpack.c.l.b16 %v568
        %v1068 = vunpack.c.h.b16 %v568
        %v1069 = vunpack.c.l.b16 %v569
        %v1070 = vunpack.c.h.b16 %v569
        %v1071 = vunpack.c.l.b16 %v570
        %v1072 = vunpack.c.h.b16 %v570
        %v1073 = vunpack.c.l.b16 %v571
        %v1074 = vunpack.c.h.b16 %v571
        %v1075 = vunpack.c.l.b16 %v572
        %v1076 = vunpack.c.h.b16 %v572
        %v1077 = vunpack.c.l.b16 %v573
        %v1078 = vunpack.c.h.b16 %v573
        %v1079 = vunpack.c.l.b16 %v574
        %v1080 = vunpack.c.h.b16 %v574
        %v1081 = vunpack.c.l.b16 %v575
        %v1082 = vunpack.c.h.b16 %v575
        %v1083 = vunpack.c.l.b16 %v576
        %v1084 = vunpack.c.h.b16 %v576
        %v1085 = vunpack.c.l.b16 %v577
        %v1086 = vunpack.c.h.b16 %v577
        %v1087 = vunpack.c.l.b16 %v578
        %v1088 = vunpack.c.h.b16 %v578
        %v1089 = vunpack.c.l.b16 %v579
        %v1090 = vunpack.c.h.b16 %v579
        %v1091 = vunpack.c.l.b16 %v580
        %v1092 = vunpack.c.h.b16 %v580
        %v1093 = vunpack.c.l.b16 %v581
        %v1094 = vunpack.c.h.b16 %v581
        %v1095 = vunpack.c.l.b16 %v582
        %v1096 = vunpack.c.h.b16 %v582
        %v1097 = vunpack.c.l.b16 %v583
        %v1098 = vunpack.c.h.b16 %v583
        %v1099 = vunpack.c.l.b16 %v584
        %v1100 = vunpack.c.h.b16 %v584
        %v1101 = vunpack.c.l.b16 %v585
        %v1102 = vunpack.c.h.b16 %v585
        %v1103 = vunpack.c.l.b16 %v586
        %v1104 = vunpack.c.h.b16 %v586
        %v1105 = vunpack.c.l.b16 %v587
        %v1106 = vunpack.c.h.b16 %v587
        %v1107 = vunpack.c.l.b16 %v588
        %v1108 = vunpack.c.h.b16 %v588
        %v1109 = vunpack.c.l.b16 %v589
        %v1110 = vunpack.c.h.b16 %v589
        %v1111 = vunpack.c.l.b16 %v590
        %v1112 = vunpack.c.h.b16 %v590
        %v1113 = vunpack.c.l.b16 %v591
        %v1114 = vunpack.c.h.b16 %v591
        %v1115 = vunpack.c.l.b16 %v592
        %v1116 = vunpack.c.h.b16 %v592
        %v1117 = vunpack.c.l.b16 %v593
        %v1118 = vunpack.c.h.b16 %v593
        %v1119 = vunpack.c.l.b16 %v594
        %v1120 = vunpack.c.h.b16 %v594
        %v1121 = vunpack.c.l.b16 %v595
        %v1122 = vunpack.c.h.b16 %v595
        %v1123 = vunpack.c.l.b16 %v596
        %v1124 = vunpack.c.h.b16 %v596
        %v1125 = vunpack.c.l.b16 %v597
        %v1126 = vunpack.c.h.b16 %v597
        %v1127 = vunpack.c.l.b16 %v598
        %v1128 = vunpack.c.h.b16 %v598
        %v1129 = vunpack.c.l.b16 %v599
        %v1130 = vunpack.c.h.b16 %v599
        %v1131 = vunpack.c.l.b16 %v600
        %v1132 = vunpack.c.h.b16 %v600
        %v1133 = vunpack.c.l.b16 %v601
        %v1134 = vunpack.c.h.b16 %v601
        %v1135 = vunpack.c.l.b16 %v602
        %v1136 = vunpack.c.h.b16 %v602
        %v1137 = vunpack.c.l.b16 %v603
        %v1138 = vunpack.c.h.b16 %v603
        %v1139 = vunpack.c.l.b16 %v604
        %v1140 = vunpack.c.h.b16 %v604
        %v1141 = vpack.c.b16 %v823, %v821
        %v1142 = vpack.c.b16 %v824, %v822
        %v1143 = vpack.c.b16 %v827, %v825
        %v1144 = vpack.c.b16 %v828, %v826
        %v1145 = vpack.c.b16 %v831, %v829
        %v1146 = vpack.c.b16 %v832, %v830
        %v1147 = vpack.c.b16 %v835, %v833
        %v1148 = vpack.c.b16 %v836, %v834
        %v1149 = vpack.c.b16 %v839, %v837
        %v1150 = vpack.c.b16 %v840, %v838
        %v1151 = vpack.c.b16 %v843, %v841
        %v1152 = vpack.c.b16 %v844, %v842
        %v1153 = vpack.c.b16 %v847, %v845
        %v1154 = vpack.c.b16 %v848, %v846
        %v1155 = vpack.c.b16 %v851, %v849
        %v1156 = vpack.c.b16 %v852, %v850
        %v1157 = vpack.c.b16 %v855, %v853
        %v1158 = vpack.c.b16 %v856, %v854
        %v1159 = vpack.c.b16 %v859, %v857
        %v1160 = vpack.c.b16 %v860, %v858
        %v1161 = vpack.c.b16 %v863, %v861
        %v1162 = vpack.c.b16 %v864, %v862
        %v1163 = vpack.c.b16 %v867, %v865
        %v1164 = vpack.c.b16 %v868, %v866
        %v1165 = vpack.c.b16 %v871, %v869
        %v1166 = vpack.c.b16 %v872, %v870
        %v1167 = vpack.c.b16 %v875, %v873
        %v1168 = vpack.c.b16 %v876, %v874
        %v1169 = vpack.c.b16 %v879, %v877
        %v1170 = vpack.c.b16 %v880, %v878
        %v1171 = vpack.c.b16 %v883, %v881
        %v1172 = vpack.c.b16 %v884, %v882
        %v1173 = vpack.c.b16 %v887, %v885
        %v1174 = vpack.c.b16 %v888, %v886
        %v1175 = vpack.c.b16 %v891, %v889
        %v1176 = vpack.c.b16 %v892, %v890
        %v1177 = vpack.c.b16 %v895, %v893
        %v1178 = vpack.c.b16 %v896, %v894
        %v1179 = vpack.c.b16 %v899, %v897
        %v1180 = vpack.c.b16 %v900, %v898
        %v1181 = vpack.c.b16 %v903, %v901
        %v1182 = vpack.c.b16 %v904, %v902
        %v1183 = vpack.c.b16 %v907, %v905
        %v1184 = vpack.c.b16 %v908, %v906
        %v1185 = vpack.c.b16 %v911, %v909
        %v1186 = vpack.c.b16 %v912, %v910
        %v1187 = vpack.c.b16 %v915, %v913
        %v1188 = vpack.c.b16 %v916, %v914
        %v1189 = vpack.c.b16 %v919, %v917
        %v1190 = vpack.c.b16 %v920, %v918
        %v1191 = vpack.c.b16 %v923, %v921
        %v1192 = vpack.c.b16 %v924, %v922
        %v1193 = vpack.c.b16 %v927, %v925
        %v1194 = vpack.c.b16 %v928, %v926
        %v1195 = vpack.c.b16 %v931, %v929
        %v1196 = vpack.c.b16 %v932, %v930
        %v1197 = vpack.c.b16 %v935, %v933
        %v1198 = vpack.c.b16 %v936, %v934
        %v1199 = vpack.c.b16 %v939, %v937
        %v1200 = vpack.c.b16 %v940, %v938
        %v1201 = vpack.c.b16 %v943, %v941
        %v1202 = vpack.c.b16 %v944, %v942
        %v1203 = vpack.c.b16 %v947, %v945
        %v1204 = vpack.c.b16 %v948, %v946
        %v1205 = vpack.c.b16 %v951, %v949
        %v1206 = vpack.c.b16 %v952, %v950
        %v1207 = vpack.c.b16 %v955, %v953
        %v1208 = vpack.c.b16 %v956, %v954
        %v1209 = vpack.c.b16 %v959, %v957
        %v1210 = vpack.c.b16 %v960, %v958
        %v1211 = vpack.c.b16 %v963, %v961
        %v1212 = vpack.c.b16 %v964, %v962
        %v1213 = vpack.c.b16 %v967, %v965
        %v1214 = vpack.c.b16 %v968, %v966
        %v1215 = vpack.c.b16 %v971, %v969
        %v1216 = vpack.c.b16 %v972, %v970
        %v1217 = vpack.c.b16 %v975, %v973
        %v1218 = vpack.c.b16 %v976, %v974
        %v1219 = vpack.c.b16 %v979, %v977
        %v1220 = vpack.c.b16 %v980, %v978
        %v1221 = vpack.c.b16 %v983, %v981
        %v1222 = vpack.c.b16 %v984, %v982
        %v1223 = vpack.c.b16 %v987, %v985
        %v1224 = vpack.c.b16 %v988, %v986
        %v1225 = vpack.c.b16 %v991, %v989
        %v1226 = vpack.c.b16 %v992, %v990
        %v1227 = vpack.c.b16 %v995, %v993
        %v1228 = vpack.c.b16 %v996, %v994
        %v1229 = vpack.c.b16 %v999, %v997
        %v1230 = vpack.c.b16 %v1000, %v998
        %v1231 = vpack.c.b16 %v1003, %v1001
        %v1232 = vpack.c.b16 %v1004, %v1002
        %v1233 = vpack.c.b16 %v1007, %v1005
        %v1234 = vpack.c.b16 %v1008, %v1006
        %v1235 = vpack.c.b16 %v1011, %v1009
        %v1236 = vpack.c.b16 %v1012, %v1010
        %v1237 = vpack.c.b16 %v1015, %v1013
        %v1238 = vpack.c.b16 %v1016, %v1014
        %v1239 = vpack.c.b16 %v1019, %v1017
        %v1240 = vpack.c.b16 %v1020, %v1018
        %v1241 = vpack.c.b16 %v1023, %v1021
        %v1242 = vpack.c.b16 %v1024, %v1022
        %v1243 = vpack.c.b16 %v1027, %v1025
        %v1244 = vpack.c.b16 %v1028, %v1026
        %v1245 = vpack.c.b16 %v1031, %v1029
        %v1246 = vpack.c.b16 %v1032, %v1030
        %v1247 = vpack.c.b16 %v1035, %v1033
        %v1248 = vpack.c.b16 %v1036, %v1034
        %v1249 = vpack.c.b16 %v1039, %v1037
        %v1250 = vpack.c.b16 %v1040, %v1038
        %v1251 = vpack.c.b16 %v1043, %v1041
        %v1252 = vpack.c.b16 %v1044, %v1042
        %v1253 = vpack.c.b16 %v1047, %v1045
        %v1254 = vpack.c.b16 %v1048, %v1046
        %v1255 = vpack.c.b16 %v1051, %v1049
        %v1256 = vpack.c.b16 %v1052, %v1050
        %v1257 = vpack.c.b16 %v1055, %v1053
        %v1258 = vpack.c.b16 %v1056, %v1054
        %v1259 = vpack.c.b16 %v1059, %v1057
        %v1260 = vpack.c.b16 %v1060, %v1058
        %v1261 = vpack.c.b16 %v1063, %v1061
        %v1262 = vpack.c.b16 %v1064, %v1062
        %v1263 = vpack.c.b16 %v1067, %v1065
        %v1264 = vpack.c.b16 %v1068, %v1066
        %v1265 = vpack.c.b16 %v1071, %v1069
        %v1266 = vpack.c.b16 %v1072, %v1070
        %v1267 = vpack.c.b16 %v1075, %v1073
        %v1268 = vpack.c.b16 %v1076, %v1074
        %v1269 = vpack.c.b16 %v1079, %v1077
        %v1270 = vpack.c.b16 %v1080, %v1078
        %v1271 = vpack.c.b16 %v1083, %v1081
        %v1272 = vpack.c.b16 %v1084, %v1082
        %v1273 = vpack.c.b16 %v1087, %v1085
        %v1274 = vpack.c.b16 %v1088, %v1086
        %v1275 = vpack.c.b16 %v1091, %v1089
        %v1276 = vpack.c.b16 %v1092, %v1090
        %v1277 = vpack.c.b16 %v1095, %v1093
        %v1278 = vpack.c.b16 %v1096, %v1094
        %v1279 = vpack.c.b16 %v1099, %v1097
        %v1280 = vpack.c.b16 %v1100, %v1098
        %v1281 = vpack.c.b16 %v1103, %v1101
        %v1282 = vpack.c.b16 %v1104, %v1102
        %v1283 = vpack.c.b16 %v1107, %v1105
        %v1284 = vpack.c.b16 %v1108, %v1106
        %v1285 = vpack.c.b16 %v1111, %v1109
        %v1286 = vpack.c.b16 %v1112, %v1110
        %v1287 = vpack.c.b16 %v1115, %v1113
        %v1288 = vpack.c.b16 %v1116, %v1114
        %v1289 = vpack.c.b16 %v1119, %v1117
        %v1290 = vpack.c.b16 %v1120, %v1118
        %v1291 = vpack.c.b16 %v1123, %v1121
        %v1292 = vpack.c.b16 %v1124, %v1122
        %v1293 = vpack.c.b16 %v1127, %v1125
        %v1294 = vpack.c.b16 %v1128, %v1126
        %v1295 = vpack.c.b16 %v1131, %v1129
        %v1296 = vpack.c.b16 %v1132, %v1130
        %v1297 = vpack.c.b16 %v1135, %v1133
        %v1298 = vpack.c.b16 %v1136, %v1134
        %v1299 = vpack.c.b16 %v1139, %v1137
        %v1300 = vpack.c.b16 %v1140, %v1138
        %1461 = vmatpush.bf16.msra.mxu0 %v1155
        %1462 = vmatpush.bf16.msra.mxu0 %v1153
        %1463 = vmatpush.bf16.msra.mxu0 %v1151
        %1464 = vmatpush.bf16.msra.mxu0 %v1149
        %1465 = vmatpush.bf16.msra.mxu0 %v1147
        %1466 = vmatpush.bf16.msra.mxu0 %v1145
        %1467 = vmatpush.bf16.msra.mxu0 %v1143
        %1468 = vmatpush.bf16.msra.mxu0 %v1141
        %1469 = vmatmul.bf16.gmra.mxu0 %v641
        %v1470 = vpop.f32.mrf.mxu0
        %v1471 = vadd.f32 %v607, %v1470
        %v1472 = vpop.f32.mrf.mxu0
        %v1473 = vadd.f32 %v607, %v1472
        %1474 = vdwg.mxu0
        %1475 = vmatpush.bf16.msra.mxu0 %v1171
        %1476 = vmatpush.bf16.msra.mxu0 %v1169
        %1477 = vmatpush.bf16.msra.mxu0 %v1167
        %1478 = vmatpush.bf16.msra.mxu0 %v1165
        %1479 = vmatpush.bf16.msra.mxu0 %v1163
        %1480 = vmatpush.bf16.msra.mxu0 %v1161
        %1481 = vmatpush.bf16.msra.mxu0 %v1159
        %1482 = vmatpush.bf16.msra.mxu0 %v1157
        %1483 = vmatmul.bf16.gmra.mxu0 %v642
        %v1484 = vpop.f32.mrf.mxu0
        %v1485 = vadd.f32 %v1471, %v1484
        %v1486 = vpop.f32.mrf.mxu0
        %v1487 = vadd.f32 %v1473, %v1486
        %1488 = vdwg.mxu0
        %1489 = vmatpush.bf16.msra.mxu0 %v1187
        %1490 = vmatpush.bf16.msra.mxu0 %v1185
        %1491 = vmatpush.bf16.msra.mxu0 %v1183
        %1492 = vmatpush.bf16.msra.mxu0 %v1181
        %1493 = vmatpush.bf16.msra.mxu0 %v1179
        %1494 = vmatpush.bf16.msra.mxu0 %v1177
        %1495 = vmatpush.bf16.msra.mxu0 %v1175
        %1496 = vmatpush.bf16.msra.mxu0 %v1173
        %1497 = vmatmul.bf16.gmra.mxu0 %v643
        %v1498 = vpop.f32.mrf.mxu0
        %v1499 = vadd.f32 %v1485, %v1498
        %v1500 = vpop.f32.mrf.mxu0
        %v1501 = vadd.f32 %v1487, %v1500
        %1502 = vdwg.mxu0
        %1503 = vmatpush.bf16.msra.mxu0 %v1203
        %1504 = vmatpush.bf16.msra.mxu0 %v1201
        %1505 = vmatpush.bf16.msra.mxu0 %v1199
        %1506 = vmatpush.bf16.msra.mxu0 %v1197
        %1507 = vmatpush.bf16.msra.mxu0 %v1195
        %1508 = vmatpush.bf16.msra.mxu0 %v1193
        %1509 = vmatpush.bf16.msra.mxu0 %v1191
        %1510 = vmatpush.bf16.msra.mxu0 %v1189
        %1511 = vmatmul.bf16.gmra.mxu0 %v644
        %v1512 = vpop.f32.mrf.mxu0
        %v1513 = vadd.f32 %v1499, %v1512
        %v1514 = vpop.f32.mrf.mxu0
        %v1515 = vadd.f32 %v1501, %v1514
        %1516 = vdwg.mxu0
        %1517 = vmatpush.bf16.msra.mxu0 %v1219
        %1518 = vmatpush.bf16.msra.mxu0 %v1217
        %1519 = vmatpush.bf16.msra.mxu0 %v1215
        %1520 = vmatpush.bf16.msra.mxu0 %v1213
        %1521 = vmatpush.bf16.msra.mxu0 %v1211
        %1522 = vmatpush.bf16.msra.mxu0 %v1209
        %1523 = vmatpush.bf16.msra.mxu0 %v1207
        %1524 = vmatpush.bf16.msra.mxu0 %v1205
        %1525 = vmatmul.bf16.gmra.mxu0 %v645
        %v1526 = vpop.f32.mrf.mxu0
        %v1527 = vadd.f32 %v1513, %v1526
        %v1528 = vpop.f32.mrf.mxu0
        %v1529 = vadd.f32 %v1515, %v1528
        %1530 = vdwg.mxu0
        %1531 = vmatpush.bf16.msra.mxu0 %v1235
        %1532 = vmatpush.bf16.msra.mxu0 %v1233
        %1533 = vmatpush.bf16.msra.mxu0 %v1231
        %1534 = vmatpush.bf16.msra.mxu0 %v1229
        %1535 = vmatpush.bf16.msra.mxu0 %v1227
        %1536 = vmatpush.bf16.msra.mxu0 %v1225
        %1537 = vmatpush.bf16.msra.mxu0 %v1223
        %1538 = vmatpush.bf16.msra.mxu0 %v1221
        %1539 = vmatmul.bf16.gmra.mxu0 %v646
        %v1540 = vpop.f32.mrf.mxu0
        %v1541 = vadd.f32 %v1527, %v1540
        %v1542 = vpop.f32.mrf.mxu0
        %v1543 = vadd.f32 %v1529, %v1542
        %1544 = vdwg.mxu0
        %1545 = vmatpush.bf16.msra.mxu0 %v1251
        %1546 = vmatpush.bf16.msra.mxu0 %v1249
        %1547 = vmatpush.bf16.msra.mxu0 %v1247
        %1548 = vmatpush.bf16.msra.mxu0 %v1245
        %1549 = vmatpush.bf16.msra.mxu0 %v1243
        %1550 = vmatpush.bf16.msra.mxu0 %v1241
        %1551 = vmatpush.bf16.msra.mxu0 %v1239
        %1552 = vmatpush.bf16.msra.mxu0 %v1237
        %1553 = vmatmul.bf16.gmra.mxu0 %v647
        %v1554 = vpop.f32.mrf.mxu0
        %v1555 = vadd.f32 %v1541, %v1554
        %v1556 = vpop.f32.mrf.mxu0
        %v1557 = vadd.f32 %v1543, %v1556
        %1558 = vdwg.mxu0
        %1559 = vmatpush.bf16.msra.mxu0 %v1267
        %1560 = vmatpush.bf16.msra.mxu0 %v1265
        %1561 = vmatpush.bf16.msra.mxu0 %v1263
        %1562 = vmatpush.bf16.msra.mxu0 %v1261
        %1563 = vmatpush.bf16.msra.mxu0 %v1259
        %1564 = vmatpush.bf16.msra.mxu0 %v1257
        %1565 = vmatpush.bf16.msra.mxu0 %v1255
        %1566 = vmatpush.bf16.msra.mxu0 %v1253
        %1567 = vmatmul.bf16.gmra.mxu0 %v648
        %v1568 = vpop.f32.mrf.mxu0
        %v1569 = vadd.f32 %v1555, %v1568
        %v1570 = vpop.f32.mrf.mxu0
        %v1571 = vadd.f32 %v1557, %v1570
        %1572 = vdwg.mxu0
        %1573 = vmatpush.bf16.msra.mxu0 %v1283
        %1574 = vmatpush.bf16.msra.mxu0 %v1281
        %1575 = vmatpush.bf16.msra.mxu0 %v1279
        %1576 = vmatpush.bf16.msra.mxu0 %v1277
        %1577 = vmatpush.bf16.msra.mxu0 %v1275
        %1578 = vmatpush.bf16.msra.mxu0 %v1273
        %1579 = vmatpush.bf16.msra.mxu0 %v1271
        %1580 = vmatpush.bf16.msra.mxu0 %v1269
        %1581 = vmatmul.bf16.gmra.mxu0 %v649
        %v1582 = vpop.f32.mrf.mxu0
        %v1583 = vadd.f32 %v1569, %v1582
        %v1584 = vpop.f32.mrf.mxu0
        %v1585 = vadd.f32 %v1571, %v1584
        %1586 = vdwg.mxu0
        %1587 = vmatpush.bf16.msra.mxu0 %v1299
        %1588 = vmatpush.bf16.msra.mxu0 %v1297
        %1589 = vmatpush.bf16.msra.mxu0 %v1295
        %1590 = vmatpush.bf16.msra.mxu0 %v1293
        %1591 = vmatpush.bf16.msra.mxu0 %v1291
        %1592 = vmatpush.bf16.msra.mxu0 %v1289
        %1593 = vmatpush.bf16.msra.mxu0 %v1287
        %1594 = vmatpush.bf16.msra.mxu0 %v1285
        %1595 = vmatmul.bf16.gmra.mxu0 %v650
        %v1596 = vpop.f32.mrf.mxu0
        %v1597 = vadd.f32 %v1583, %v1596
        %v1598 = vpop.f32.mrf.mxu0
        %v1599 = vadd.f32 %v1585, %v1598
        %1600 = vdwg.mxu0
        %1601 = vmatpush.bf16.msra.mxu0 %v1156
        %1602 = vmatpush.bf16.msra.mxu0 %v1154
        %1603 = vmatpush.bf16.msra.mxu0 %v1152
        %1604 = vmatpush.bf16.msra.mxu0 %v1150
        %1605 = vmatpush.bf16.msra.mxu0 %v1148
        %1606 = vmatpush.bf16.msra.mxu0 %v1146
        %1607 = vmatpush.bf16.msra.mxu0 %v1144
        %1608 = vmatpush.bf16.msra.mxu0 %v1142
        %1609 = vmatmul.bf16.gmra.mxu0 %v641
        %v1610 = vpop.f32.mrf.mxu0
        %v1611 = vadd.f32 %v608, %v1610
        %v1612 = vpop.f32.mrf.mxu0
        %v1613 = vadd.f32 %v608, %v1612
        %1614 = vdwg.mxu0
        %1615 = vmatpush.bf16.msra.mxu0 %v1172
        %1616 = vmatpush.bf16.msra.mxu0 %v1170
        %1617 = vmatpush.bf16.msra.mxu0 %v1168
        %1618 = vmatpush.bf16.msra.mxu0 %v1166
        %1619 = vmatpush.bf16.msra.mxu0 %v1164
        %1620 = vmatpush.bf16.msra.mxu0 %v1162
        %1621 = vmatpush.bf16.msra.mxu0 %v1160
        %1622 = vmatpush.bf16.msra.mxu0 %v1158
        %1623 = vmatmul.bf16.gmra.mxu0 %v642
        %v1624 = vpop.f32.mrf.mxu0
        %v1625 = vadd.f32 %v1611, %v1624
        %v1626 = vpop.f32.mrf.mxu0
        %v1627 = vadd.f32 %v1613, %v1626
        %1628 = vdwg.mxu0
        %1629 = vmatpush.bf16.msra.mxu0 %v1188
        %1630 = vmatpush.bf16.msra.mxu0 %v1186
        %1631 = vmatpush.bf16.msra.mxu0 %v1184
        %1632 = vmatpush.bf16.msra.mxu0 %v1182
        %1633 = vmatpush.bf16.msra.mxu0 %v1180
        %1634 = vmatpush.bf16.msra.mxu0 %v1178
        %1635 = vmatpush.bf16.msra.mxu0 %v1176
        %1636 = vmatpush.bf16.msra.mxu0 %v1174
        %1637 = vmatmul.bf16.gmra.mxu0 %v643
        %v1638 = vpop.f32.mrf.mxu0
        %v1639 = vadd.f32 %v1625, %v1638
        %v1640 = vpop.f32.mrf.mxu0
        %v1641 = vadd.f32 %v1627, %v1640
        %1642 = vdwg.mxu0
        %1643 = vmatpush.bf16.msra.mxu0 %v1204
        %1644 = vmatpush.bf16.msra.mxu0 %v1202
        %1645 = vmatpush.bf16.msra.mxu0 %v1200
        %1646 = vmatpush.bf16.msra.mxu0 %v1198
        %1647 = vmatpush.bf16.msra.mxu0 %v1196
        %1648 = vmatpush.bf16.msra.mxu0 %v1194
        %1649 = vmatpush.bf16.msra.mxu0 %v1192
        %1650 = vmatpush.bf16.msra.mxu0 %v1190
        %1651 = vmatmul.bf16.gmra.mxu0 %v644
        %v1652 = vpop.f32.mrf.mxu0
        %v1653 = vadd.f32 %v1639, %v1652
        %v1654 = vpop.f32.mrf.mxu0
        %v1655 = vadd.f32 %v1641, %v1654
        %1656 = vdwg.mxu0
        %1657 = vmatpush.bf16.msra.mxu0 %v1220
        %1658 = vmatpush.bf16.msra.mxu0 %v1218
        %1659 = vmatpush.bf16.msra.mxu0 %v1216
        %1660 = vmatpush.bf16.msra.mxu0 %v1214
        %1661 = vmatpush.bf16.msra.mxu0 %v1212
        %1662 = vmatpush.bf16.msra.mxu0 %v1210
        %1663 = vmatpush.bf16.msra.mxu0 %v1208
        %1664 = vmatpush.bf16.msra.mxu0 %v1206
        %1665 = vmatmul.bf16.gmra.mxu0 %v645
        %v1666 = vpop.f32.mrf.mxu0
        %v1667 = vadd.f32 %v1653, %v1666
        %v1668 = vpop.f32.mrf.mxu0
        %v1669 = vadd.f32 %v1655, %v1668
        %1670 = vdwg.mxu0
        %1671 = vmatpush.bf16.msra.mxu0 %v1236
        %1672 = vmatpush.bf16.msra.mxu0 %v1234
        %1673 = vmatpush.bf16.msra.mxu0 %v1232
        %1674 = vmatpush.bf16.msra.mxu0 %v1230
        %1675 = vmatpush.bf16.msra.mxu0 %v1228
        %1676 = vmatpush.bf16.msra.mxu0 %v1226
        %1677 = vmatpush.bf16.msra.mxu0 %v1224
        %1678 = vmatpush.bf16.msra.mxu0 %v1222
        %1679 = vmatmul.bf16.gmra.mxu0 %v646
        %v1680 = vpop.f32.mrf.mxu0
        %v1681 = vadd.f32 %v1667, %v1680
        %v1682 = vpop.f32.mrf.mxu0
        %v1683 = vadd.f32 %v1669, %v1682
        %1684 = vdwg.mxu0
        %1685 = vmatpush.bf16.msra.mxu0 %v1252
        %1686 = vmatpush.bf16.msra.mxu0 %v1250
        %1687 = vmatpush.bf16.msra.mxu0 %v1248
        %1688 = vmatpush.bf16.msra.mxu0 %v1246
        %1689 = vmatpush.bf16.msra.mxu0 %v1244
        %1690 = vmatpush.bf16.msra.mxu0 %v1242
        %1691 = vmatpush.bf16.msra.mxu0 %v1240
        %1692 = vmatpush.bf16.msra.mxu0 %v1238
        %1693 = vmatmul.bf16.gmra.mxu0 %v647
        %v1694 = vpop.f32.mrf.mxu0
        %v1695 = vadd.f32 %v1681, %v1694
        %v1696 = vpop.f32.mrf.mxu0
        %v1697 = vadd.f32 %v1683, %v1696
        %1698 = vdwg.mxu0
        %1699 = vmatpush.bf16.msra.mxu0 %v1268
        %1700 = vmatpush.bf16.msra.mxu0 %v1266
        %1701 = vmatpush.bf16.msra.mxu0 %v1264
        %1702 = vmatpush.bf16.msra.mxu0 %v1262
        %1703 = vmatpush.bf16.msra.mxu0 %v1260
        %1704 = vmatpush.bf16.msra.mxu0 %v1258
        %1705 = vmatpush.bf16.msra.mxu0 %v1256
        %1706 = vmatpush.bf16.msra.mxu0 %v1254
        %1707 = vmatmul.bf16.gmra.mxu0 %v648
        %v1708 = vpop.f32.mrf.mxu0
        %v1709 = vadd.f32 %v1695, %v1708
        %v1710 = vpop.f32.mrf.mxu0
        %v1711 = vadd.f32 %v1697, %v1710
        %1712 = vdwg.mxu0
        %1713 = vmatpush.bf16.msra.mxu0 %v1284
        %1714 = vmatpush.bf16.msra.mxu0 %v1282
        %1715 = vmatpush.bf16.msra.mxu0 %v1280
        %1716 = vmatpush.bf16.msra.mxu0 %v1278
        %1717 = vmatpush.bf16.msra.mxu0 %v1276
        %1718 = vmatpush.bf16.msra.mxu0 %v1274
        %1719 = vmatpush.bf16.msra.mxu0 %v1272
        %1720 = vmatpush.bf16.msra.mxu0 %v1270
        %1721 = vmatmul.bf16.gmra.mxu0 %v649
        %v1722 = vpop.f32.mrf.mxu0
        %v1723 = vadd.f32 %v1709, %v1722
        %v1724 = vpop.f32.mrf.mxu0
        %v1725 = vadd.f32 %v1711, %v1724
        %1726 = vdwg.mxu0
        %1727 = vmatpush.bf16.msra.mxu0 %v1300
        %1728 = vmatpush.bf16.msra.mxu0 %v1298
        %1729 = vmatpush.bf16.msra.mxu0 %v1296
        %1730 = vmatpush.bf16.msra.mxu0 %v1294
        %1731 = vmatpush.bf16.msra.mxu0 %v1292
        %1732 = vmatpush.bf16.msra.mxu0 %v1290
        %1733 = vmatpush.bf16.msra.mxu0 %v1288
        %1734 = vmatpush.bf16.msra.mxu0 %v1286
        %1735 = vmatmul.bf16.gmra.mxu0 %v650
        %v1736 = vpop.f32.mrf.mxu0
        %v1737 = vadd.f32 %v1723, %v1736
        %v1738 = vpop.f32.mrf.mxu0
        %v1739 = vadd.f32 %v1725, %v1738
        %1740 = vdwg.mxu0
        %v1741 = vadd.f32 %v1597, 0.0
        %v1742 = vadd.f32 %v1737, 0.0
        %v1743 = vadd.f32 %v1599, 0.0
        %v1744 = vadd.f32 %v1739, 0.0
        %vm1745 = vcmp.gt.f32.partialorder %v1741, 1.0
        %vm1746 = vcmp.gt.f32.partialorder %v1742, 1.0
        %vm1747 = vcmp.gt.f32.partialorder %v1743, 1.0
        %vm1748 = vcmp.gt.f32.partialorder %v1744, 1.0
        %v1749 = vsel %vm1745, 1, 0
        %v1750 = vsel %vm1746, 1, 0
        %v1751 = vsel %vm1747, 1, 0
        %v1752 = vsel %vm1748, 1, 0
        %v1753 = vcvt.s32.f32 %v1749
        %v1754 = vcvt.s32.f32 %v1750
        %v1755 = vcvt.s32.f32 %v1751
        %v1756 = vcvt.s32.f32 %v1752
        %v1757 = vpack.c.bf16 %v1754, %v1753
        %v1758 = vpack.c.bf16 %v1756, %v1755
        %1759 = vst [vmem:[#allocation2] sm:$0xff] %v1757
        %1760 = vst [vmem:[#allocation2 + $0x8] sm:$0xff] %v1758
        %v1761 = vmul.f32 %v1741, 0.95
        %v1762 = vmul.f32 %v1742, 0.95
        %v1763 = vmul.f32 %v1743, 0.95
        %v1764 = vmul.f32 %v1744, 0.95
        %v1765 = vadd.f32 %v1761, %v1597
        %v1766 = vadd.f32 %v1762, %v1737
        %v1767 = vadd.f32 %v1763, %v1599
        %v1768 = vadd.f32 %v1764, %v1739
        %v1769 = vsub.f32 %v1765, %v1753
        %v1770 = vsub.f32 %v1766, %v1754
        %v1771 = vsub.f32 %v1767, %v1755
        %v1772 = vsub.f32 %v1768, %v1756
        %vm1773 = vcmp.gt.f32.partialorder %v1769, 1.0
        %vm1774 = vcmp.gt.f32.partialorder %v1770, 1.0
        %vm1775 = vcmp.gt.f32.partialorder %v1771, 1.0
        %vm1776 = vcmp.gt.f32.partialorder %v1772, 1.0
        %v1777 = vsel %vm1773, 1, 0
        %v1778 = vsel %vm1774, 1, 0
        %v1779 = vsel %vm1775, 1, 0
        %v1780 = vsel %vm1776, 1, 0
        %v1781 = vcvt.s32.f32 %v1777
        %v1782 = vcvt.s32.f32 %v1778
        %v1783 = vcvt.s32.f32 %v1779
        %v1784 = vcvt.s32.f32 %v1780
        %v1785 = vpack.c.bf16 %v1782, %v1781
        %v1786 = vpack.c.bf16 %v1784, %v1783
        %1787 = vst [vmem:[#allocation2 + $0x10] sm:$0xff] %v1785
        %1788 = vst [vmem:[#allocation2 + $0x18] sm:$0xff] %v1786
        %v1789 = vmul.f32 %v1769, 0.95
        %v1790 = vmul.f32 %v1770, 0.95
        %v1791 = vmul.f32 %v1771, 0.95
        %v1792 = vmul.f32 %v1772, 0.95
        %v1793 = vadd.f32 %v1789, %v1597
        %v1794 = vadd.f32 %v1790, %v1737
        %v1795 = vadd.f32 %v1791, %v1599
        %v1796 = vadd.f32 %v1792, %v1739
        %v1797 = vsub.f32 %v1793, %v1781
        %v1798 = vsub.f32 %v1794, %v1782
        %v1799 = vsub.f32 %v1795, %v1783
        %v1800 = vsub.f32 %v1796, %v1784
        %vm1801 = vcmp.gt.f32.partialorder %v1797, 1.0
        %vm1802 = vcmp.gt.f32.partialorder %v1798, 1.0
        %vm1803 = vcmp.gt.f32.partialorder %v1799, 1.0
        %vm1804 = vcmp.gt.f32.partialorder %v1800, 1.0
        %v1805 = vsel %vm1801, 1, 0
        %v1806 = vsel %vm1802, 1, 0
        %v1807 = vsel %vm1803, 1, 0
        %v1808 = vsel %vm1804, 1, 0
        %v1809 = vcvt.s32.f32 %v1805
        %v1810 = vcvt.s32.f32 %v1806
        %v1811 = vcvt.s32.f32 %v1807
        %v1812 = vcvt.s32.f32 %v1808
        %v1813 = vpack.c.bf16 %v1810, %v1809
        %v1814 = vpack.c.bf16 %v1812, %v1811
        %1815 = vst [vmem:[#allocation2 + $0x20] sm:$0xff] %v1813
        %1816 = vst [vmem:[#allocation2 + $0x28] sm:$0xff] %v1814
        %v1817 = vmul.f32 %v1797, 0.95
        %v1818 = vmul.f32 %v1798, 0.95
        %v1819 = vmul.f32 %v1799, 0.95
        %v1820 = vmul.f32 %v1800, 0.95
        %v1821 = vadd.f32 %v1817, %v1597
        %v1822 = vadd.f32 %v1818, %v1737
        %v1823 = vadd.f32 %v1819, %v1599
        %v1824 = vadd.f32 %v1820, %v1739
        %v1825 = vsub.f32 %v1821, %v1809
        %v1826 = vsub.f32 %v1822, %v1810
        %v1827 = vsub.f32 %v1823, %v1811
        %v1828 = vsub.f32 %v1824, %v1812
        %vm1829 = vcmp.gt.f32.partialorder %v1825, 1.0
        %vm1830 = vcmp.gt.f32.partialorder %v1826, 1.0
        %vm1831 = vcmp.gt.f32.partialorder %v1827, 1.0
        %vm1832 = vcmp.gt.f32.partialorder %v1828, 1.0
        %v1833 = vsel %vm1829, 1, 0
        %v1834 = vsel %vm1830, 1, 0
        %v1835 = vsel %vm1831, 1, 0
        %v1836 = vsel %vm1832, 1, 0
        %v1837 = vcvt.s32.f32 %v1833
        %v1838 = vcvt.s32.f32 %v1834
        %v1839 = vcvt.s32.f32 %v1835
        %v1840 = vcvt.s32.f32 %v1836
        %v1841 = vpack.c.bf16 %v1838, %v1837
        %v1842 = vpack.c.bf16 %v1840, %v1839
        %1843 = vst [vmem:[#allocation2 + $0x30] sm:$0xff] %v1841
        %1844 = vst [vmem:[#allocation2 + $0x38] sm:$0xff] %v1842
        %v1845 = vmul.f32 %v1825, 0.95
        %v1846 = vmul.f32 %v1826, 0.95
        %v1847 = vmul.f32 %v1827, 0.95
        %v1848 = vmul.f32 %v1828, 0.95
        %v1849 = vadd.f32 %v1845, %v1597
        %v1850 = vadd.f32 %v1846, %v1737
        %v1851 = vadd.f32 %v1847, %v1599
        %v1852 = vadd.f32 %v1848, %v1739
        %v1853 = vsub.f32 %v1849, %v1837
        %v1854 = vsub.f32 %v1850, %v1838
        %v1855 = vsub.f32 %v1851, %v1839
        %v1856 = vsub.f32 %v1852, %v1840
        %vm1857 = vcmp.gt.f32.partialorder %v1853, 1.0
        %vm1858 = vcmp.gt.f32.partialorder %v1854, 1.0
        %vm1859 = vcmp.gt.f32.partialorder %v1855, 1.0
        %vm1860 = vcmp.gt.f32.partialorder %v1856, 1.0
        %v1861 = vsel %vm1857, 1, 0
        %v1862 = vsel %vm1858, 1, 0
        %v1863 = vsel %vm1859, 1, 0
        %v1864 = vsel %vm1860, 1, 0
        %v1865 = vcvt.s32.f32 %v1861
        %v1866 = vcvt.s32.f32 %v1862
        %v1867 = vcvt.s32.f32 %v1863
        %v1868 = vcvt.s32.f32 %v1864
        %v1869 = vpack.c.bf16 %v1866, %v1865
        %v1870 = vpack.c.bf16 %v1868, %v1867
        %1871 = vst [vmem:[#allocation2 + $0x40] sm:$0xff] %v1869
        %1872 = vst [vmem:[#allocation2 + $0x48] sm:$0xff] %v1870
        %v1873 = vmul.f32 %v1853, 0.95
        %v1874 = vmul.f32 %v1854, 0.95
        %v1875 = vmul.f32 %v1855, 0.95
        %v1876 = vmul.f32 %v1856, 0.95
        %v1877 = vadd.f32 %v1873, %v1597
        %v1878 = vadd.f32 %v1874, %v1737
        %v1879 = vadd.f32 %v1875, %v1599
        %v1880 = vadd.f32 %v1876, %v1739
        %v1881 = vsub.f32 %v1877, %v1865
        %v1882 = vsub.f32 %v1878, %v1866
        %v1883 = vsub.f32 %v1879, %v1867
        %v1884 = vsub.f32 %v1880, %v1868
        %vm1885 = vcmp.gt.f32.partialorder %v1881, 1.0
        %vm1886 = vcmp.gt.f32.partialorder %v1882, 1.0
        %vm1887 = vcmp.gt.f32.partialorder %v1883, 1.0
        %vm1888 = vcmp.gt.f32.partialorder %v1884, 1.0
        %v1889 = vsel %vm1885, 1, 0
        %v1890 = vsel %vm1886, 1, 0
        %v1891 = vsel %vm1887, 1, 0
        %v1892 = vsel %vm1888, 1, 0
        %v1893 = vcvt.s32.f32 %v1889
        %v1894 = vcvt.s32.f32 %v1890
        %v1895 = vcvt.s32.f32 %v1891
        %v1896 = vcvt.s32.f32 %v1892
        %v1897 = vpack.c.bf16 %v1894, %v1893
        %v1898 = vpack.c.bf16 %v1896, %v1895
        %1899 = vst [vmem:[#allocation2 + $0x50] sm:$0xff] %v1897
        %1900 = vst [vmem:[#allocation2 + $0x58] sm:$0xff] %v1898
        %v1901 = vmul.f32 %v1881, 0.95
        %v1902 = vmul.f32 %v1882, 0.95
        %v1903 = vmul.f32 %v1883, 0.95
        %v1904 = vmul.f32 %v1884, 0.95
        %v1905 = vadd.f32 %v1901, %v1597
        %v1906 = vadd.f32 %v1902, %v1737
        %v1907 = vadd.f32 %v1903, %v1599
        %v1908 = vadd.f32 %v1904, %v1739
        %v1909 = vsub.f32 %v1905, %v1893
        %v1910 = vsub.f32 %v1906, %v1894
        %v1911 = vsub.f32 %v1907, %v1895
        %v1912 = vsub.f32 %v1908, %v1896
        %vm1913 = vcmp.gt.f32.partialorder %v1909, 1.0
        %vm1914 = vcmp.gt.f32.partialorder %v1910, 1.0
        %vm1915 = vcmp.gt.f32.partialorder %v1911, 1.0
        %vm1916 = vcmp.gt.f32.partialorder %v1912, 1.0
        %v1917 = vsel %vm1913, 1, 0
        %v1918 = vsel %vm1914, 1, 0
        %v1919 = vsel %vm1915, 1, 0
        %v1920 = vsel %vm1916, 1, 0
        %v1921 = vcvt.s32.f32 %v1917
        %v1922 = vcvt.s32.f32 %v1918
        %v1923 = vcvt.s32.f32 %v1919
        %v1924 = vcvt.s32.f32 %v1920
        %v1925 = vpack.c.bf16 %v1922, %v1921
        %v1926 = vpack.c.bf16 %v1924, %v1923
        %1927 = vst [vmem:[#allocation2 + $0x60] sm:$0xff] %v1925
        %1928 = vst [vmem:[#allocation2 + $0x68] sm:$0xff] %v1926
        %v1929 = vmul.f32 %v1909, 0.95
        %v1930 = vmul.f32 %v1910, 0.95
        %v1931 = vmul.f32 %v1911, 0.95
        %v1932 = vmul.f32 %v1912, 0.95
        %v1933 = vadd.f32 %v1929, %v1597
        %v1934 = vadd.f32 %v1930, %v1737
        %v1935 = vadd.f32 %v1931, %v1599
        %v1936 = vadd.f32 %v1932, %v1739
        %v1937 = vsub.f32 %v1933, %v1921
        %v1938 = vsub.f32 %v1934, %v1922
        %v1939 = vsub.f32 %v1935, %v1923
        %v1940 = vsub.f32 %v1936, %v1924
        %vm1941 = vcmp.gt.f32.partialorder %v1937, 1.0
        %vm1942 = vcmp.gt.f32.partialorder %v1938, 1.0
        %vm1943 = vcmp.gt.f32.partialorder %v1939, 1.0
        %vm1944 = vcmp.gt.f32.partialorder %v1940, 1.0
        %v1945 = vsel %vm1941, 1, 0
        %v1946 = vsel %vm1942, 1, 0
        %v1947 = vsel %vm1943, 1, 0
        %v1948 = vsel %vm1944, 1, 0
        %v1949 = vcvt.s32.f32 %v1945
        %v1950 = vcvt.s32.f32 %v1946
        %v1951 = vcvt.s32.f32 %v1947
        %v1952 = vcvt.s32.f32 %v1948
        %v1953 = vpack.c.bf16 %v1950, %v1949
        %v1954 = vpack.c.bf16 %v1952, %v1951
        %1955 = vst [vmem:[#allocation2 + $0x70] sm:$0xff] %v1953
        %1956 = vst [vmem:[#allocation2 + $0x78] sm:$0xff] %v1954
        %v1957 = vmul.f32 %v1937, 0.95
        %v1958 = vmul.f32 %v1938, 0.95
        %v1959 = vmul.f32 %v1939, 0.95
        %v1960 = vmul.f32 %v1940, 0.95
        %v1961 = vadd.f32 %v1957, %v1597
        %v1962 = vadd.f32 %v1958, %v1737
        %v1963 = vadd.f32 %v1959, %v1599
        %v1964 = vadd.f32 %v1960, %v1739
        %v1965 = vsub.f32 %v1961, %v1949
        %v1966 = vsub.f32 %v1962, %v1950
        %v1967 = vsub.f32 %v1963, %v1951
        %v1968 = vsub.f32 %v1964, %v1952
        %vm1969 = vcmp.gt.f32.partialorder %v1965, 1.0
        %vm1970 = vcmp.gt.f32.partialorder %v1966, 1.0
        %vm1971 = vcmp.gt.f32.partialorder %v1967, 1.0
        %vm1972 = vcmp.gt.f32.partialorder %v1968, 1.0
        %v1973 = vsel %vm1969, 1, 0
        %v1974 = vsel %vm1970, 1, 0
        %v1975 = vsel %vm1971, 1, 0
        %v1976 = vsel %vm1972, 1, 0
        %v1977 = vcvt.s32.f32 %v1973
        %v1978 = vcvt.s32.f32 %v1974
        %v1979 = vcvt.s32.f32 %v1975
        %v1980 = vcvt.s32.f32 %v1976
        %v1981 = vpack.c.bf16 %v1978, %v1977
        %v1982 = vpack.c.bf16 %v1980, %v1979
        %1983 = vst [vmem:[#allocation2 + $0x80] sm:$0xff] %v1981
        %1984 = vst [vmem:[#allocation2 + $0x88] sm:$0xff] %v1982
        %v1985 = vmul.f32 %v1965, 0.95
        %v1986 = vmul.f32 %v1966, 0.95
        %v1987 = vmul.f32 %v1967, 0.95
        %v1988 = vmul.f32 %v1968, 0.95
        %v1989 = vadd.f32 %v1985, %v1597
        %v1990 = vadd.f32 %v1986, %v1737
        %v1991 = vadd.f32 %v1987, %v1599
        %v1992 = vadd.f32 %v1988, %v1739
        %v1993 = vsub.f32 %v1989, %v1977
        %v1994 = vsub.f32 %v1990, %v1978
        %v1995 = vsub.f32 %v1991, %v1979
        %v1996 = vsub.f32 %v1992, %v1980
        %vm1997 = vcmp.gt.f32.partialorder %v1993, 1.0
        %vm1998 = vcmp.gt.f32.partialorder %v1994, 1.0
        %vm1999 = vcmp.gt.f32.partialorder %v1995, 1.0
        %vm2000 = vcmp.gt.f32.partialorder %v1996, 1.0
        %v2001 = vsel %vm1997, 1, 0
        %v2002 = vsel %vm1998, 1, 0
        %v2003 = vsel %vm1999, 1, 0
        %v2004 = vsel %vm2000, 1, 0
        %v2005 = vcvt.s32.f32 %v2001
        %v2006 = vcvt.s32.f32 %v2002
        %v2007 = vcvt.s32.f32 %v2003
        %v2008 = vcvt.s32.f32 %v2004
        %v2009 = vpack.c.bf16 %v2006, %v2005
        %v2010 = vpack.c.bf16 %v2008, %v2007
        %2011 = vst [vmem:[#allocation2 + $0x90] sm:$0xff] %v2009
        %2012 = vst [vmem:[#allocation2 + $0x98] sm:$0xff] %v2010
        %v2013 = vmul.f32 %v1993, 0.95
        %v2014 = vmul.f32 %v1994, 0.95
        %v2015 = vmul.f32 %v1995, 0.95
        %v2016 = vmul.f32 %v1996, 0.95
        %v2017 = vadd.f32 %v2013, %v1597
        %v2018 = vadd.f32 %v2014, %v1737
        %v2019 = vadd.f32 %v2015, %v1599
        %v2020 = vadd.f32 %v2016, %v1739
        %v2021 = vsub.f32 %v2017, %v2005
        %v2022 = vsub.f32 %v2018, %v2006
        %v2023 = vsub.f32 %v2019, %v2007
        %v2024 = vsub.f32 %v2020, %v2008
        %vm2025 = vcmp.gt.f32.partialorder %v2021, 1.0
        %vm2026 = vcmp.gt.f32.partialorder %v2022, 1.0
        %vm2027 = vcmp.gt.f32.partialorder %v2023, 1.0
        %vm2028 = vcmp.gt.f32.partialorder %v2024, 1.0
        %v2029 = vsel %vm2025, 1, 0
        %v2030 = vsel %vm2026, 1, 0
        %v2031 = vsel %vm2027, 1, 0
        %v2032 = vsel %vm2028, 1, 0
        %v2033 = vcvt.s32.f32 %v2029
        %v2034 = vcvt.s32.f32 %v2030
        %v2035 = vcvt.s32.f32 %v2031
        %v2036 = vcvt.s32.f32 %v2032
        %v2037 = vpack.c.bf16 %v2034, %v2033
        %v2038 = vpack.c.bf16 %v2036, %v2035
        %2039 = vst [vmem:[#allocation2 + $0xa0] sm:$0xff] %v2037
        %2040 = vst [vmem:[#allocation2 + $0xa8] sm:$0xff] %v2038
        %v2041 = vmul.f32 %v2021, 0.95
        %v2042 = vmul.f32 %v2022, 0.95
        %v2043 = vmul.f32 %v2023, 0.95
        %v2044 = vmul.f32 %v2024, 0.95
        %v2045 = vadd.f32 %v2041, %v1597
        %v2046 = vadd.f32 %v2042, %v1737
        %v2047 = vadd.f32 %v2043, %v1599
        %v2048 = vadd.f32 %v2044, %v1739
        %v2049 = vsub.f32 %v2045, %v2033
        %v2050 = vsub.f32 %v2046, %v2034
        %v2051 = vsub.f32 %v2047, %v2035
        %v2052 = vsub.f32 %v2048, %v2036
        %vm2053 = vcmp.gt.f32.partialorder %v2049, 1.0
        %vm2054 = vcmp.gt.f32.partialorder %v2050, 1.0
        %vm2055 = vcmp.gt.f32.partialorder %v2051, 1.0
        %vm2056 = vcmp.gt.f32.partialorder %v2052, 1.0
        %v2057 = vsel %vm2053, 1, 0
        %v2058 = vsel %vm2054, 1, 0
        %v2059 = vsel %vm2055, 1, 0
        %v2060 = vsel %vm2056, 1, 0
        %v2061 = vcvt.s32.f32 %v2057
        %v2062 = vcvt.s32.f32 %v2058
        %v2063 = vcvt.s32.f32 %v2059
        %v2064 = vcvt.s32.f32 %v2060
        %v2065 = vpack.c.bf16 %v2062, %v2061
        %v2066 = vpack.c.bf16 %v2064, %v2063
        %2067 = vst [vmem:[#allocation2 + $0xb0] sm:$0xff] %v2065
        %2068 = vst [vmem:[#allocation2 + $0xb8] sm:$0xff] %v2066
        %v2069 = vmul.f32 %v2049, 0.95
        %v2070 = vmul.f32 %v2050, 0.95
        %v2071 = vmul.f32 %v2051, 0.95
        %v2072 = vmul.f32 %v2052, 0.95
        %v2073 = vadd.f32 %v2069, %v1597
        %v2074 = vadd.f32 %v2070, %v1737
        %v2075 = vadd.f32 %v2071, %v1599
        %v2076 = vadd.f32 %v2072, %v1739
        %v2077 = vsub.f32 %v2073, %v2061
        %v2078 = vsub.f32 %v2074, %v2062
        %v2079 = vsub.f32 %v2075, %v2063
        %v2080 = vsub.f32 %v2076, %v2064
        %vm2081 = vcmp.gt.f32.partialorder %v2077, 1.0
        %vm2082 = vcmp.gt.f32.partialorder %v2078, 1.0
        %vm2083 = vcmp.gt.f32.partialorder %v2079, 1.0
        %vm2084 = vcmp.gt.f32.partialorder %v2080, 1.0
        %v2085 = vsel %vm2081, 1, 0
        %v2086 = vsel %vm2082, 1, 0
        %v2087 = vsel %vm2083, 1, 0
        %v2088 = vsel %vm2084, 1, 0
        %v2089 = vcvt.s32.f32 %v2085
        %v2090 = vcvt.s32.f32 %v2086
        %v2091 = vcvt.s32.f32 %v2087
        %v2092 = vcvt.s32.f32 %v2088
        %v2093 = vpack.c.bf16 %v2090, %v2089
        %v2094 = vpack.c.bf16 %v2092, %v2091
        %2095 = vst [vmem:[#allocation2 + $0xc0] sm:$0xff] %v2093
        %2096 = vst [vmem:[#allocation2 + $0xc8] sm:$0xff] %v2094
        %v2097 = vmul.f32 %v2077, 0.95
        %v2098 = vmul.f32 %v2078, 0.95
        %v2099 = vmul.f32 %v2079, 0.95
        %v2100 = vmul.f32 %v2080, 0.95
        %v2101 = vadd.f32 %v2097, %v1597
        %v2102 = vadd.f32 %v2098, %v1737
        %v2103 = vadd.f32 %v2099, %v1599
        %v2104 = vadd.f32 %v2100, %v1739
        %v2105 = vsub.f32 %v2101, %v2089
        %v2106 = vsub.f32 %v2102, %v2090
        %v2107 = vsub.f32 %v2103, %v2091
        %v2108 = vsub.f32 %v2104, %v2092
        %vm2109 = vcmp.gt.f32.partialorder %v2105, 1.0
        %vm2110 = vcmp.gt.f32.partialorder %v2106, 1.0
        %vm2111 = vcmp.gt.f32.partialorder %v2107, 1.0
        %vm2112 = vcmp.gt.f32.partialorder %v2108, 1.0
        %v2113 = vsel %vm2109, 1, 0
        %v2114 = vsel %vm2110, 1, 0
        %v2115 = vsel %vm2111, 1, 0
        %v2116 = vsel %vm2112, 1, 0
        %v2117 = vcvt.s32.f32 %v2113
        %v2118 = vcvt.s32.f32 %v2114
        %v2119 = vcvt.s32.f32 %v2115
        %v2120 = vcvt.s32.f32 %v2116
        %v2121 = vpack.c.bf16 %v2118, %v2117
        %v2122 = vpack.c.bf16 %v2120, %v2119
        %2123 = vst [vmem:[#allocation2 + $0xd0] sm:$0xff] %v2121
        %2124 = vst [vmem:[#allocation2 + $0xd8] sm:$0xff] %v2122
        %v2125 = vmul.f32 %v2105, 0.95
        %v2126 = vmul.f32 %v2106, 0.95
        %v2127 = vmul.f32 %v2107, 0.95
        %v2128 = vmul.f32 %v2108, 0.95
        %v2129 = vadd.f32 %v2125, %v1597
        %v2130 = vadd.f32 %v2126, %v1737
        %v2131 = vadd.f32 %v2127, %v1599
        %v2132 = vadd.f32 %v2128, %v1739
        %v2133 = vsub.f32 %v2129, %v2117
        %v2134 = vsub.f32 %v2130, %v2118
        %v2135 = vsub.f32 %v2131, %v2119
        %v2136 = vsub.f32 %v2132, %v2120
        %vm2137 = vcmp.gt.f32.partialorder %v2133, 1.0
        %vm2138 = vcmp.gt.f32.partialorder %v2134, 1.0
        %vm2139 = vcmp.gt.f32.partialorder %v2135, 1.0
        %vm2140 = vcmp.gt.f32.partialorder %v2136, 1.0
        %v2141 = vsel %vm2137, 1, 0
        %v2142 = vsel %vm2138, 1, 0
        %v2143 = vsel %vm2139, 1, 0
        %v2144 = vsel %vm2140, 1, 0
        %v2145 = vcvt.s32.f32 %v2141
        %v2146 = vcvt.s32.f32 %v2142
        %v2147 = vcvt.s32.f32 %v2143
        %v2148 = vcvt.s32.f32 %v2144
        %v2149 = vpack.c.bf16 %v2146, %v2145
        %v2150 = vpack.c.bf16 %v2148, %v2147
        %2151 = vst [vmem:[#allocation2 + $0xe0] sm:$0xff] %v2149
        %2152 = vst [vmem:[#allocation2 + $0xe8] sm:$0xff] %v2150
        %v2153 = vmul.f32 %v2133, 0.95
        %v2154 = vmul.f32 %v2134, 0.95
        %v2155 = vmul.f32 %v2135, 0.95
        %v2156 = vmul.f32 %v2136, 0.95
        %v2157 = vadd.f32 %v2153, %v1597
        %v2158 = vadd.f32 %v2154, %v1737
        %v2159 = vadd.f32 %v2155, %v1599
        %v2160 = vadd.f32 %v2156, %v1739
        %v2161 = vsub.f32 %v2157, %v2145
        %v2162 = vsub.f32 %v2158, %v2146
        %v2163 = vsub.f32 %v2159, %v2147
        %v2164 = vsub.f32 %v2160, %v2148
        %vm2165 = vcmp.gt.f32.partialorder %v2161, 1.0
        %vm2166 = vcmp.gt.f32.partialorder %v2162, 1.0
        %vm2167 = vcmp.gt.f32.partialorder %v2163, 1.0
        %vm2168 = vcmp.gt.f32.partialorder %v2164, 1.0
        %v2169 = vsel %vm2165, 1, 0
        %v2170 = vsel %vm2166, 1, 0
        %v2171 = vsel %vm2167, 1, 0
        %v2172 = vsel %vm2168, 1, 0
        %v2173 = vcvt.s32.f32 %v2169
        %v2174 = vcvt.s32.f32 %v2170
        %v2175 = vcvt.s32.f32 %v2171
        %v2176 = vcvt.s32.f32 %v2172
        %v2177 = vpack.c.bf16 %v2174, %v2173
        %v2178 = vpack.c.bf16 %v2176, %v2175
        %2179 = vst [vmem:[#allocation2 + $0xf0] sm:$0xff] %v2177
        %2180 = vst [vmem:[#allocation2 + $0xf8] sm:$0xff] %v2178
        %v2181 = vmul.f32 %v2161, 0.95
        %v2182 = vmul.f32 %v2162, 0.95
        %v2183 = vmul.f32 %v2163, 0.95
        %v2184 = vmul.f32 %v2164, 0.95
        %v2185 = vadd.f32 %v2181, %v1597
        %v2186 = vadd.f32 %v2182, %v1737
        %v2187 = vadd.f32 %v2183, %v1599
        %v2188 = vadd.f32 %v2184, %v1739
        %v2189 = vsub.f32 %v2185, %v2173
        %v2190 = vsub.f32 %v2186, %v2174
        %v2191 = vsub.f32 %v2187, %v2175
        %v2192 = vsub.f32 %v2188, %v2176
        %vm2193 = vcmp.gt.f32.partialorder %v2189, 1.0
        %vm2194 = vcmp.gt.f32.partialorder %v2190, 1.0
        %vm2195 = vcmp.gt.f32.partialorder %v2191, 1.0
        %vm2196 = vcmp.gt.f32.partialorder %v2192, 1.0
        %v2197 = vsel %vm2193, 1, 0
        %v2198 = vsel %vm2194, 1, 0
        %v2199 = vsel %vm2195, 1, 0
        %v2200 = vsel %vm2196, 1, 0
        %v2201 = vcvt.s32.f32 %v2197
        %v2202 = vcvt.s32.f32 %v2198
        %v2203 = vcvt.s32.f32 %v2199
        %v2204 = vcvt.s32.f32 %v2200
        %v2205 = vpack.c.bf16 %v2202, %v2201
        %v2206 = vpack.c.bf16 %v2204, %v2203
        %2207 = vst [vmem:[#allocation2 + $0x100] sm:$0xff] %v2205
        %2208 = vst [vmem:[#allocation2 + $0x108] sm:$0xff] %v2206
        %v2209 = vmul.f32 %v2189, 0.95
        %v2210 = vmul.f32 %v2190, 0.95
        %v2211 = vmul.f32 %v2191, 0.95
        %v2212 = vmul.f32 %v2192, 0.95
        %v2213 = vadd.f32 %v2209, %v1597
        %v2214 = vadd.f32 %v2210, %v1737
        %v2215 = vadd.f32 %v2211, %v1599
        %v2216 = vadd.f32 %v2212, %v1739
        %v2217 = vsub.f32 %v2213, %v2201
        %v2218 = vsub.f32 %v2214, %v2202
        %v2219 = vsub.f32 %v2215, %v2203
        %v2220 = vsub.f32 %v2216, %v2204
        %vm2221 = vcmp.gt.f32.partialorder %v2217, 1.0
        %vm2222 = vcmp.gt.f32.partialorder %v2218, 1.0
        %vm2223 = vcmp.gt.f32.partialorder %v2219, 1.0
        %vm2224 = vcmp.gt.f32.partialorder %v2220, 1.0
        %v2225 = vsel %vm2221, 1, 0
        %v2226 = vsel %vm2222, 1, 0
        %v2227 = vsel %vm2223, 1, 0
        %v2228 = vsel %vm2224, 1, 0
        %v2229 = vcvt.s32.f32 %v2225
        %v2230 = vcvt.s32.f32 %v2226
        %v2231 = vcvt.s32.f32 %v2227
        %v2232 = vcvt.s32.f32 %v2228
        %v2233 = vpack.c.bf16 %v2230, %v2229
        %v2234 = vpack.c.bf16 %v2232, %v2231
        %2235 = vst [vmem:[#allocation2 + $0x110] sm:$0xff] %v2233
        %2236 = vst [vmem:[#allocation2 + $0x118] sm:$0xff] %v2234
        %v2237 = vmul.f32 %v2217, 0.95
        %v2238 = vmul.f32 %v2218, 0.95
        %v2239 = vmul.f32 %v2219, 0.95
        %v2240 = vmul.f32 %v2220, 0.95
        %v2241 = vadd.f32 %v2237, %v1597
        %v2242 = vadd.f32 %v2238, %v1737
        %v2243 = vadd.f32 %v2239, %v1599
        %v2244 = vadd.f32 %v2240, %v1739
        %v2245 = vsub.f32 %v2241, %v2229
        %v2246 = vsub.f32 %v2242, %v2230
        %v2247 = vsub.f32 %v2243, %v2231
        %v2248 = vsub.f32 %v2244, %v2232
        %vm2249 = vcmp.gt.f32.partialorder %v2245, 1.0
        %vm2250 = vcmp.gt.f32.partialorder %v2246, 1.0
        %vm2251 = vcmp.gt.f32.partialorder %v2247, 1.0
        %vm2252 = vcmp.gt.f32.partialorder %v2248, 1.0
        %v2253 = vsel %vm2249, 1, 0
        %v2254 = vsel %vm2250, 1, 0
        %v2255 = vsel %vm2251, 1, 0
        %v2256 = vsel %vm2252, 1, 0
        %v2257 = vcvt.s32.f32 %v2253
        %v2258 = vcvt.s32.f32 %v2254
        %v2259 = vcvt.s32.f32 %v2255
        %v2260 = vcvt.s32.f32 %v2256
        %v2261 = vpack.c.bf16 %v2258, %v2257
        %v2262 = vpack.c.bf16 %v2260, %v2259
        %2263 = vst [vmem:[#allocation2 + $0x120] sm:$0xff] %v2261
        %2264 = vst [vmem:[#allocation2 + $0x128] sm:$0xff] %v2262
        %v2265 = vmul.f32 %v2245, 0.95
        %v2266 = vmul.f32 %v2246, 0.95
        %v2267 = vmul.f32 %v2247, 0.95
        %v2268 = vmul.f32 %v2248, 0.95
        %v2269 = vadd.f32 %v2265, %v1597
        %v2270 = vadd.f32 %v2266, %v1737
        %v2271 = vadd.f32 %v2267, %v1599
        %v2272 = vadd.f32 %v2268, %v1739
        %v2273 = vsub.f32 %v2269, %v2257
        %v2274 = vsub.f32 %v2270, %v2258
        %v2275 = vsub.f32 %v2271, %v2259
        %v2276 = vsub.f32 %v2272, %v2260
        %vm2277 = vcmp.gt.f32.partialorder %v2273, 1.0
        %vm2278 = vcmp.gt.f32.partialorder %v2274, 1.0
        %vm2279 = vcmp.gt.f32.partialorder %v2275, 1.0
        %vm2280 = vcmp.gt.f32.partialorder %v2276, 1.0
        %v2281 = vsel %vm2277, 1, 0
        %v2282 = vsel %vm2278, 1, 0
        %v2283 = vsel %vm2279, 1, 0
        %v2284 = vsel %vm2280, 1, 0
        %v2285 = vcvt.s32.f32 %v2281
        %v2286 = vcvt.s32.f32 %v2282
        %v2287 = vcvt.s32.f32 %v2283
        %v2288 = vcvt.s32.f32 %v2284
        %v2289 = vpack.c.bf16 %v2286, %v2285
        %v2290 = vpack.c.bf16 %v2288, %v2287
        %2291 = vst [vmem:[#allocation2 + $0x130] sm:$0xff] %v2289
        %2292 = vst [vmem:[#allocation2 + $0x138] sm:$0xff] %v2290
        %v2293 = vmul.f32 %v2273, 0.95
        %v2294 = vmul.f32 %v2274, 0.95
        %v2295 = vmul.f32 %v2275, 0.95
        %v2296 = vmul.f32 %v2276, 0.95
        %v2297 = vadd.f32 %v2293, %v1597
        %v2298 = vadd.f32 %v2294, %v1737
        %v2299 = vadd.f32 %v2295, %v1599
        %v2300 = vadd.f32 %v2296, %v1739
        %v2301 = vsub.f32 %v2297, %v2285
        %v2302 = vsub.f32 %v2298, %v2286
        %v2303 = vsub.f32 %v2299, %v2287
        %v2304 = vsub.f32 %v2300, %v2288
        %vm2305 = vcmp.gt.f32.partialorder %v2301, 1.0
        %vm2306 = vcmp.gt.f32.partialorder %v2302, 1.0
        %vm2307 = vcmp.gt.f32.partialorder %v2303, 1.0
        %vm2308 = vcmp.gt.f32.partialorder %v2304, 1.0
        %v2309 = vsel %vm2305, 1, 0
        %v2310 = vsel %vm2306, 1, 0
        %v2311 = vsel %vm2307, 1, 0
        %v2312 = vsel %vm2308, 1, 0
        %v2313 = vcvt.s32.f32 %v2309
        %v2314 = vcvt.s32.f32 %v2310
        %v2315 = vcvt.s32.f32 %v2311
        %v2316 = vcvt.s32.f32 %v2312
        %v2317 = vpack.c.bf16 %v2314, %v2313
        %v2318 = vpack.c.bf16 %v2316, %v2315
        %2319 = vst [vmem:[#allocation2 + $0x140] sm:$0xff] %v2317
        %2320 = vst [vmem:[#allocation2 + $0x148] sm:$0xff] %v2318
        %v2321 = vmul.f32 %v2301, 0.95
        %v2322 = vmul.f32 %v2302, 0.95
        %v2323 = vmul.f32 %v2303, 0.95
        %v2324 = vmul.f32 %v2304, 0.95
        %v2325 = vadd.f32 %v2321, %v1597
        %v2326 = vadd.f32 %v2322, %v1737
        %v2327 = vadd.f32 %v2323, %v1599
        %v2328 = vadd.f32 %v2324, %v1739
        %v2329 = vsub.f32 %v2325, %v2313
        %v2330 = vsub.f32 %v2326, %v2314
        %v2331 = vsub.f32 %v2327, %v2315
        %v2332 = vsub.f32 %v2328, %v2316
        %vm2333 = vcmp.gt.f32.partialorder %v2329, 1.0
        %vm2334 = vcmp.gt.f32.partialorder %v2330, 1.0
        %vm2335 = vcmp.gt.f32.partialorder %v2331, 1.0
        %vm2336 = vcmp.gt.f32.partialorder %v2332, 1.0
        %v2337 = vsel %vm2333, 1, 0
        %v2338 = vsel %vm2334, 1, 0
        %v2339 = vsel %vm2335, 1, 0
        %v2340 = vsel %vm2336, 1, 0
        %v2341 = vcvt.s32.f32 %v2337
        %v2342 = vcvt.s32.f32 %v2338
        %v2343 = vcvt.s32.f32 %v2339
        %v2344 = vcvt.s32.f32 %v2340
        %v2345 = vpack.c.bf16 %v2342, %v2341
        %v2346 = vpack.c.bf16 %v2344, %v2343
        %2347 = vst [vmem:[#allocation2 + $0x150] sm:$0xff] %v2345
        %2348 = vst [vmem:[#allocation2 + $0x158] sm:$0xff] %v2346
        %v2349 = vmul.f32 %v2329, 0.95
        %v2350 = vmul.f32 %v2330, 0.95
        %v2351 = vmul.f32 %v2331, 0.95
        %v2352 = vmul.f32 %v2332, 0.95
        %v2353 = vadd.f32 %v2349, %v1597
        %v2354 = vadd.f32 %v2350, %v1737
        %v2355 = vadd.f32 %v2351, %v1599
        %v2356 = vadd.f32 %v2352, %v1739
        %v2357 = vsub.f32 %v2353, %v2341
        %v2358 = vsub.f32 %v2354, %v2342
        %v2359 = vsub.f32 %v2355, %v2343
        %v2360 = vsub.f32 %v2356, %v2344
        %vm2361 = vcmp.gt.f32.partialorder %v2357, 1.0
        %vm2362 = vcmp.gt.f32.partialorder %v2358, 1.0
        %vm2363 = vcmp.gt.f32.partialorder %v2359, 1.0
        %vm2364 = vcmp.gt.f32.partialorder %v2360, 1.0
        %v2365 = vsel %vm2361, 1, 0
        %v2366 = vsel %vm2362, 1, 0
        %v2367 = vsel %vm2363, 1, 0
        %v2368 = vsel %vm2364, 1, 0
        %v2369 = vcvt.s32.f32 %v2365
        %v2370 = vcvt.s32.f32 %v2366
        %v2371 = vcvt.s32.f32 %v2367
        %v2372 = vcvt.s32.f32 %v2368
        %v2373 = vpack.c.bf16 %v2370, %v2369
        %v2374 = vpack.c.bf16 %v2372, %v2371
        %2375 = vst [vmem:[#allocation2 + $0x160] sm:$0xff] %v2373
        %2376 = vst [vmem:[#allocation2 + $0x168] sm:$0xff] %v2374
        %v2377 = vmul.f32 %v2357, 0.95
        %v2378 = vmul.f32 %v2358, 0.95
        %v2379 = vmul.f32 %v2359, 0.95
        %v2380 = vmul.f32 %v2360, 0.95
        %v2381 = vadd.f32 %v2377, %v1597
        %v2382 = vadd.f32 %v2378, %v1737
        %v2383 = vadd.f32 %v2379, %v1599
        %v2384 = vadd.f32 %v2380, %v1739
        %v2385 = vsub.f32 %v2381, %v2369
        %v2386 = vsub.f32 %v2382, %v2370
        %v2387 = vsub.f32 %v2383, %v2371
        %v2388 = vsub.f32 %v2384, %v2372
        %vm2389 = vcmp.gt.f32.partialorder %v2385, 1.0
        %vm2390 = vcmp.gt.f32.partialorder %v2386, 1.0
        %vm2391 = vcmp.gt.f32.partialorder %v2387, 1.0
        %vm2392 = vcmp.gt.f32.partialorder %v2388, 1.0
        %v2393 = vsel %vm2389, 1, 0
        %v2394 = vsel %vm2390, 1, 0
        %v2395 = vsel %vm2391, 1, 0
        %v2396 = vsel %vm2392, 1, 0
        %v2397 = vcvt.s32.f32 %v2393
        %v2398 = vcvt.s32.f32 %v2394
        %v2399 = vcvt.s32.f32 %v2395
        %v2400 = vcvt.s32.f32 %v2396
        %v2401 = vpack.c.bf16 %v2398, %v2397
        %v2402 = vpack.c.bf16 %v2400, %v2399
        %2403 = vst [vmem:[#allocation2 + $0x170] sm:$0xff] %v2401
        %2404 = vst [vmem:[#allocation2 + $0x178] sm:$0xff] %v2402
        %v2405 = vmul.f32 %v2385, 0.95
        %v2406 = vmul.f32 %v2386, 0.95
        %v2407 = vmul.f32 %v2387, 0.95
        %v2408 = vmul.f32 %v2388, 0.95
        %v2409 = vadd.f32 %v2405, %v1597
        %v2410 = vadd.f32 %v2406, %v1737
        %v2411 = vadd.f32 %v2407, %v1599
        %v2412 = vadd.f32 %v2408, %v1739
        %v2413 = vsub.f32 %v2409, %v2397
        %v2414 = vsub.f32 %v2410, %v2398
        %v2415 = vsub.f32 %v2411, %v2399
        %v2416 = vsub.f32 %v2412, %v2400
        %vm2417 = vcmp.gt.f32.partialorder %v2413, 1.0
        %vm2418 = vcmp.gt.f32.partialorder %v2414, 1.0
        %vm2419 = vcmp.gt.f32.partialorder %v2415, 1.0
        %vm2420 = vcmp.gt.f32.partialorder %v2416, 1.0
        %v2421 = vsel %vm2417, 1, 0
        %v2422 = vsel %vm2418, 1, 0
        %v2423 = vsel %vm2419, 1, 0
        %v2424 = vsel %vm2420, 1, 0
        %v2425 = vcvt.s32.f32 %v2421
        %v2426 = vcvt.s32.f32 %v2422
        %v2427 = vcvt.s32.f32 %v2423
        %v2428 = vcvt.s32.f32 %v2424
        %v2429 = vpack.c.bf16 %v2426, %v2425
        %v2430 = vpack.c.bf16 %v2428, %v2427
        %2431 = vst [vmem:[#allocation2 + $0x180] sm:$0xff] %v2429
        %2432 = vst [vmem:[#allocation2 + $0x188] sm:$0xff] %v2430
        %v2433 = vld [vmem:[#allocation3] sm:$0xff]
        %v2434 = vld [vmem:[#allocation3 + $0x8] sm:$0xff]
        %v2435 = vld [vmem:[#allocation3 + $0x10] sm:$0xff]
        %v2436 = vld [vmem:[#allocation3 + $0x18] sm:$0xff]
        %v2437 = vld [vmem:[#allocation3 + $0x20] sm:$0xff]
        %v2438 = vld [vmem:[#allocation3 + $0x28] sm:$0xff]
        %v2439 = vld [vmem:[#allocation3 + $0x30] sm:$0xff]
        %v2440 = vld [vmem:[#allocation3 + $0x38] sm:$0xff]
        %v2441 = vld [vmem:[#allocation3 + $0x40] sm:$0xff]
        %v2442 = vld [vmem:[#allocation3 + $0x48] sm:$0xff]
        %v2443 = vld [vmem:[#allocation3 + $0x50] sm:$0xff]
        %v2444 = vld [vmem:[#allocation3 + $0x58] sm:$0xff]
        %v2445 = vld [vmem:[#allocation3 + $0x60] sm:$0xff]
        %v2446 = vld [vmem:[#allocation3 + $0x68] sm:$0xff]
        %v2447 = vld [vmem:[#allocation3 + $0x70] sm:$0xff]
        %v2448 = vld [vmem:[#allocation3 + $0x78] sm:$0xff]
        %v2449 = vld [vmem:[#allocation3 + $0x80] sm:$0xff]
        %v2450 = vld [vmem:[#allocation3 + $0x88] sm:$0xff]
        %v2451 = vld [vmem:[#allocation3 + $0x90] sm:$0xff]
        %v2452 = vld [vmem:[#allocation3 + $0x98] sm:$0xff]
        %v2453 = vld [vmem:[#allocation3 + $0xa0] sm:$0xff]
        %v2454 = vld [vmem:[#allocation3 + $0xa8] sm:$0xff]
        %v2455 = vld [vmem:[#allocation3 + $0xb0] sm:$0xff]
        %v2456 = vld [vmem:[#allocation3 + $0xb8] sm:$0xff]
        %v2457 = vld [vmem:[#allocation3 + $0xc0] sm:$0xff]
        %v2458 = vld [vmem:[#allocation3 + $0xc8] sm:$0xff]
        %v2459 = vld [vmem:[#allocation3 + $0xd0] sm:$0xff]
        %v2460 = vld [vmem:[#allocation3 + $0xd8] sm:$0xff]
        %v2461 = vld [vmem:[#allocation3 + $0xe0] sm:$0xff]
        %v2462 = vld [vmem:[#allocation3 + $0xe8] sm:$0xff]
        %v2463 = vld [vmem:[#allocation3 + $0xf0] sm:$0xff]
        %v2464 = vld [vmem:[#allocation3 + $0xf8] sm:$0xff]
        %v2465 = vld [vmem:[#allocation3 + $0x100] sm:$0xff]
        %v2466 = vld [vmem:[#allocation3 + $0x108] sm:$0xff]
        %v2467 = vld [vmem:[#allocation3 + $0x110] sm:$0xff]
        %v2468 = vld [vmem:[#allocation3 + $0x118] sm:$0xff]
        %v2469 = vld [vmem:[#allocation3 + $0x120] sm:$0xff]
        %v2470 = vld [vmem:[#allocation3 + $0x128] sm:$0xff]
        %v2471 = vld [vmem:[#allocation3 + $0x130] sm:$0xff]
        %v2472 = vld [vmem:[#allocation3 + $0x138] sm:$0xff]
        %v2473 = vld [vmem:[#allocation3 + $0x140] sm:$0xff]
        %v2474 = vld [vmem:[#allocation3 + $0x148] sm:$0xff]
        %v2475 = vld [vmem:[#allocation3 + $0x150] sm:$0xff]
        %v2476 = vld [vmem:[#allocation3 + $0x158] sm:$0xff]
        %v2477 = vld [vmem:[#allocation3 + $0x160] sm:$0xff]
        %v2478 = vld [vmem:[#allocation3 + $0x168] sm:$0xff]
        %v2479 = vld [vmem:[#allocation3 + $0x170] sm:$0xff]
        %v2480 = vld [vmem:[#allocation3 + $0x178] sm:$0xff]
        %v2481 = vld [vmem:[#allocation3 + $0x180] sm:$0xff]
        %v2482 = vld [vmem:[#allocation3 + $0x188] sm:$0xff]
        %v2483 = vld [vmem:[#allocation2] sm:$0xff]
        %v2484 = vld [vmem:[#allocation2 + $0x8] sm:$0xff]
        %v2485 = vld [vmem:[#allocation2 + $0x10] sm:$0xff]
        %v2486 = vld [vmem:[#allocation2 + $0x18] sm:$0xff]
        %v2487 = vld [vmem:[#allocation2 + $0x20] sm:$0xff]
        %v2488 = vld [vmem:[#allocation2 + $0x28] sm:$0xff]
        %v2489 = vld [vmem:[#allocation2 + $0x30] sm:$0xff]
        %v2490 = vld [vmem:[#allocation2 + $0x38] sm:$0xff]
        %v2491 = vld [vmem:[#allocation2 + $0x40] sm:$0xff]
        %v2492 = vld [vmem:[#allocation2 + $0x48] sm:$0xff]
        %v2493 = vld [vmem:[#allocation2 + $0x50] sm:$0xff]
        %v2494 = vld [vmem:[#allocation2 + $0x58] sm:$0xff]
        %v2495 = vld [vmem:[#allocation2 + $0x60] sm:$0xff]
        %v2496 = vld [vmem:[#allocation2 + $0x68] sm:$0xff]
        %v2497 = vld [vmem:[#allocation2 + $0x70] sm:$0xff]
        %v2498 = vld [vmem:[#allocation2 + $0x78] sm:$0xff]
        %v2499 = vld [vmem:[#allocation2 + $0x80] sm:$0xff]
        %v2500 = vld [vmem:[#allocation2 + $0x88] sm:$0xff]
        %v2501 = vld [vmem:[#allocation2 + $0x90] sm:$0xff]
        %v2502 = vld [vmem:[#allocation2 + $0x98] sm:$0xff]
        %v2503 = vld [vmem:[#allocation2 + $0xa0] sm:$0xff]
        %v2504 = vld [vmem:[#allocation2 + $0xa8] sm:$0xff]
        %v2505 = vld [vmem:[#allocation2 + $0xb0] sm:$0xff]
        %v2506 = vld [vmem:[#allocation2 + $0xb8] sm:$0xff]
        %v2507 = vld [vmem:[#allocation2 + $0xc0] sm:$0xff]
        %v2508 = vld [vmem:[#allocation2 + $0xc8] sm:$0xff]
        %v2509 = vld [vmem:[#allocation2 + $0xd0] sm:$0xff]
        %v2510 = vld [vmem:[#allocation2 + $0xd8] sm:$0xff]
        %v2511 = vld [vmem:[#allocation2 + $0xe0] sm:$0xff]
        %v2512 = vld [vmem:[#allocation2 + $0xe8] sm:$0xff]
        %v2513 = vld [vmem:[#allocation2 + $0xf0] sm:$0xff]
        %v2514 = vld [vmem:[#allocation2 + $0xf8] sm:$0xff]
        %v2515 = vld [vmem:[#allocation2 + $0x100] sm:$0xff]
        %v2516 = vld [vmem:[#allocation2 + $0x108] sm:$0xff]
        %v2517 = vld [vmem:[#allocation2 + $0x110] sm:$0xff]
        %v2518 = vld [vmem:[#allocation2 + $0x118] sm:$0xff]
        %v2519 = vld [vmem:[#allocation2 + $0x120] sm:$0xff]
        %v2520 = vld [vmem:[#allocation2 + $0x128] sm:$0xff]
        %v2521 = vld [vmem:[#allocation2 + $0x130] sm:$0xff]
        %v2522 = vld [vmem:[#allocation2 + $0x138] sm:$0xff]
        %v2523 = vld [vmem:[#allocation2 + $0x140] sm:$0xff]
        %v2524 = vld [vmem:[#allocation2 + $0x148] sm:$0xff]
        %v2525 = vld [vmem:[#allocation2 + $0x150] sm:$0xff]
        %v2526 = vld [vmem:[#allocation2 + $0x158] sm:$0xff]
        %v2527 = vld [vmem:[#allocation2 + $0x160] sm:$0xff]
        %v2528 = vld [vmem:[#allocation2 + $0x168] sm:$0xff]
        %v2529 = vld [vmem:[#allocation2 + $0x170] sm:$0xff]
        %v2530 = vld [vmem:[#allocation2 + $0x178] sm:$0xff]
        %v2531 = vld [vmem:[#allocation2 + $0x180] sm:$0xff]
        %v2532 = vld [vmem:[#allocation2 + $0x188] sm:$0xff]
        %v2533 = vld [vmem:[%s316] sm:$0xf]
        %v2534 = vld [vmem:[%s316 + $0x4] sm:$0xf]
        %v2535 = vld [vmem:[%s316 + $0x8] sm:$0xf]
        %v2536 = vld [vmem:[%s316 + $0xc] sm:$0xf]
        %v2537 = vld [vmem:[%s316 + $0x10] sm:$0xf]
        %v2538 = vld [vmem:[%s316 + $0x14] sm:$0xf]
        %v2539 = vld [vmem:[%s316 + $0x18] sm:$0xf]
        %v2540 = vld [vmem:[%s316 + $0x1c] sm:$0xf]
        %v2541 = vld [vmem:[%s316 + $0x20] sm:$0xf]
        %v2542 = vld [vmem:[%s316 + $0x24] sm:$0xf]
        %v2543 = vld [vmem:[%s316 + $0x28] sm:$0xf]
        %v2544 = vld [vmem:[%s316 + $0x2c] sm:$0xf]
        %v2545 = vld [vmem:[%s316 + $0x30] sm:$0xf]
        %v2546 = vld [vmem:[%s316 + $0x34] sm:$0xf]
        %v2547 = vld [vmem:[%s316 + $0x38] sm:$0xf]
        %v2548 = vld [vmem:[%s316 + $0x3c] sm:$0xf]
        %v2549 = vld [vmem:[%s316 + $0x40] sm:$0xf]
        %v2550 = vld [vmem:[%s316 + $0x44] sm:$0xf]
        %v2551 = vld [vmem:[%s316 + $0x48] sm:$0xf]
        %v2552 = vld [vmem:[%s316 + $0x4c] sm:$0xf]
        %v2553 = vld [vmem:[%s316 + $0x50] sm:$0xf]
        %v2554 = vld [vmem:[%s316 + $0x54] sm:$0xf]
        %v2555 = vld [vmem:[%s316 + $0x58] sm:$0xf]
        %v2556 = vld [vmem:[%s316 + $0x5c] sm:$0xf]
        %v2557 = vld [vmem:[%s316 + $0x60] sm:$0xf]
        %v2558 = vld [vmem:[%s316 + $0x64] sm:$0xf]
        %v2559 = vld [vmem:[%s316 + $0x68] sm:$0xf]
        %v2560 = vld [vmem:[%s316 + $0x6c] sm:$0xf]
        %v2561 = vld [vmem:[%s316 + $0x70] sm:$0xf]
        %v2562 = vld [vmem:[%s316 + $0x74] sm:$0xf]
        %v2563 = vld [vmem:[%s316 + $0x78] sm:$0xf]
        %v2564 = vld [vmem:[%s316 + $0x7c] sm:$0xf]
        %v2615 = vunpack.c.l.b16 %v2483
        %v2616 = vunpack.c.h.b16 %v2483
        %v2617 = vunpack.c.l.b16 %v2484
        %v2618 = vunpack.c.h.b16 %v2484
        %v2619 = vunpack.c.l.b16 %v2485
        %v2620 = vunpack.c.h.b16 %v2485
        %v2621 = vunpack.c.l.b16 %v2486
        %v2622 = vunpack.c.h.b16 %v2486
        %v2623 = vunpack.c.l.b16 %v2487
        %v2624 = vunpack.c.h.b16 %v2487
        %v2625 = vunpack.c.l.b16 %v2488
        %v2626 = vunpack.c.h.b16 %v2488
        %v2627 = vunpack.c.l.b16 %v2489
        %v2628 = vunpack.c.h.b16 %v2489
        %v2629 = vunpack.c.l.b16 %v2490
        %v2630 = vunpack.c.h.b16 %v2490
        %v2631 = vunpack.c.l.b16 %v2491
        %v2632 = vunpack.c.h.b16 %v2491
        %v2633 = vunpack.c.l.b16 %v2492
        %v2634 = vunpack.c.h.b16 %v2492
        %v2635 = vunpack.c.l.b16 %v2493
        %v2636 = vunpack.c.h.b16 %v2493
        %v2637 = vunpack.c.l.b16 %v2494
        %v2638 = vunpack.c.h.b16 %v2494
        %v2639 = vunpack.c.l.b16 %v2495
        %v2640 = vunpack.c.h.b16 %v2495
        %v2641 = vunpack.c.l.b16 %v2496
        %v2642 = vunpack.c.h.b16 %v2496
        %v2643 = vunpack.c.l.b16 %v2497
        %v2644 = vunpack.c.h.b16 %v2497
        %v2645 = vunpack.c.l.b16 %v2498
        %v2646 = vunpack.c.h.b16 %v2498
        %v2647 = vunpack.c.l.b16 %v2499
        %v2648 = vunpack.c.h.b16 %v2499
        %v2649 = vunpack.c.l.b16 %v2500
        %v2650 = vunpack.c.h.b16 %v2500
        %v2651 = vunpack.c.l.b16 %v2501
        %v2652 = vunpack.c.h.b16 %v2501
        %v2653 = vunpack.c.l.b16 %v2502
        %v2654 = vunpack.c.h.b16 %v2502
        %v2655 = vunpack.c.l.b16 %v2503
        %v2656 = vunpack.c.h.b16 %v2503
        %v2657 = vunpack.c.l.b16 %v2504
        %v2658 = vunpack.c.h.b16 %v2504
        %v2659 = vunpack.c.l.b16 %v2505
        %v2660 = vunpack.c.h.b16 %v2505
        %v2661 = vunpack.c.l.b16 %v2506
        %v2662 = vunpack.c.h.b16 %v2506
        %v2663 = vunpack.c.l.b16 %v2507
        %v2664 = vunpack.c.h.b16 %v2507
        %v2665 = vunpack.c.l.b16 %v2508
        %v2666 = vunpack.c.h.b16 %v2508
        %v2667 = vunpack.c.l.b16 %v2509
        %v2668 = vunpack.c.h.b16 %v2509
        %v2669 = vunpack.c.l.b16 %v2510
        %v2670 = vunpack.c.h.b16 %v2510
        %v2671 = vunpack.c.l.b16 %v2511
        %v2672 = vunpack.c.h.b16 %v2511
        %v2673 = vunpack.c.l.b16 %v2512
        %v2674 = vunpack.c.h.b16 %v2512
        %v2675 = vunpack.c.l.b16 %v2513
        %v2676 = vunpack.c.h.b16 %v2513
        %v2677 = vunpack.c.l.b16 %v2514
        %v2678 = vunpack.c.h.b16 %v2514
        %v2679 = vunpack.c.l.b16 %v2515
        %v2680 = vunpack.c.h.b16 %v2515
        %v2681 = vunpack.c.l.b16 %v2516
        %v2682 = vunpack.c.h.b16 %v2516
        %v2683 = vunpack.c.l.b16 %v2517
        %v2684 = vunpack.c.h.b16 %v2517
        %v2685 = vunpack.c.l.b16 %v2518
        %v2686 = vunpack.c.h.b16 %v2518
        %v2687 = vunpack.c.l.b16 %v2519
        %v2688 = vunpack.c.h.b16 %v2519
        %v2689 = vunpack.c.l.b16 %v2520
        %v2690 = vunpack.c.h.b16 %v2520
        %v2691 = vunpack.c.l.b16 %v2521
        %v2692 = vunpack.c.h.b16 %v2521
        %v2693 = vunpack.c.l.b16 %v2522
        %v2694 = vunpack.c.h.b16 %v2522
        %v2695 = vunpack.c.l.b16 %v2523
        %v2696 = vunpack.c.h.b16 %v2523
        %v2697 = vunpack.c.l.b16 %v2524
        %v2698 = vunpack.c.h.b16 %v2524
        %v2699 = vunpack.c.l.b16 %v2525
        %v2700 = vunpack.c.h.b16 %v2525
        %v2701 = vunpack.c.l.b16 %v2526
        %v2702 = vunpack.c.h.b16 %v2526
        %v2703 = vunpack.c.l.b16 %v2527
        %v2704 = vunpack.c.h.b16 %v2527
        %v2705 = vunpack.c.l.b16 %v2528
        %v2706 = vunpack.c.h.b16 %v2528
        %v2707 = vunpack.c.l.b16 %v2529
        %v2708 = vunpack.c.h.b16 %v2529
        %v2709 = vunpack.c.l.b16 %v2530
        %v2710 = vunpack.c.h.b16 %v2530
        %v2711 = vunpack.c.l.b16 %v2531
        %v2712 = vunpack.c.h.b16 %v2531
        %v2713 = vunpack.c.l.b16 %v2532
        %v2714 = vunpack.c.h.b16 %v2532
        %v2715 = vpack.c.b16 %v2617, %v2615
        %v2716 = vpack.c.b16 %v2618, %v2616
        %v2717 = vpack.c.b16 %v2621, %v2619
        %v2718 = vpack.c.b16 %v2622, %v2620
        %v2719 = vpack.c.b16 %v2625, %v2623
        %v2720 = vpack.c.b16 %v2626, %v2624
        %v2721 = vpack.c.b16 %v2629, %v2627
        %v2722 = vpack.c.b16 %v2630, %v2628
        %v2723 = vpack.c.b16 %v2633, %v2631
        %v2724 = vpack.c.b16 %v2634, %v2632
        %v2725 = vpack.c.b16 %v2637, %v2635
        %v2726 = vpack.c.b16 %v2638, %v2636
        %v2727 = vpack.c.b16 %v2641, %v2639
        %v2728 = vpack.c.b16 %v2642, %v2640
        %v2729 = vpack.c.b16 %v2645, %v2643
        %v2730 = vpack.c.b16 %v2646, %v2644
        %v2731 = vpack.c.b16 %v2649, %v2647
        %v2732 = vpack.c.b16 %v2650, %v2648
        %v2733 = vpack.c.b16 %v2653, %v2651
        %v2734 = vpack.c.b16 %v2654, %v2652
        %v2735 = vpack.c.b16 %v2657, %v2655
        %v2736 = vpack.c.b16 %v2658, %v2656
        %v2737 = vpack.c.b16 %v2661, %v2659
        %v2738 = vpack.c.b16 %v2662, %v2660
        %v2739 = vpack.c.b16 %v2665, %v2663
        %v2740 = vpack.c.b16 %v2666, %v2664
        %v2741 = vpack.c.b16 %v2669, %v2667
        %v2742 = vpack.c.b16 %v2670, %v2668
        %v2743 = vpack.c.b16 %v2673, %v2671
        %v2744 = vpack.c.b16 %v2674, %v2672
        %v2745 = vpack.c.b16 %v2677, %v2675
        %v2746 = vpack.c.b16 %v2678, %v2676
        %v2747 = vpack.c.b16 %v2681, %v2679
        %v2748 = vpack.c.b16 %v2682, %v2680
        %v2749 = vpack.c.b16 %v2685, %v2683
        %v2750 = vpack.c.b16 %v2686, %v2684
        %v2751 = vpack.c.b16 %v2689, %v2687
        %v2752 = vpack.c.b16 %v2690, %v2688
        %v2753 = vpack.c.b16 %v2693, %v2691
        %v2754 = vpack.c.b16 %v2694, %v2692
        %v2755 = vpack.c.b16 %v2697, %v2695
        %v2756 = vpack.c.b16 %v2698, %v2696
        %v2757 = vpack.c.b16 %v2701, %v2699
        %v2758 = vpack.c.b16 %v2702, %v2700
        %v2759 = vpack.c.b16 %v2705, %v2703
        %v2760 = vpack.c.b16 %v2706, %v2704
        %v2761 = vpack.c.b16 %v2709, %v2707
        %v2762 = vpack.c.b16 %v2710, %v2708
        %v2763 = vpack.c.b16 %v2713, %v2711
        %v2764 = vpack.c.b16 %v2714, %v2712
        %v2847 = vunpack.c.l.b16 %v2533
        %v2848 = vunpack.c.l.b16 %v2534
        %v2849 = vunpack.c.l.b16 %v2535
        %v2850 = vunpack.c.l.b16 %v2536
        %v2851 = vunpack.c.l.b16 %v2537
        %v2852 = vunpack.c.l.b16 %v2538
        %v2853 = vunpack.c.l.b16 %v2539
        %v2854 = vunpack.c.l.b16 %v2540
        %v2855 = vunpack.c.l.b16 %v2541
        %v2856 = vunpack.c.l.b16 %v2542
        %v2857 = vunpack.c.l.b16 %v2543
        %v2858 = vunpack.c.l.b16 %v2544
        %v2859 = vunpack.c.l.b16 %v2545
        %v2860 = vunpack.c.l.b16 %v2546
        %v2861 = vunpack.c.l.b16 %v2547
        %v2862 = vunpack.c.l.b16 %v2548
        %v2863 = vunpack.c.l.b16 %v2549
        %v2864 = vunpack.c.l.b16 %v2550
        %v2865 = vunpack.c.l.b16 %v2551
        %v2866 = vunpack.c.l.b16 %v2552
        %v2867 = vunpack.c.l.b16 %v2553
        %v2868 = vunpack.c.l.b16 %v2554
        %v2869 = vunpack.c.l.b16 %v2555
        %v2870 = vunpack.c.l.b16 %v2556
        %v2871 = vunpack.c.l.b16 %v2557
        %v2872 = vunpack.c.l.b16 %v2558
        %v2873 = vunpack.c.l.b16 %v2559
        %v2874 = vunpack.c.l.b16 %v2560
        %v2875 = vunpack.c.l.b16 %v2561
        %v2876 = vunpack.c.l.b16 %v2562
        %v2877 = vunpack.c.l.b16 %v2563
        %v2878 = vunpack.c.l.b16 %v2564
        %v2879 = vpack.c.b16 %v2848, %v2847
        %v2880 = vpack.c.b16 %v2850, %v2849
        %v2881 = vpack.c.b16 %v2852, %v2851
        %v2882 = vpack.c.b16 %v2854, %v2853
        %v2883 = vpack.c.b16 %v2856, %v2855
        %v2884 = vpack.c.b16 %v2858, %v2857
        %v2885 = vpack.c.b16 %v2860, %v2859
        %v2886 = vpack.c.b16 %v2862, %v2861
        %v2887 = vpack.c.b16 %v2864, %v2863
        %v2888 = vpack.c.b16 %v2866, %v2865
        %v2889 = vpack.c.b16 %v2868, %v2867
        %v2890 = vpack.c.b16 %v2870, %v2869
        %v2891 = vpack.c.b16 %v2872, %v2871
        %v2892 = vpack.c.b16 %v2874, %v2873
        %v2893 = vpack.c.b16 %v2876, %v2875
        %v2894 = vpack.c.b16 %v2878, %v2877
        %2911 = vmatpush.bf16.msra.mxu0 %v2886
        %2912 = vmatpush.bf16.msra.mxu0 %v2885
        %2913 = vmatpush.bf16.msra.mxu0 %v2884
        %2914 = vmatpush.bf16.msra.mxu0 %v2883
        %2915 = vmatpush.bf16.msra.mxu0 %v2882
        %2916 = vmatpush.bf16.msra.mxu0 %v2881
        %2917 = vmatpush.bf16.msra.mxu0 %v2880
        %2918 = vmatpush.bf16.msra.mxu0 %v2879
        %2919 = vmatmul.bf16.gmra.mxu0 %v2715
        %v2920 = vpop.f32.mrf.mxu0
        %v2921 = vadd.f32 0.0, %v2920
        %v2922 = vpop.f32.mrf.mxu0
        %v2923 = vadd.f32 0.0, %v2922
        %2924 = vmatmul.bf16.gmra.mxu0 %v2717
        %v2925 = vpop.f32.mrf.mxu0
        %v2926 = vadd.f32 0.0, %v2925
        %v2927 = vpop.f32.mrf.mxu0
        %v2928 = vadd.f32 0.0, %v2927
        %2929 = vmatmul.bf16.gmra.mxu0 %v2719
        %v2930 = vpop.f32.mrf.mxu0
        %v2931 = vadd.f32 0.0, %v2930
        %v2932 = vpop.f32.mrf.mxu0
        %v2933 = vadd.f32 0.0, %v2932
        %2934 = vmatmul.bf16.gmra.mxu0 %v2721
        %v2935 = vpop.f32.mrf.mxu0
        %v2936 = vadd.f32 0.0, %v2935
        %v2937 = vpop.f32.mrf.mxu0
        %v2938 = vadd.f32 0.0, %v2937
        %2939 = vmatmul.bf16.gmra.mxu0 %v2723
        %v2940 = vpop.f32.mrf.mxu0
        %v2941 = vadd.f32 0.0, %v2940
        %v2942 = vpop.f32.mrf.mxu0
        %v2943 = vadd.f32 0.0, %v2942
        %2944 = vmatmul.bf16.gmra.mxu0 %v2725
        %v2945 = vpop.f32.mrf.mxu0
        %v2946 = vadd.f32 0.0, %v2945
        %v2947 = vpop.f32.mrf.mxu0
        %v2948 = vadd.f32 0.0, %v2947
        %2949 = vmatmul.bf16.gmra.mxu0 %v2727
        %v2950 = vpop.f32.mrf.mxu0
        %v2951 = vadd.f32 0.0, %v2950
        %v2952 = vpop.f32.mrf.mxu0
        %v2953 = vadd.f32 0.0, %v2952
        %2954 = vmatmul.bf16.gmra.mxu0 %v2729
        %v2955 = vpop.f32.mrf.mxu0
        %v2956 = vadd.f32 0.0, %v2955
        %v2957 = vpop.f32.mrf.mxu0
        %v2958 = vadd.f32 0.0, %v2957
        %2959 = vmatmul.bf16.gmra.mxu0 %v2731
        %v2960 = vpop.f32.mrf.mxu0
        %v2961 = vadd.f32 0.0, %v2960
        %v2962 = vpop.f32.mrf.mxu0
        %v2963 = vadd.f32 0.0, %v2962
        %2964 = vmatmul.bf16.gmra.mxu0 %v2733
        %v2965 = vpop.f32.mrf.mxu0
        %v2966 = vadd.f32 0.0, %v2965
        %v2967 = vpop.f32.mrf.mxu0
        %v2968 = vadd.f32 0.0, %v2967
        %2969 = vmatmul.bf16.gmra.mxu0 %v2735
        %v2970 = vpop.f32.mrf.mxu0
        %v2971 = vadd.f32 0.0, %v2970
        %v2972 = vpop.f32.mrf.mxu0
        %v2973 = vadd.f32 0.0, %v2972
        %2974 = vmatmul.bf16.gmra.mxu0 %v2737
        %v2975 = vpop.f32.mrf.mxu0
        %v2976 = vadd.f32 0.0, %v2975
        %v2977 = vpop.f32.mrf.mxu0
        %v2978 = vadd.f32 0.0, %v2977
        %2979 = vmatmul.bf16.gmra.mxu0 %v2739
        %v2980 = vpop.f32.mrf.mxu0
        %v2981 = vadd.f32 0.0, %v2980
        %v2982 = vpop.f32.mrf.mxu0
        %v2983 = vadd.f32 0.0, %v2982
        %2984 = vmatmul.bf16.gmra.mxu0 %v2741
        %v2985 = vpop.f32.mrf.mxu0
        %v2986 = vadd.f32 0.0, %v2985
        %v2987 = vpop.f32.mrf.mxu0
        %v2988 = vadd.f32 0.0, %v2987
        %2989 = vmatmul.bf16.gmra.mxu0 %v2743
        %v2990 = vpop.f32.mrf.mxu0
        %v2991 = vadd.f32 0.0, %v2990
        %v2992 = vpop.f32.mrf.mxu0
        %v2993 = vadd.f32 0.0, %v2992
        %2994 = vmatmul.bf16.gmra.mxu0 %v2745
        %v2995 = vpop.f32.mrf.mxu0
        %v2996 = vadd.f32 0.0, %v2995
        %v2997 = vpop.f32.mrf.mxu0
        %v2998 = vadd.f32 0.0, %v2997
        %2999 = vmatmul.bf16.gmra.mxu0 %v2747
        %v3000 = vpop.f32.mrf.mxu0
        %v3001 = vadd.f32 0.0, %v3000
        %v3002 = vpop.f32.mrf.mxu0
        %v3003 = vadd.f32 0.0, %v3002
        %3004 = vmatmul.bf16.gmra.mxu0 %v2749
        %v3005 = vpop.f32.mrf.mxu0
        %v3006 = vadd.f32 0.0, %v3005
        %v3007 = vpop.f32.mrf.mxu0
        %v3008 = vadd.f32 0.0, %v3007
        %3009 = vmatmul.bf16.gmra.mxu0 %v2751
        %v3010 = vpop.f32.mrf.mxu0
        %v3011 = vadd.f32 0.0, %v3010
        %v3012 = vpop.f32.mrf.mxu0
        %v3013 = vadd.f32 0.0, %v3012
        %3014 = vmatmul.bf16.gmra.mxu0 %v2753
        %v3015 = vpop.f32.mrf.mxu0
        %v3016 = vadd.f32 0.0, %v3015
        %v3017 = vpop.f32.mrf.mxu0
        %v3018 = vadd.f32 0.0, %v3017
        %3019 = vmatmul.bf16.gmra.mxu0 %v2755
        %v3020 = vpop.f32.mrf.mxu0
        %v3021 = vadd.f32 0.0, %v3020
        %v3022 = vpop.f32.mrf.mxu0
        %v3023 = vadd.f32 0.0, %v3022
        %3024 = vmatmul.bf16.gmra.mxu0 %v2757
        %v3025 = vpop.f32.mrf.mxu0
        %v3026 = vadd.f32 0.0, %v3025
        %v3027 = vpop.f32.mrf.mxu0
        %v3028 = vadd.f32 0.0, %v3027
        %3029 = vmatmul.bf16.gmra.mxu0 %v2759
        %v3030 = vpop.f32.mrf.mxu0
        %v3031 = vadd.f32 0.0, %v3030
        %v3032 = vpop.f32.mrf.mxu0
        %v3033 = vadd.f32 0.0, %v3032
        %3034 = vmatmul.bf16.gmra.mxu0 %v2761
        %v3035 = vpop.f32.mrf.mxu0
        %v3036 = vadd.f32 0.0, %v3035
        %v3037 = vpop.f32.mrf.mxu0
        %v3038 = vadd.f32 0.0, %v3037
        %3039 = vmatmul.bf16.gmra.mxu0 %v2763
        %v3040 = vpop.f32.mrf.mxu0
        %v3041 = vadd.f32 0.0, %v3040
        %v3042 = vpop.f32.mrf.mxu0
        %v3043 = vadd.f32 0.0, %v3042
        %3044 = vdwg.mxu0
        %3045 = vmatpush.bf16.msra.mxu0 %v2894
        %3046 = vmatpush.bf16.msra.mxu0 %v2893
        %3047 = vmatpush.bf16.msra.mxu0 %v2892
        %3048 = vmatpush.bf16.msra.mxu0 %v2891
        %3049 = vmatpush.bf16.msra.mxu0 %v2890
        %3050 = vmatpush.bf16.msra.mxu0 %v2889
        %3051 = vmatpush.bf16.msra.mxu0 %v2888
        %3052 = vmatpush.bf16.msra.mxu0 %v2887
        %3053 = vmatmul.bf16.gmra.mxu0 %v2716
        %v3054 = vpop.f32.mrf.mxu0
        %v3055 = vadd.f32 %v2921, %v3054
        %v3056 = vpop.f32.mrf.mxu0
        %v3057 = vadd.f32 %v2923, %v3056
        %3058 = vmatmul.bf16.gmra.mxu0 %v2718
        %v3059 = vpop.f32.mrf.mxu0
        %v3060 = vadd.f32 %v2926, %v3059
        %v3061 = vpop.f32.mrf.mxu0
        %v3062 = vadd.f32 %v2928, %v3061
        %3063 = vmatmul.bf16.gmra.mxu0 %v2720
        %v3064 = vpop.f32.mrf.mxu0
        %v3065 = vadd.f32 %v2931, %v3064
        %v3066 = vpop.f32.mrf.mxu0
        %v3067 = vadd.f32 %v2933, %v3066
        %3068 = vmatmul.bf16.gmra.mxu0 %v2722
        %v3069 = vpop.f32.mrf.mxu0
        %v3070 = vadd.f32 %v2936, %v3069
        %v3071 = vpop.f32.mrf.mxu0
        %v3072 = vadd.f32 %v2938, %v3071
        %3073 = vmatmul.bf16.gmra.mxu0 %v2724
        %v3074 = vpop.f32.mrf.mxu0
        %v3075 = vadd.f32 %v2941, %v3074
        %v3076 = vpop.f32.mrf.mxu0
        %v3077 = vadd.f32 %v2943, %v3076
        %3078 = vmatmul.bf16.gmra.mxu0 %v2726
        %v3079 = vpop.f32.mrf.mxu0
        %v3080 = vadd.f32 %v2946, %v3079
        %v3081 = vpop.f32.mrf.mxu0
        %v3082 = vadd.f32 %v2948, %v3081
        %3083 = vmatmul.bf16.gmra.mxu0 %v2728
        %v3084 = vpop.f32.mrf.mxu0
        %v3085 = vadd.f32 %v2951, %v3084
        %v3086 = vpop.f32.mrf.mxu0
        %v3087 = vadd.f32 %v2953, %v3086
        %3088 = vmatmul.bf16.gmra.mxu0 %v2730
        %v3089 = vpop.f32.mrf.mxu0
        %v3090 = vadd.f32 %v2956, %v3089
        %v3091 = vpop.f32.mrf.mxu0
        %v3092 = vadd.f32 %v2958, %v3091
        %3093 = vmatmul.bf16.gmra.mxu0 %v2732
        %v3094 = vpop.f32.mrf.mxu0
        %v3095 = vadd.f32 %v2961, %v3094
        %v3096 = vpop.f32.mrf.mxu0
        %v3097 = vadd.f32 %v2963, %v3096
        %3098 = vmatmul.bf16.gmra.mxu0 %v2734
        %v3099 = vpop.f32.mrf.mxu0
        %v3100 = vadd.f32 %v2966, %v3099
        %v3101 = vpop.f32.mrf.mxu0
        %v3102 = vadd.f32 %v2968, %v3101
        %3103 = vmatmul.bf16.gmra.mxu0 %v2736
        %v3104 = vpop.f32.mrf.mxu0
        %v3105 = vadd.f32 %v2971, %v3104
        %v3106 = vpop.f32.mrf.mxu0
        %v3107 = vadd.f32 %v2973, %v3106
        %3108 = vmatmul.bf16.gmra.mxu0 %v2738
        %v3109 = vpop.f32.mrf.mxu0
        %v3110 = vadd.f32 %v2976, %v3109
        %v3111 = vpop.f32.mrf.mxu0
        %v3112 = vadd.f32 %v2978, %v3111
        %3113 = vmatmul.bf16.gmra.mxu0 %v2740
        %v3114 = vpop.f32.mrf.mxu0
        %v3115 = vadd.f32 %v2981, %v3114
        %v3116 = vpop.f32.mrf.mxu0
        %v3117 = vadd.f32 %v2983, %v3116
        %3118 = vmatmul.bf16.gmra.mxu0 %v2742
        %v3119 = vpop.f32.mrf.mxu0
        %v3120 = vadd.f32 %v2986, %v3119
        %v3121 = vpop.f32.mrf.mxu0
        %v3122 = vadd.f32 %v2988, %v3121
        %3123 = vmatmul.bf16.gmra.mxu0 %v2744
        %v3124 = vpop.f32.mrf.mxu0
        %v3125 = vadd.f32 %v2991, %v3124
        %v3126 = vpop.f32.mrf.mxu0
        %v3127 = vadd.f32 %v2993, %v3126
        %3128 = vmatmul.bf16.gmra.mxu0 %v2746
        %v3129 = vpop.f32.mrf.mxu0
        %v3130 = vadd.f32 %v2996, %v3129
        %v3131 = vpop.f32.mrf.mxu0
        %v3132 = vadd.f32 %v2998, %v3131
        %3133 = vmatmul.bf16.gmra.mxu0 %v2748
        %v3134 = vpop.f32.mrf.mxu0
        %v3135 = vadd.f32 %v3001, %v3134
        %v3136 = vpop.f32.mrf.mxu0
        %v3137 = vadd.f32 %v3003, %v3136
        %3138 = vmatmul.bf16.gmra.mxu0 %v2750
        %v3139 = vpop.f32.mrf.mxu0
        %v3140 = vadd.f32 %v3006, %v3139
        %v3141 = vpop.f32.mrf.mxu0
        %v3142 = vadd.f32 %v3008, %v3141
        %3143 = vmatmul.bf16.gmra.mxu0 %v2752
        %v3144 = vpop.f32.mrf.mxu0
        %v3145 = vadd.f32 %v3011, %v3144
        %v3146 = vpop.f32.mrf.mxu0
        %v3147 = vadd.f32 %v3013, %v3146
        %3148 = vmatmul.bf16.gmra.mxu0 %v2754
        %v3149 = vpop.f32.mrf.mxu0
        %v3150 = vadd.f32 %v3016, %v3149
        %v3151 = vpop.f32.mrf.mxu0
        %v3152 = vadd.f32 %v3018, %v3151
        %3153 = vmatmul.bf16.gmra.mxu0 %v2756
        %v3154 = vpop.f32.mrf.mxu0
        %v3155 = vadd.f32 %v3021, %v3154
        %v3156 = vpop.f32.mrf.mxu0
        %v3157 = vadd.f32 %v3023, %v3156
        %3158 = vmatmul.bf16.gmra.mxu0 %v2758
        %v3159 = vpop.f32.mrf.mxu0
        %v3160 = vadd.f32 %v3026, %v3159
        %v3161 = vpop.f32.mrf.mxu0
        %v3162 = vadd.f32 %v3028, %v3161
        %3163 = vmatmul.bf16.gmra.mxu0 %v2760
        %v3164 = vpop.f32.mrf.mxu0
        %v3165 = vadd.f32 %v3031, %v3164
        %v3166 = vpop.f32.mrf.mxu0
        %v3167 = vadd.f32 %v3033, %v3166
        %3168 = vmatmul.bf16.gmra.mxu0 %v2762
        %v3169 = vpop.f32.mrf.mxu0
        %v3170 = vadd.f32 %v3036, %v3169
        %v3171 = vpop.f32.mrf.mxu0
        %v3172 = vadd.f32 %v3038, %v3171
        %3173 = vmatmul.bf16.gmra.mxu0 %v2764
        %v3174 = vpop.f32.mrf.mxu0
        %v3175 = vadd.f32 %v3041, %v3174
        %v3176 = vpop.f32.mrf.mxu0
        %v3177 = vadd.f32 %v3043, %v3176
        %3178 = vdwg.mxu0
        %v3179 = vadd.f32 %v2433, %v3055
        %v3180 = vadd.f32 %v2434, %v3057
        %v3181 = vadd.f32 %v2435, %v3060
        %v3182 = vadd.f32 %v2436, %v3062
        %v3183 = vadd.f32 %v2437, %v3065
        %v3184 = vadd.f32 %v2438, %v3067
        %v3185 = vadd.f32 %v2439, %v3070
        %v3186 = vadd.f32 %v2440, %v3072
        %v3187 = vadd.f32 %v2441, %v3075
        %v3188 = vadd.f32 %v2442, %v3077
        %v3189 = vadd.f32 %v2443, %v3080
        %v3190 = vadd.f32 %v2444, %v3082
        %v3191 = vadd.f32 %v2445, %v3085
        %v3192 = vadd.f32 %v2446, %v3087
        %v3193 = vadd.f32 %v2447, %v3090
        %v3194 = vadd.f32 %v2448, %v3092
        %v3195 = vadd.f32 %v2449, %v3095
        %v3196 = vadd.f32 %v2450, %v3097
        %v3197 = vadd.f32 %v2451, %v3100
        %v3198 = vadd.f32 %v2452, %v3102
        %v3199 = vadd.f32 %v2453, %v3105
        %v3200 = vadd.f32 %v2454, %v3107
        %v3201 = vadd.f32 %v2455, %v3110
        %v3202 = vadd.f32 %v2456, %v3112
        %v3203 = vadd.f32 %v2457, %v3115
        %v3204 = vadd.f32 %v2458, %v3117
        %v3205 = vadd.f32 %v2459, %v3120
        %v3206 = vadd.f32 %v2460, %v3122
        %v3207 = vadd.f32 %v2461, %v3125
        %v3208 = vadd.f32 %v2462, %v3127
        %v3209 = vadd.f32 %v2463, %v3130
        %v3210 = vadd.f32 %v2464, %v3132
        %v3211 = vadd.f32 %v2465, %v3135
        %v3212 = vadd.f32 %v2466, %v3137
        %v3213 = vadd.f32 %v2467, %v3140
        %v3214 = vadd.f32 %v2468, %v3142
        %v3215 = vadd.f32 %v2469, %v3145
        %v3216 = vadd.f32 %v2470, %v3147
        %v3217 = vadd.f32 %v2471, %v3150
        %v3218 = vadd.f32 %v2472, %v3152
        %v3219 = vadd.f32 %v2473, %v3155
        %v3220 = vadd.f32 %v2474, %v3157
        %v3221 = vadd.f32 %v2475, %v3160
        %v3222 = vadd.f32 %v2476, %v3162
        %v3223 = vadd.f32 %v2477, %v3165
        %v3224 = vadd.f32 %v2478, %v3167
        %v3225 = vadd.f32 %v2479, %v3170
        %v3226 = vadd.f32 %v2480, %v3172
        %v3227 = vadd.f32 %v2481, %v3175
        %v3228 = vadd.f32 %v2482, %v3177
        %3229 = vst [vmem:[#allocation3] sm:$0xff] %v3179
        %3230 = vst [vmem:[#allocation3 + $0x8] sm:$0xff] %v3180
        %3231 = vst [vmem:[#allocation3 + $0x10] sm:$0xff] %v3181
        %3232 = vst [vmem:[#allocation3 + $0x18] sm:$0xff] %v3182
        %3233 = vst [vmem:[#allocation3 + $0x20] sm:$0xff] %v3183
        %3234 = vst [vmem:[#allocation3 + $0x28] sm:$0xff] %v3184
        %3235 = vst [vmem:[#allocation3 + $0x30] sm:$0xff] %v3185
        %3236 = vst [vmem:[#allocation3 + $0x38] sm:$0xff] %v3186
        %3237 = vst [vmem:[#allocation3 + $0x40] sm:$0xff] %v3187
        %3238 = vst [vmem:[#allocation3 + $0x48] sm:$0xff] %v3188
        %3239 = vst [vmem:[#allocation3 + $0x50] sm:$0xff] %v3189
        %3240 = vst [vmem:[#allocation3 + $0x58] sm:$0xff] %v3190
        %3241 = vst [vmem:[#allocation3 + $0x60] sm:$0xff] %v3191
        %3242 = vst [vmem:[#allocation3 + $0x68] sm:$0xff] %v3192
        %3243 = vst [vmem:[#allocation3 + $0x70] sm:$0xff] %v3193
        %3244 = vst [vmem:[#allocation3 + $0x78] sm:$0xff] %v3194
        %3245 = vst [vmem:[#allocation3 + $0x80] sm:$0xff] %v3195
        %3246 = vst [vmem:[#allocation3 + $0x88] sm:$0xff] %v3196
        %3247 = vst [vmem:[#allocation3 + $0x90] sm:$0xff] %v3197
        %3248 = vst [vmem:[#allocation3 + $0x98] sm:$0xff] %v3198
        %3249 = vst [vmem:[#allocation3 + $0xa0] sm:$0xff] %v3199
        %3250 = vst [vmem:[#allocation3 + $0xa8] sm:$0xff] %v3200
        %3251 = vst [vmem:[#allocation3 + $0xb0] sm:$0xff] %v3201
        %3252 = vst [vmem:[#allocation3 + $0xb8] sm:$0xff] %v3202
        %3253 = vst [vmem:[#allocation3 + $0xc0] sm:$0xff] %v3203
        %3254 = vst [vmem:[#allocation3 + $0xc8] sm:$0xff] %v3204
        %3255 = vst [vmem:[#allocation3 + $0xd0] sm:$0xff] %v3205
        %3256 = vst [vmem:[#allocation3 + $0xd8] sm:$0xff] %v3206
        %3257 = vst [vmem:[#allocation3 + $0xe0] sm:$0xff] %v3207
        %3258 = vst [vmem:[#allocation3 + $0xe8] sm:$0xff] %v3208
        %3259 = vst [vmem:[#allocation3 + $0xf0] sm:$0xff] %v3209
        %3260 = vst [vmem:[#allocation3 + $0xf8] sm:$0xff] %v3210
        %3261 = vst [vmem:[#allocation3 + $0x100] sm:$0xff] %v3211
        %3262 = vst [vmem:[#allocation3 + $0x108] sm:$0xff] %v3212
        %3263 = vst [vmem:[#allocation3 + $0x110] sm:$0xff] %v3213
        %3264 = vst [vmem:[#allocation3 + $0x118] sm:$0xff] %v3214
        %3265 = vst [vmem:[#allocation3 + $0x120] sm:$0xff] %v3215
        %3266 = vst [vmem:[#allocation3 + $0x128] sm:$0xff] %v3216
        %3267 = vst [vmem:[#allocation3 + $0x130] sm:$0xff] %v3217
        %3268 = vst [vmem:[#allocation3 + $0x138] sm:$0xff] %v3218
        %3269 = vst [vmem:[#allocation3 + $0x140] sm:$0xff] %v3219
        %3270 = vst [vmem:[#allocation3 + $0x148] sm:$0xff] %v3220
        %3271 = vst [vmem:[#allocation3 + $0x150] sm:$0xff] %v3221
        %3272 = vst [vmem:[#allocation3 + $0x158] sm:$0xff] %v3222
        %3273 = vst [vmem:[#allocation3 + $0x160] sm:$0xff] %v3223
        %3274 = vst [vmem:[#allocation3 + $0x168] sm:$0xff] %v3224
        %3275 = vst [vmem:[#allocation3 + $0x170] sm:$0xff] %v3225
        %3276 = vst [vmem:[#allocation3 + $0x178] sm:$0xff] %v3226
        %3277 = vst [vmem:[#allocation3 + $0x180] sm:$0xff] %v3227
        %3278 = vst [vmem:[#allocation3 + $0x188] sm:$0xff] %v3228
        %p3279 = scmp.eq.s32.totalorder %s28, 3
        // Predicated region
        $region61: #{snn_forward.1} parent=39 // pred_check
          %p3280 = pneg %p3279
        $region62: #{snn_forward.1} parent=39 // pred_check_branch
          %3282 = sbr.rel (%p3280) target = $region64
        $region63: #{snn_forward.1} parent=39 // pred_region
          %v3283 = vld [vmem:[#allocation9] sm:$0x1]
          %v3284 = vld [vmem:[#allocation3] sm:$0xff]
          %v3285 = vld [vmem:[#allocation3 + $0x8] sm:$0xff]
          %v3287 = vperm.slane %v3283, 0
          %v3289 = vadd.f32 %v3284, %v3287
          %v3290 = vadd.f32 %v3285, %v3287
          %v3291 = vadd.f32 %v3289, 0.0
          %v3292 = vadd.f32 %v3290, 0.0
          %vm3293 = vcmp.gt.f32.partialorder %v3291, 1.0
          %vm3294 = vcmp.gt.f32.partialorder %v3292, 1.0
          %v3295 = vsel %vm3293, 1, 0
          %v3296 = vsel %vm3294, 1, 0
          %v3297 = vcvt.s32.f32 %v3295
          %v3298 = vcvt.s32.f32 %v3296
          %3299 = vst [vmem:[%s379] sm:$0xff] %v3297
          %3300 = vst [vmem:[%s379 + $0x8] sm:$0xff] %v3298
          %s3301 = scalar_lea.vmem %s379, 400
          %3302 = vst [vmem:[%s3301] sm:$0xff] %v3291
          %3303 = vst [vmem:[%s3301 + $0x8] sm:$0xff] %v3292
          %v3304 = vld [vmem:[#allocation3 + $0x10] sm:$0xff]
          %v3305 = vld [vmem:[#allocation3 + $0x18] sm:$0xff]
          %v3306 = vadd.f32 %v3304, %v3287
          %v3307 = vadd.f32 %v3305, %v3287
          %v3308 = vmul.f32 %v3291, 0.95
          %v3309 = vmul.f32 %v3292, 0.95
          %v3310 = vadd.f32 %v3308, %v3306
          %v3311 = vadd.f32 %v3309, %v3307
          %v3312 = vsub.f32 %v3310, %v3297
          %v3313 = vsub.f32 %v3311, %v3298
          %vm3314 = vcmp.gt.f32.partialorder %v3312, 1.0
          %vm3315 = vcmp.gt.f32.partialorder %v3313, 1.0
          %v3316 = vsel %vm3314, 1, 0
          %v3317 = vsel %vm3315, 1, 0
          %v3318 = vcvt.s32.f32 %v3316
          %v3319 = vcvt.s32.f32 %v3317
          %s3320 = scalar_lea.vmem %s379, 16
          %3321 = vst [vmem:[%s3320] sm:$0xff] %v3318
          %3322 = vst [vmem:[%s3320 + $0x8] sm:$0xff] %v3319
          %s3323 = scalar_lea.vmem %s379, 416
          %3324 = vst [vmem:[%s3323] sm:$0xff] %v3312
          %3325 = vst [vmem:[%s3323 + $0x8] sm:$0xff] %v3313
          %v3326 = vld [vmem:[#allocation3 + $0x20] sm:$0xff]
          %v3327 = vld [vmem:[#allocation3 + $0x28] sm:$0xff]
          %v3328 = vadd.f32 %v3326, %v3287
          %v3329 = vadd.f32 %v3327, %v3287
          %v3330 = vmul.f32 %v3312, 0.95
          %v3331 = vmul.f32 %v3313, 0.95
          %v3332 = vadd.f32 %v3330, %v3328
          %v3333 = vadd.f32 %v3331, %v3329
          %v3334 = vsub.f32 %v3332, %v3318
          %v3335 = vsub.f32 %v3333, %v3319
          %vm3336 = vcmp.gt.f32.partialorder %v3334, 1.0
          %vm3337 = vcmp.gt.f32.partialorder %v3335, 1.0
          %v3338 = vsel %vm3336, 1, 0
          %v3339 = vsel %vm3337, 1, 0
          %v3340 = vcvt.s32.f32 %v3338
          %v3341 = vcvt.s32.f32 %v3339
          %s3342 = scalar_lea.vmem %s379, 32
          %3343 = vst [vmem:[%s3342] sm:$0xff] %v3340
          %3344 = vst [vmem:[%s3342 + $0x8] sm:$0xff] %v3341
          %s3345 = scalar_lea.vmem %s379, 432
          %3346 = vst [vmem:[%s3345] sm:$0xff] %v3334
          %3347 = vst [vmem:[%s3345 + $0x8] sm:$0xff] %v3335
          %v3348 = vld [vmem:[#allocation3 + $0x30] sm:$0xff]
          %v3349 = vld [vmem:[#allocation3 + $0x38] sm:$0xff]
          %v3350 = vadd.f32 %v3348, %v3287
          %v3351 = vadd.f32 %v3349, %v3287
          %v3352 = vmul.f32 %v3334, 0.95
          %v3353 = vmul.f32 %v3335, 0.95
          %v3354 = vadd.f32 %v3352, %v3350
          %v3355 = vadd.f32 %v3353, %v3351
          %v3356 = vsub.f32 %v3354, %v3340
          %v3357 = vsub.f32 %v3355, %v3341
          %vm3358 = vcmp.gt.f32.partialorder %v3356, 1.0
          %vm3359 = vcmp.gt.f32.partialorder %v3357, 1.0
          %v3360 = vsel %vm3358, 1, 0
          %v3361 = vsel %vm3359, 1, 0
          %v3362 = vcvt.s32.f32 %v3360
          %v3363 = vcvt.s32.f32 %v3361
          %s3364 = scalar_lea.vmem %s379, 48
          %3365 = vst [vmem:[%s3364] sm:$0xff] %v3362
          %3366 = vst [vmem:[%s3364 + $0x8] sm:$0xff] %v3363
          %s3367 = scalar_lea.vmem %s379, 448
          %3368 = vst [vmem:[%s3367] sm:$0xff] %v3356
          %3369 = vst [vmem:[%s3367 + $0x8] sm:$0xff] %v3357
          %v3370 = vld [vmem:[#allocation3 + $0x40] sm:$0xff]
          %v3371 = vld [vmem:[#allocation3 + $0x48] sm:$0xff]
          %v3372 = vadd.f32 %v3370, %v3287
          %v3373 = vadd.f32 %v3371, %v3287
          %v3374 = vmul.f32 %v3356, 0.95
          %v3375 = vmul.f32 %v3357, 0.95
          %v3376 = vadd.f32 %v3374, %v3372
          %v3377 = vadd.f32 %v3375, %v3373
          %v3378 = vsub.f32 %v3376, %v3362
          %v3379 = vsub.f32 %v3377, %v3363
          %vm3380 = vcmp.gt.f32.partialorder %v3378, 1.0
          %vm3381 = vcmp.gt.f32.partialorder %v3379, 1.0
          %v3382 = vsel %vm3380, 1, 0
          %v3383 = vsel %vm3381, 1, 0
          %v3384 = vcvt.s32.f32 %v3382
          %v3385 = vcvt.s32.f32 %v3383
          %s3386 = scalar_lea.vmem %s379, 64
          %3387 = vst [vmem:[%s3386] sm:$0xff] %v3384
          %3388 = vst [vmem:[%s3386 + $0x8] sm:$0xff] %v3385
          %s3389 = scalar_lea.vmem %s379, 464
          %3390 = vst [vmem:[%s3389] sm:$0xff] %v3378
          %3391 = vst [vmem:[%s3389 + $0x8] sm:$0xff] %v3379
          %v3392 = vld [vmem:[#allocation3 + $0x50] sm:$0xff]
          %v3393 = vld [vmem:[#allocation3 + $0x58] sm:$0xff]
          %v3394 = vadd.f32 %v3392, %v3287
          %v3395 = vadd.f32 %v3393, %v3287
          %v3396 = vmul.f32 %v3378, 0.95
          %v3397 = vmul.f32 %v3379, 0.95
          %v3398 = vadd.f32 %v3396, %v3394
          %v3399 = vadd.f32 %v3397, %v3395
          %v3400 = vsub.f32 %v3398, %v3384
          %v3401 = vsub.f32 %v3399, %v3385
          %vm3402 = vcmp.gt.f32.partialorder %v3400, 1.0
          %vm3403 = vcmp.gt.f32.partialorder %v3401, 1.0
          %v3404 = vsel %vm3402, 1, 0
          %v3405 = vsel %vm3403, 1, 0
          %v3406 = vcvt.s32.f32 %v3404
          %v3407 = vcvt.s32.f32 %v3405
          %s3408 = scalar_lea.vmem %s379, 80
          %3409 = vst [vmem:[%s3408] sm:$0xff] %v3406
          %3410 = vst [vmem:[%s3408 + $0x8] sm:$0xff] %v3407
          %s3411 = scalar_lea.vmem %s379, 480
          %3412 = vst [vmem:[%s3411] sm:$0xff] %v3400
          %3413 = vst [vmem:[%s3411 + $0x8] sm:$0xff] %v3401
          %v3414 = vld [vmem:[#allocation3 + $0x60] sm:$0xff]
          %v3415 = vld [vmem:[#allocation3 + $0x68] sm:$0xff]
          %v3416 = vadd.f32 %v3414, %v3287
          %v3417 = vadd.f32 %v3415, %v3287
          %v3418 = vmul.f32 %v3400, 0.95
          %v3419 = vmul.f32 %v3401, 0.95
          %v3420 = vadd.f32 %v3418, %v3416
          %v3421 = vadd.f32 %v3419, %v3417
          %v3422 = vsub.f32 %v3420, %v3406
          %v3423 = vsub.f32 %v3421, %v3407
          %vm3424 = vcmp.gt.f32.partialorder %v3422, 1.0
          %vm3425 = vcmp.gt.f32.partialorder %v3423, 1.0
          %v3426 = vsel %vm3424, 1, 0
          %v3427 = vsel %vm3425, 1, 0
          %v3428 = vcvt.s32.f32 %v3426
          %v3429 = vcvt.s32.f32 %v3427
          %s3430 = scalar_lea.vmem %s379, 96
          %3431 = vst [vmem:[%s3430] sm:$0xff] %v3428
          %3432 = vst [vmem:[%s3430 + $0x8] sm:$0xff] %v3429
          %s3433 = scalar_lea.vmem %s379, 496
          %3434 = vst [vmem:[%s3433] sm:$0xff] %v3422
          %3435 = vst [vmem:[%s3433 + $0x8] sm:$0xff] %v3423
          %v3436 = vld [vmem:[#allocation3 + $0x70] sm:$0xff]
          %v3437 = vld [vmem:[#allocation3 + $0x78] sm:$0xff]
          %v3438 = vadd.f32 %v3436, %v3287
          %v3439 = vadd.f32 %v3437, %v3287
          %v3440 = vmul.f32 %v3422, 0.95
          %v3441 = vmul.f32 %v3423, 0.95
          %v3442 = vadd.f32 %v3440, %v3438
          %v3443 = vadd.f32 %v3441, %v3439
          %v3444 = vsub.f32 %v3442, %v3428
          %v3445 = vsub.f32 %v3443, %v3429
          %vm3446 = vcmp.gt.f32.partialorder %v3444, 1.0
          %vm3447 = vcmp.gt.f32.partialorder %v3445, 1.0
          %v3448 = vsel %vm3446, 1, 0
          %v3449 = vsel %vm3447, 1, 0
          %v3450 = vcvt.s32.f32 %v3448
          %v3451 = vcvt.s32.f32 %v3449
          %s3452 = scalar_lea.vmem %s379, 112
          %3453 = vst [vmem:[%s3452] sm:$0xff] %v3450
          %3454 = vst [vmem:[%s3452 + $0x8] sm:$0xff] %v3451
          %s3455 = scalar_lea.vmem %s379, 512
          %3456 = vst [vmem:[%s3455] sm:$0xff] %v3444
          %3457 = vst [vmem:[%s3455 + $0x8] sm:$0xff] %v3445
          %v3458 = vld [vmem:[#allocation3 + $0x80] sm:$0xff]
          %v3459 = vld [vmem:[#allocation3 + $0x88] sm:$0xff]
          %v3460 = vadd.f32 %v3458, %v3287
          %v3461 = vadd.f32 %v3459, %v3287
          %v3462 = vmul.f32 %v3444, 0.95
          %v3463 = vmul.f32 %v3445, 0.95
          %v3464 = vadd.f32 %v3462, %v3460
          %v3465 = vadd.f32 %v3463, %v3461
          %v3466 = vsub.f32 %v3464, %v3450
          %v3467 = vsub.f32 %v3465, %v3451
          %vm3468 = vcmp.gt.f32.partialorder %v3466, 1.0
          %vm3469 = vcmp.gt.f32.partialorder %v3467, 1.0
          %v3470 = vsel %vm3468, 1, 0
          %v3471 = vsel %vm3469, 1, 0
          %v3472 = vcvt.s32.f32 %v3470
          %v3473 = vcvt.s32.f32 %v3471
          %s3474 = scalar_lea.vmem %s379, 128
          %3475 = vst [vmem:[%s3474] sm:$0xff] %v3472
          %3476 = vst [vmem:[%s3474 + $0x8] sm:$0xff] %v3473
          %s3477 = scalar_lea.vmem %s379, 528
          %3478 = vst [vmem:[%s3477] sm:$0xff] %v3466
          %3479 = vst [vmem:[%s3477 + $0x8] sm:$0xff] %v3467
          %v3480 = vld [vmem:[#allocation3 + $0x90] sm:$0xff]
          %v3481 = vld [vmem:[#allocation3 + $0x98] sm:$0xff]
          %v3482 = vadd.f32 %v3480, %v3287
          %v3483 = vadd.f32 %v3481, %v3287
          %v3484 = vmul.f32 %v3466, 0.95
          %v3485 = vmul.f32 %v3467, 0.95
          %v3486 = vadd.f32 %v3484, %v3482
          %v3487 = vadd.f32 %v3485, %v3483
          %v3488 = vsub.f32 %v3486, %v3472
          %v3489 = vsub.f32 %v3487, %v3473
          %vm3490 = vcmp.gt.f32.partialorder %v3488, 1.0
          %vm3491 = vcmp.gt.f32.partialorder %v3489, 1.0
          %v3492 = vsel %vm3490, 1, 0
          %v3493 = vsel %vm3491, 1, 0
          %v3494 = vcvt.s32.f32 %v3492
          %v3495 = vcvt.s32.f32 %v3493
          %s3496 = scalar_lea.vmem %s379, 144
          %3497 = vst [vmem:[%s3496] sm:$0xff] %v3494
          %3498 = vst [vmem:[%s3496 + $0x8] sm:$0xff] %v3495
          %s3499 = scalar_lea.vmem %s379, 544
          %3500 = vst [vmem:[%s3499] sm:$0xff] %v3488
          %3501 = vst [vmem:[%s3499 + $0x8] sm:$0xff] %v3489
          %v3502 = vld [vmem:[#allocation3 + $0xa0] sm:$0xff]
          %v3503 = vld [vmem:[#allocation3 + $0xa8] sm:$0xff]
          %v3504 = vadd.f32 %v3502, %v3287
          %v3505 = vadd.f32 %v3503, %v3287
          %v3506 = vmul.f32 %v3488, 0.95
          %v3507 = vmul.f32 %v3489, 0.95
          %v3508 = vadd.f32 %v3506, %v3504
          %v3509 = vadd.f32 %v3507, %v3505
          %v3510 = vsub.f32 %v3508, %v3494
          %v3511 = vsub.f32 %v3509, %v3495
          %vm3512 = vcmp.gt.f32.partialorder %v3510, 1.0
          %vm3513 = vcmp.gt.f32.partialorder %v3511, 1.0
          %v3514 = vsel %vm3512, 1, 0
          %v3515 = vsel %vm3513, 1, 0
          %v3516 = vcvt.s32.f32 %v3514
          %v3517 = vcvt.s32.f32 %v3515
          %s3518 = scalar_lea.vmem %s379, 160
          %3519 = vst [vmem:[%s3518] sm:$0xff] %v3516
          %3520 = vst [vmem:[%s3518 + $0x8] sm:$0xff] %v3517
          %s3521 = scalar_lea.vmem %s379, 560
          %3522 = vst [vmem:[%s3521] sm:$0xff] %v3510
          %3523 = vst [vmem:[%s3521 + $0x8] sm:$0xff] %v3511
          %v3524 = vld [vmem:[#allocation3 + $0xb0] sm:$0xff]
          %v3525 = vld [vmem:[#allocation3 + $0xb8] sm:$0xff]
          %v3526 = vadd.f32 %v3524, %v3287
          %v3527 = vadd.f32 %v3525, %v3287
          %v3528 = vmul.f32 %v3510, 0.95
          %v3529 = vmul.f32 %v3511, 0.95
          %v3530 = vadd.f32 %v3528, %v3526
          %v3531 = vadd.f32 %v3529, %v3527
          %v3532 = vsub.f32 %v3530, %v3516
          %v3533 = vsub.f32 %v3531, %v3517
          %vm3534 = vcmp.gt.f32.partialorder %v3532, 1.0
          %vm3535 = vcmp.gt.f32.partialorder %v3533, 1.0
          %v3536 = vsel %vm3534, 1, 0
          %v3537 = vsel %vm3535, 1, 0
          %v3538 = vcvt.s32.f32 %v3536
          %v3539 = vcvt.s32.f32 %v3537
          %s3540 = scalar_lea.vmem %s379, 176
          %3541 = vst [vmem:[%s3540] sm:$0xff] %v3538
          %3542 = vst [vmem:[%s3540 + $0x8] sm:$0xff] %v3539
          %s3543 = scalar_lea.vmem %s379, 576
          %3544 = vst [vmem:[%s3543] sm:$0xff] %v3532
          %3545 = vst [vmem:[%s3543 + $0x8] sm:$0xff] %v3533
          %v3546 = vld [vmem:[#allocation3 + $0xc0] sm:$0xff]
          %v3547 = vld [vmem:[#allocation3 + $0xc8] sm:$0xff]
          %v3548 = vadd.f32 %v3546, %v3287
          %v3549 = vadd.f32 %v3547, %v3287
          %v3550 = vmul.f32 %v3532, 0.95
          %v3551 = vmul.f32 %v3533, 0.95
          %v3552 = vadd.f32 %v3550, %v3548
          %v3553 = vadd.f32 %v3551, %v3549
          %v3554 = vsub.f32 %v3552, %v3538
          %v3555 = vsub.f32 %v3553, %v3539
          %vm3556 = vcmp.gt.f32.partialorder %v3554, 1.0
          %vm3557 = vcmp.gt.f32.partialorder %v3555, 1.0
          %v3558 = vsel %vm3556, 1, 0
          %v3559 = vsel %vm3557, 1, 0
          %v3560 = vcvt.s32.f32 %v3558
          %v3561 = vcvt.s32.f32 %v3559
          %s3562 = scalar_lea.vmem %s379, 192
          %3563 = vst [vmem:[%s3562] sm:$0xff] %v3560
          %3564 = vst [vmem:[%s3562 + $0x8] sm:$0xff] %v3561
          %s3565 = scalar_lea.vmem %s379, 592
          %3566 = vst [vmem:[%s3565] sm:$0xff] %v3554
          %3567 = vst [vmem:[%s3565 + $0x8] sm:$0xff] %v3555
          %v3568 = vld [vmem:[#allocation3 + $0xd0] sm:$0xff]
          %v3569 = vld [vmem:[#allocation3 + $0xd8] sm:$0xff]
          %v3570 = vadd.f32 %v3568, %v3287
          %v3571 = vadd.f32 %v3569, %v3287
          %v3572 = vmul.f32 %v3554, 0.95
          %v3573 = vmul.f32 %v3555, 0.95
          %v3574 = vadd.f32 %v3572, %v3570
          %v3575 = vadd.f32 %v3573, %v3571
          %v3576 = vsub.f32 %v3574, %v3560
          %v3577 = vsub.f32 %v3575, %v3561
          %vm3578 = vcmp.gt.f32.partialorder %v3576, 1.0
          %vm3579 = vcmp.gt.f32.partialorder %v3577, 1.0
          %v3580 = vsel %vm3578, 1, 0
          %v3581 = vsel %vm3579, 1, 0
          %v3582 = vcvt.s32.f32 %v3580
          %v3583 = vcvt.s32.f32 %v3581
          %s3584 = scalar_lea.vmem %s379, 208
          %3585 = vst [vmem:[%s3584] sm:$0xff] %v3582
          %3586 = vst [vmem:[%s3584 + $0x8] sm:$0xff] %v3583
          %s3587 = scalar_lea.vmem %s379, 608
          %3588 = vst [vmem:[%s3587] sm:$0xff] %v3576
          %3589 = vst [vmem:[%s3587 + $0x8] sm:$0xff] %v3577
          %v3590 = vld [vmem:[#allocation3 + $0xe0] sm:$0xff]
          %v3591 = vld [vmem:[#allocation3 + $0xe8] sm:$0xff]
          %v3592 = vadd.f32 %v3590, %v3287
          %v3593 = vadd.f32 %v3591, %v3287
          %v3594 = vmul.f32 %v3576, 0.95
          %v3595 = vmul.f32 %v3577, 0.95
          %v3596 = vadd.f32 %v3594, %v3592
          %v3597 = vadd.f32 %v3595, %v3593
          %v3598 = vsub.f32 %v3596, %v3582
          %v3599 = vsub.f32 %v3597, %v3583
          %vm3600 = vcmp.gt.f32.partialorder %v3598, 1.0
          %vm3601 = vcmp.gt.f32.partialorder %v3599, 1.0
          %v3602 = vsel %vm3600, 1, 0
          %v3603 = vsel %vm3601, 1, 0
          %v3604 = vcvt.s32.f32 %v3602
          %v3605 = vcvt.s32.f32 %v3603
          %s3606 = scalar_lea.vmem %s379, 224
          %3607 = vst [vmem:[%s3606] sm:$0xff] %v3604
          %3608 = vst [vmem:[%s3606 + $0x8] sm:$0xff] %v3605
          %s3609 = scalar_lea.vmem %s379, 624
          %3610 = vst [vmem:[%s3609] sm:$0xff] %v3598
          %3611 = vst [vmem:[%s3609 + $0x8] sm:$0xff] %v3599
          %v3612 = vld [vmem:[#allocation3 + $0xf0] sm:$0xff]
          %v3613 = vld [vmem:[#allocation3 + $0xf8] sm:$0xff]
          %v3614 = vadd.f32 %v3612, %v3287
          %v3615 = vadd.f32 %v3613, %v3287
          %v3616 = vmul.f32 %v3598, 0.95
          %v3617 = vmul.f32 %v3599, 0.95
          %v3618 = vadd.f32 %v3616, %v3614
          %v3619 = vadd.f32 %v3617, %v3615
          %v3620 = vsub.f32 %v3618, %v3604
          %v3621 = vsub.f32 %v3619, %v3605
          %vm3622 = vcmp.gt.f32.partialorder %v3620, 1.0
          %vm3623 = vcmp.gt.f32.partialorder %v3621, 1.0
          %v3624 = vsel %vm3622, 1, 0
          %v3625 = vsel %vm3623, 1, 0
          %v3626 = vcvt.s32.f32 %v3624
          %v3627 = vcvt.s32.f32 %v3625
          %s3628 = scalar_lea.vmem %s379, 240
          %3629 = vst [vmem:[%s3628] sm:$0xff] %v3626
          %3630 = vst [vmem:[%s3628 + $0x8] sm:$0xff] %v3627
          %s3631 = scalar_lea.vmem %s379, 640
          %3632 = vst [vmem:[%s3631] sm:$0xff] %v3620
          %3633 = vst [vmem:[%s3631 + $0x8] sm:$0xff] %v3621
          %v3634 = vld [vmem:[#allocation3 + $0x100] sm:$0xff]
          %v3635 = vld [vmem:[#allocation3 + $0x108] sm:$0xff]
          %v3636 = vadd.f32 %v3634, %v3287
          %v3637 = vadd.f32 %v3635, %v3287
          %v3638 = vmul.f32 %v3620, 0.95
          %v3639 = vmul.f32 %v3621, 0.95
          %v3640 = vadd.f32 %v3638, %v3636
          %v3641 = vadd.f32 %v3639, %v3637
          %v3642 = vsub.f32 %v3640, %v3626
          %v3643 = vsub.f32 %v3641, %v3627
          %vm3644 = vcmp.gt.f32.partialorder %v3642, 1.0
          %vm3645 = vcmp.gt.f32.partialorder %v3643, 1.0
          %v3646 = vsel %vm3644, 1, 0
          %v3647 = vsel %vm3645, 1, 0
          %v3648 = vcvt.s32.f32 %v3646
          %v3649 = vcvt.s32.f32 %v3647
          %s3650 = scalar_lea.vmem %s379, 256
          %3651 = vst [vmem:[%s3650] sm:$0xff] %v3648
          %3652 = vst [vmem:[%s3650 + $0x8] sm:$0xff] %v3649
          %s3653 = scalar_lea.vmem %s379, 656
          %3654 = vst [vmem:[%s3653] sm:$0xff] %v3642
          %3655 = vst [vmem:[%s3653 + $0x8] sm:$0xff] %v3643
          %v3656 = vld [vmem:[#allocation3 + $0x110] sm:$0xff]
          %v3657 = vld [vmem:[#allocation3 + $0x118] sm:$0xff]
          %v3658 = vadd.f32 %v3656, %v3287
          %v3659 = vadd.f32 %v3657, %v3287
          %v3660 = vmul.f32 %v3642, 0.95
          %v3661 = vmul.f32 %v3643, 0.95
          %v3662 = vadd.f32 %v3660, %v3658
          %v3663 = vadd.f32 %v3661, %v3659
          %v3664 = vsub.f32 %v3662, %v3648
          %v3665 = vsub.f32 %v3663, %v3649
          %vm3666 = vcmp.gt.f32.partialorder %v3664, 1.0
          %vm3667 = vcmp.gt.f32.partialorder %v3665, 1.0
          %v3668 = vsel %vm3666, 1, 0
          %v3669 = vsel %vm3667, 1, 0
          %v3670 = vcvt.s32.f32 %v3668
          %v3671 = vcvt.s32.f32 %v3669
          %s3672 = scalar_lea.vmem %s379, 272
          %3673 = vst [vmem:[%s3672] sm:$0xff] %v3670
          %3674 = vst [vmem:[%s3672 + $0x8] sm:$0xff] %v3671
          %s3675 = scalar_lea.vmem %s379, 672
          %3676 = vst [vmem:[%s3675] sm:$0xff] %v3664
          %3677 = vst [vmem:[%s3675 + $0x8] sm:$0xff] %v3665
          %v3678 = vld [vmem:[#allocation3 + $0x120] sm:$0xff]
          %v3679 = vld [vmem:[#allocation3 + $0x128] sm:$0xff]
          %v3680 = vadd.f32 %v3678, %v3287
          %v3681 = vadd.f32 %v3679, %v3287
          %v3682 = vmul.f32 %v3664, 0.95
          %v3683 = vmul.f32 %v3665, 0.95
          %v3684 = vadd.f32 %v3682, %v3680
          %v3685 = vadd.f32 %v3683, %v3681
          %v3686 = vsub.f32 %v3684, %v3670
          %v3687 = vsub.f32 %v3685, %v3671
          %vm3688 = vcmp.gt.f32.partialorder %v3686, 1.0
          %vm3689 = vcmp.gt.f32.partialorder %v3687, 1.0
          %v3690 = vsel %vm3688, 1, 0
          %v3691 = vsel %vm3689, 1, 0
          %v3692 = vcvt.s32.f32 %v3690
          %v3693 = vcvt.s32.f32 %v3691
          %s3694 = scalar_lea.vmem %s379, 288
          %3695 = vst [vmem:[%s3694] sm:$0xff] %v3692
          %3696 = vst [vmem:[%s3694 + $0x8] sm:$0xff] %v3693
          %s3697 = scalar_lea.vmem %s379, 688
          %3698 = vst [vmem:[%s3697] sm:$0xff] %v3686
          %3699 = vst [vmem:[%s3697 + $0x8] sm:$0xff] %v3687
          %v3700 = vld [vmem:[#allocation3 + $0x130] sm:$0xff]
          %v3701 = vld [vmem:[#allocation3 + $0x138] sm:$0xff]
          %v3702 = vadd.f32 %v3700, %v3287
          %v3703 = vadd.f32 %v3701, %v3287
          %v3704 = vmul.f32 %v3686, 0.95
          %v3705 = vmul.f32 %v3687, 0.95
          %v3706 = vadd.f32 %v3704, %v3702
          %v3707 = vadd.f32 %v3705, %v3703
          %v3708 = vsub.f32 %v3706, %v3692
          %v3709 = vsub.f32 %v3707, %v3693
          %vm3710 = vcmp.gt.f32.partialorder %v3708, 1.0
          %vm3711 = vcmp.gt.f32.partialorder %v3709, 1.0
          %v3712 = vsel %vm3710, 1, 0
          %v3713 = vsel %vm3711, 1, 0
          %v3714 = vcvt.s32.f32 %v3712
          %v3715 = vcvt.s32.f32 %v3713
          %s3716 = scalar_lea.vmem %s379, 304
          %3717 = vst [vmem:[%s3716] sm:$0xff] %v3714
          %3718 = vst [vmem:[%s3716 + $0x8] sm:$0xff] %v3715
          %s3719 = scalar_lea.vmem %s379, 704
          %3720 = vst [vmem:[%s3719] sm:$0xff] %v3708
          %3721 = vst [vmem:[%s3719 + $0x8] sm:$0xff] %v3709
          %v3722 = vld [vmem:[#allocation3 + $0x140] sm:$0xff]
          %v3723 = vld [vmem:[#allocation3 + $0x148] sm:$0xff]
          %v3724 = vadd.f32 %v3722, %v3287
          %v3725 = vadd.f32 %v3723, %v3287
          %v3726 = vmul.f32 %v3708, 0.95
          %v3727 = vmul.f32 %v3709, 0.95
          %v3728 = vadd.f32 %v3726, %v3724
          %v3729 = vadd.f32 %v3727, %v3725
          %v3730 = vsub.f32 %v3728, %v3714
          %v3731 = vsub.f32 %v3729, %v3715
          %vm3732 = vcmp.gt.f32.partialorder %v3730, 1.0
          %vm3733 = vcmp.gt.f32.partialorder %v3731, 1.0
          %v3734 = vsel %vm3732, 1, 0
          %v3735 = vsel %vm3733, 1, 0
          %v3736 = vcvt.s32.f32 %v3734
          %v3737 = vcvt.s32.f32 %v3735
          %s3738 = scalar_lea.vmem %s379, 320
          %3739 = vst [vmem:[%s3738] sm:$0xff] %v3736
          %3740 = vst [vmem:[%s3738 + $0x8] sm:$0xff] %v3737
          %s3741 = scalar_lea.vmem %s379, 720
          %3742 = vst [vmem:[%s3741] sm:$0xff] %v3730
          %3743 = vst [vmem:[%s3741 + $0x8] sm:$0xff] %v3731
          %v3744 = vld [vmem:[#allocation3 + $0x150] sm:$0xff]
          %v3745 = vld [vmem:[#allocation3 + $0x158] sm:$0xff]
          %v3746 = vadd.f32 %v3744, %v3287
          %v3747 = vadd.f32 %v3745, %v3287
          %v3748 = vmul.f32 %v3730, 0.95
          %v3749 = vmul.f32 %v3731, 0.95
          %v3750 = vadd.f32 %v3748, %v3746
          %v3751 = vadd.f32 %v3749, %v3747
          %v3752 = vsub.f32 %v3750, %v3736
          %v3753 = vsub.f32 %v3751, %v3737
          %vm3754 = vcmp.gt.f32.partialorder %v3752, 1.0
          %vm3755 = vcmp.gt.f32.partialorder %v3753, 1.0
          %v3756 = vsel %vm3754, 1, 0
          %v3757 = vsel %vm3755, 1, 0
          %v3758 = vcvt.s32.f32 %v3756
          %v3759 = vcvt.s32.f32 %v3757
          %s3760 = scalar_lea.vmem %s379, 336
          %3761 = vst [vmem:[%s3760] sm:$0xff] %v3758
          %3762 = vst [vmem:[%s3760 + $0x8] sm:$0xff] %v3759
          %s3763 = scalar_lea.vmem %s379, 736
          %3764 = vst [vmem:[%s3763] sm:$0xff] %v3752
          %3765 = vst [vmem:[%s3763 + $0x8] sm:$0xff] %v3753
          %v3766 = vld [vmem:[#allocation3 + $0x160] sm:$0xff]
          %v3767 = vld [vmem:[#allocation3 + $0x168] sm:$0xff]
          %v3768 = vadd.f32 %v3766, %v3287
          %v3769 = vadd.f32 %v3767, %v3287
          %v3770 = vmul.f32 %v3752, 0.95
          %v3771 = vmul.f32 %v3753, 0.95
          %v3772 = vadd.f32 %v3770, %v3768
          %v3773 = vadd.f32 %v3771, %v3769
          %v3774 = vsub.f32 %v3772, %v3758
          %v3775 = vsub.f32 %v3773, %v3759
          %vm3776 = vcmp.gt.f32.partialorder %v3774, 1.0
          %vm3777 = vcmp.gt.f32.partialorder %v3775, 1.0
          %v3778 = vsel %vm3776, 1, 0
          %v3779 = vsel %vm3777, 1, 0
          %v3780 = vcvt.s32.f32 %v3778
          %v3781 = vcvt.s32.f32 %v3779
          %s3782 = scalar_lea.vmem %s379, 352
          %3783 = vst [vmem:[%s3782] sm:$0xff] %v3780
          %3784 = vst [vmem:[%s3782 + $0x8] sm:$0xff] %v3781
          %s3785 = scalar_lea.vmem %s379, 752
          %3786 = vst [vmem:[%s3785] sm:$0xff] %v3774
          %3787 = vst [vmem:[%s3785 + $0x8] sm:$0xff] %v3775
          %v3788 = vld [vmem:[#allocation3 + $0x170] sm:$0xff]
          %v3789 = vld [vmem:[#allocation3 + $0x178] sm:$0xff]
          %v3790 = vadd.f32 %v3788, %v3287
          %v3791 = vadd.f32 %v3789, %v3287
          %v3792 = vmul.f32 %v3774, 0.95
          %v3793 = vmul.f32 %v3775, 0.95
          %v3794 = vadd.f32 %v3792, %v3790
          %v3795 = vadd.f32 %v3793, %v3791
          %v3796 = vsub.f32 %v3794, %v3780
          %v3797 = vsub.f32 %v3795, %v3781
          %vm3798 = vcmp.gt.f32.partialorder %v3796, 1.0
          %vm3799 = vcmp.gt.f32.partialorder %v3797, 1.0
          %v3800 = vsel %vm3798, 1, 0
          %v3801 = vsel %vm3799, 1, 0
          %v3802 = vcvt.s32.f32 %v3800
          %v3803 = vcvt.s32.f32 %v3801
          %s3804 = scalar_lea.vmem %s379, 368
          %3805 = vst [vmem:[%s3804] sm:$0xff] %v3802
          %3806 = vst [vmem:[%s3804 + $0x8] sm:$0xff] %v3803
          %s3807 = scalar_lea.vmem %s379, 768
          %3808 = vst [vmem:[%s3807] sm:$0xff] %v3796
          %3809 = vst [vmem:[%s3807 + $0x8] sm:$0xff] %v3797
          %v3810 = vld [vmem:[#allocation3 + $0x180] sm:$0xff]
          %v3811 = vld [vmem:[#allocation3 + $0x188] sm:$0xff]
          %v3812 = vadd.f32 %v3810, %v3287
          %v3813 = vadd.f32 %v3811, %v3287
          %v3814 = vmul.f32 %v3796, 0.95
          %v3815 = vmul.f32 %v3797, 0.95
          %v3816 = vadd.f32 %v3814, %v3812
          %v3817 = vadd.f32 %v3815, %v3813
          %v3818 = vsub.f32 %v3816, %v3802
          %v3819 = vsub.f32 %v3817, %v3803
          %vm3820 = vcmp.gt.f32.partialorder %v3818, 1.0
          %vm3821 = vcmp.gt.f32.partialorder %v3819, 1.0
          %v3822 = vsel %vm3820, 1, 0
          %v3823 = vsel %vm3821, 1, 0
          %v3824 = vcvt.s32.f32 %v3822
          %v3825 = vcvt.s32.f32 %v3823
          %s3826 = scalar_lea.vmem %s379, 384
          %3827 = vst [vmem:[%s3826] sm:$0xff] %v3824
          %3828 = vst [vmem:[%s3826 + $0x8] sm:$0xff] %v3825
          %s3829 = scalar_lea.vmem %s379, 784
          %3830 = vst [vmem:[%s3829] sm:$0xff] %v3818
          %3831 = vst [vmem:[%s3829 + $0x8] sm:$0xff] %v3819
        $region64: #{snn_forward.1} parent=39 // pred_fallthru
          _
        %s3832 = smul.u32 2, %s27
        %p3833 = scmp.lt.s32.totalorder %s3832, 1
        %s3834 = scalar_select %p3833, %s3832, 1
        %s3835 = smul.addr %s3834, 8
        %s3836 = scalar_lea.vmem %s5, %s3835
        // Predicated region
        $region65: #{snn_forward.1} parent=39 // pred_check
          %p3837 = pneg %p178
        $region66: #{snn_forward.1} parent=39 // pred_check_branch
          %3839 = sbr.rel (%p3837) target = $region68
        $region67: #{snn_forward.1} parent=39 // pred_region
          %s3840 = smul.u32 2, %s27
        $region68: #{snn_forward.1} parent=39 // pred_fallthru
          _
        // Predicated region
        $region69: #{snn_forward.1} parent=39 // pred_check
          %p3841 = pneg %p178
        $region70: #{snn_forward.1} parent=39 // pred_check_branch
          %3843 = sbr.rel (%p3841) target = $region72
        $region71: #{snn_forward.1} parent=39 // pred_region
          %s3844 = smul.u32 2, %s27
          %p3845 = scmp.lt.s32.totalorder %s3844, 1
          %s3846 = scalar_select %p3845, %s3844, 1
          %s3847 = smul.addr %s3846, 8
          %s3848 = scalar_lea.vmem %s5, %s3847
        $region72: #{snn_forward.1} parent=39 // pred_fallthru
          _
      $region40: #{snn_forward.1} parent=5 // pred_fallthru
        _
      %p3849 = scmp.le.s32.totalorder 2, %s18
      // Predicated region
      $region73: #{snn_forward.1} parent=5 // pred_check
        %p3850 = pneg %p3849
      $region74: #{snn_forward.1} parent=5 // pred_check_branch
        %3852 = sbr.rel (%p3850) target = $region76
      $region75: #{snn_forward.1} parent=5 // pred_region
        %s3853 = ssub.s32 %s18, 2
      $region76: #{snn_forward.1} parent=5 // pred_fallthru
        _
    $region6: #{snn_forward.1} parent=1 // loop_footer
      %s22 = sadd.s32 1, %s18
    $region7: #{snn_forward.1} parent=1 // loop_footer_branch
      %17 = sbr.rel target = $region3
    $region8: #{snn_forward.1} parent=1 // loop_exit
      _
    %3854 = vsyncpa [#allocation5], 1
    %s3855 = scalar_lea.sflag [#allocation5], 1
    %3856 = vsyncpa %s3855, 1
    %3857 = vsyncpa [#allocation7], 1
    %s3858 = scalar_lea.sflag [#allocation7], 1
    %3859 = vsyncpa %s3858, 1
    %3860 = vsyncpa [#allocation10], 1

</llo_original>
